<compile_context>
chip_gen: v6e
topology: v6e:2x2x1
jax: 0.10.0
libtpu: 0.0.40
codegen_flags: <defaults>
</compile_context>

<pallas_src>
import functools

import jax
import jax.numpy as jnp
from jax.experimental import pallas as pl
from jax.experimental.pallas import tpu as pltpu


def _leaky_relu(x, slope):
    return jnp.where(x > 0, x, slope * x)


def nas_citeseer_kernel(x_ref, bias_ref, w_pre_ref, b_pre_ref,
                        w_gat_ref, a_dst_ref, a_src_ref, b_gat_ref,
                        w_lin_h_ref, w_lin_g_ref, b_lin_ref,
                        out_ref, gat_scratch,
                        *, heads, out_dim, neg_slope_gat=0.2, neg_slope_out=0.01):
    # --- preprocessor: h = x @ W_pre + b_pre   (bf16 operands, f32 accumulate) ---
    h = jnp.dot(x_ref[...], w_pre_ref[...],
                preferred_element_type=jnp.float32) + b_pre_ref[...]        # [N, Hd] f32
    h_bf = h.astype(jnp.bfloat16)

    # --- all heads' GAT projections in one lane-dense matmul ---
    xg_all = jnp.dot(h_bf, w_gat_ref[...],
                     preferred_element_type=jnp.float32)                    # [N, heads*Od]
    xg_all_bf = xg_all.astype(jnp.bfloat16)

    # --- attention score components for all heads via two tiny matmuls ---
    # a_dst_all[i, hi] = sum_o (h_i @ W_gat[hi])_o * att_dst[hi, o]  (folded on the host)
    a_dst_all = jnp.dot(h_bf, a_dst_ref[...],
                        preferred_element_type=jnp.float32)                 # [N, heads]
    a_src_all = jnp.dot(h_bf, a_src_ref[...],
                        preferred_element_type=jnp.float32)                 # [N, heads]

    # additive adjacency bias (0 where edge j->i incl. self loops, -1e30 otherwise),
    # hoisted out of the head loop.
    mask_bias = bias_ref[...].astype(jnp.float32)                           # [N, N]

    for hi in range(heads):
        lo = hi * out_dim
        a_dst = a_dst_all[:, hi:hi + 1]                                     # [N, 1]
        a_src_row = a_src_all[:, hi:hi + 1].T                               # [1, N]
        # e[i, j] = leaky_relu(a_dst[i] + a_src[j]) masked to incoming edges of target i
        e = _leaky_relu(a_dst + a_src_row, neg_slope_gat) + mask_bias       # [N, N]
        e = e - jnp.max(e, axis=-1, keepdims=True)
        p = jnp.exp(e)
        inv = pl.reciprocal(jnp.sum(p, axis=-1, keepdims=True), approx=True)
        alpha = (p * inv).astype(jnp.bfloat16)                              # [N, N] bf16
        gat_scratch[:, lo:lo + out_dim] = jnp.dot(
            alpha, xg_all_bf[:, lo:lo + out_dim],
            preferred_element_type=jnp.float32)                             # [N, Od]

    gat = gat_scratch[...] + b_gat_ref[...]                                 # [N, heads*Od]
    h1_bf = _leaky_relu(gat, neg_slope_out).astype(jnp.bfloat16)            # F.leaky_relu (0.01)

    # --- final Linear on cat([h, h1]) as a split projection (no in-kernel concat);
    #     weights are lane-padded to 128 output columns so the store is lane-dense. ---
    out = (jnp.dot(h_bf, w_lin_h_ref[...], preferred_element_type=jnp.float32)
           + jnp.dot(h1_bf, w_lin_g_ref[...], preferred_element_type=jnp.float32)
           + b_lin_ref[...])                                                # [N, OUT_PAD]
    out_ref[...] = out.astype(out_ref.dtype)


def nas_citeseer_forward(x, edge_index, edge_weight, params, heads):
    """Pallas wrapper. edge_weight is accepted but ignored (GATConv does not use it)."""
    del edge_weight  # TODO(synk): GATConv in the reference module ignores edge_weight entirely.
    n, _ = x.shape
    hd = params["w_pre"].shape[1]
    od = params["b_lin"].shape[-1]
    out_pad = max(od, 128)  # lane-dense output store; sliced back below

    # --- host-side glue ----------------------------------------------------
    # Dense adjacency with self loops (PyG GATConv add_self_loops=True), converted to a
    # bf16 additive mask bias so the O(N^2) operand costs half the HBM bytes.
    # TODO(synk): at real Citeseer scale (N~3327) tile this by target-node rows via a grid
    #             (dimension_semantics=("parallel",)) to fit v7x's 64 MiB VMEM / use both TCs.
    src, dst = edge_index[0], edge_index[1]
    adj = jnp.zeros((n, n), jnp.float32).at[dst, src].set(1.0)
    adj = jnp.maximum(adj, jnp.eye(n, dtype=jnp.float32))
    mask_bias = jnp.where(adj > 0, 0.0, -1e30).astype(jnp.bfloat16)

    # Fuse all heads' projection weights into one [Hd, heads*Od] matrix
    # (column block hi == W_gat[hi], matching the concat order of the reference).
    w_gat_flat = jnp.transpose(params["w_gat"], (1, 0, 2)).reshape(hd, heads * od)
    # Fold att_src / att_dst into the projection: a_*[i, hi] = h_i @ A_*[:, hi].
    a_src_mat = jnp.einsum("hdo,ho->dh", params["w_gat"], params["att_src"][:, 0, :])
    a_dst_mat = jnp.einsum("hdo,ho->dh", params["w_gat"], params["att_dst"][:, 0, :])

    # Split + lane-pad the final projection (avoids in-kernel concat; 128-lane dense store).
    pad = out_pad - od
    w_lin_h = jnp.pad(params["w_lin"][:hd, :], ((0, 0), (0, pad)))
    w_lin_g = jnp.pad(params["w_lin"][hd:, :], ((0, 0), (0, pad)))
    b_lin = jnp.pad(params["b_lin"], ((0, 0), (0, pad)))

    bf = jnp.bfloat16
    args = (x.astype(bf), mask_bias,
            params["w_pre"].astype(bf), params["b_pre"],
            w_gat_flat.astype(bf), a_dst_mat.astype(bf), a_src_mat.astype(bf),
            params["b_gat"],
            w_lin_h.astype(bf), w_lin_g.astype(bf), b_lin)

    kernel = functools.partial(nas_citeseer_kernel, heads=heads, out_dim=od)
    out_padded = pl.pallas_call(
        kernel,
        out_shape=jax.ShapeDtypeStruct((n, out_pad), jnp.float32),
        in_specs=[pl.BlockSpec(memory_space=pltpu.MemorySpace.VMEM)] * len(args),
        out_specs=pl.BlockSpec(memory_space=pltpu.MemorySpace.VMEM),
        scratch_shapes=[pltpu.VMEM((n, heads * od), jnp.float32)],
    )(*args)
    return out_padded[:, :od]


def reference_forward(x, edge_index, params, heads):
    """Pure-JAX f32 reference of the same semantics (for correctness check)."""
    n = x.shape[0]
    src, dst = edge_index[0], edge_index[1]
    adj = jnp.zeros((n, n), jnp.float32).at[dst, src].set(1.0)
    adj = jnp.maximum(adj, jnp.eye(n, dtype=jnp.float32))

    h = x @ params["w_pre"] + params["b_pre"]
    outs = []
    for hi in range(heads):
        xg = h @ params["w_gat"][hi]
        a_src = (xg * params["att_src"][hi]).sum(-1, keepdims=True)
        a_dst = (xg * params["att_dst"][hi]).sum(-1, keepdims=True)
        e = jax.nn.leaky_relu(a_dst + a_src.T, 0.2)
        e = jnp.where(adj > 0, e, -jnp.inf)
        alpha = jax.nn.softmax(e, axis=-1)
        outs.append(alpha @ xg)
    gat = jnp.concatenate(outs, axis=-1) + params["b_gat"]
    h1 = jax.nn.leaky_relu(gat, 0.01)
    return jnp.concatenate([h, h1], axis=-1) @ params["w_lin"] + params["b_lin"]


if __name__ == "__main__":
    # Module hyperparameters. Note: the reference Linear(output_dim*(heads+1), output_dim)
    # only type-checks if hidden_dim == output_dim, so we pick them equal.
    N_NODES = 64
    CUR_DIM = 32
    HIDDEN_DIM = 32
    OUTPUT_DIM = 32
    MULTI_HEAD = True
    HEADS = 6 if MULTI_HEAD else 1
    N_EDGES = 256

    key = jax.random.PRNGKey(0)
    keys = jax.random.split(key, 12)

    # Deterministic synthetic parameters (shapes follow the torch module __init__).
    params = {
        "w_pre": jax.random.normal(keys[0], (CUR_DIM, HIDDEN_DIM), jnp.float32) * 0.1,
        "b_pre": jax.random.normal(keys[1], (1, HIDDEN_DIM), jnp.float32) * 0.1,
        "w_gat": jax.random.normal(keys[2], (HEADS, HIDDEN_DIM, OUTPUT_DIM), jnp.float32) * 0.1,
        "att_src": jax.random.normal(keys[3], (HEADS, 1, OUTPUT_DIM), jnp.float32) * 0.1,
        "att_dst": jax.random.normal(keys[4], (HEADS, 1, OUTPUT_DIM), jnp.float32) * 0.1,
        "b_gat": jax.random.normal(keys[5], (1, HEADS * OUTPUT_DIM), jnp.float32) * 0.1,
        "w_lin": jax.random.normal(keys[6], (HIDDEN_DIM + HEADS * OUTPUT_DIM, OUTPUT_DIM),
                                   jnp.float32) * 0.1,
        "b_lin": jax.random.normal(keys[7], (1, OUTPUT_DIM), jnp.float32) * 0.1,
    }

    # Inputs: node features, random edge list, (unused) edge weights.
    x = jax.random.normal(keys[8], (N_NODES, CUR_DIM), jnp.float32)
    edge_index = jax.random.randint(keys[9], (2, N_EDGES), 0, N_NODES, dtype=jnp.int32)
    edge_weight = jax.random.uniform(keys[10], (N_EDGES,), jnp.float32)

    out = nas_citeseer_forward(x, edge_index, edge_weight, params, HEADS)
    out = jax.block_until_ready(out)

    ref = reference_forward(x, edge_index, params, HEADS)
    assert out.shape == (N_NODES, OUTPUT_DIM)
    # bf16 MXU operands (f32 accumulate) -> loosened tolerance vs the pure-f32 reference.
    assert jnp.allclose(out, ref, rtol=5e-2, atol=5e-2), "mismatch vs pure-JAX reference"

    print("KERNEL_OK")
</pallas_src>

<mosaic_0001>
module attributes {stable_mosaic.version = 11 : i64} {
  func.func @nas_citeseer_kernel(%arg0: memref<64x32xbf16, #tpu.memory_space<vmem>>, %arg1: memref<64x64xbf16, #tpu.memory_space<vmem>>, %arg2: memref<32x32xbf16, #tpu.memory_space<vmem>>, %arg3: memref<1x32xf32, #tpu.memory_space<vmem>>, %arg4: memref<32x192xbf16, #tpu.memory_space<vmem>>, %arg5: memref<32x6xbf16, #tpu.memory_space<vmem>>, %arg6: memref<32x6xbf16, #tpu.memory_space<vmem>>, %arg7: memref<1x192xf32, #tpu.memory_space<vmem>>, %arg8: memref<32x128xbf16, #tpu.memory_space<vmem>>, %arg9: memref<192x128xbf16, #tpu.memory_space<vmem>>, %arg10: memref<1x128xf32, #tpu.memory_space<vmem>>, %arg11: memref<64x128xf32, #tpu.memory_space<vmem>>, %arg12: memref<64x192xf32, #tpu.memory_space<vmem>>) attributes {dimension_semantics = [], scalar_prefetch = 0 : i64, scratch_operands = 1 : i64, tpu.core_type = #tpu.core_type<tc>} {
    %c0 = arith.constant 0 : index
    %c0_0 = arith.constant 0 : index
    %0 = vector.load %arg0[%c0, %c0_0] : memref<64x32xbf16, #tpu.memory_space<vmem>>, vector<64x32xbf16>
    %c0_1 = arith.constant 0 : index
    %c0_2 = arith.constant 0 : index
    %1 = vector.load %arg2[%c0_1, %c0_2] : memref<32x32xbf16, #tpu.memory_space<vmem>>, vector<32x32xbf16>
    %cst = arith.constant dense<0.000000e+00> : vector<64x32xf32>
    %2 = tpu.matmul %0, %1, %cst {dimension_numbers = #tpu.dot_dimension_numbers<[1], [0], [0], [1], [0, 0, 1, 1], [], []>} : vector<64x32xbf16>, vector<32x32xbf16>, vector<64x32xf32> -> vector<64x32xf32>
    %c0_3 = arith.constant 0 : index
    %c0_4 = arith.constant 0 : index
    %3 = vector.load %arg3[%c0_3, %c0_4] : memref<1x32xf32, #tpu.memory_space<vmem>>, vector<1x32xf32>
    %4 = vector.broadcast %3 : vector<1x32xf32> to vector<64x32xf32>
    %5 = arith.addf %2, %4 : vector<64x32xf32>
    %6 = arith.truncf %5 : vector<64x32xf32> to vector<64x32xbf16>
    %c0_5 = arith.constant 0 : index
    %c0_6 = arith.constant 0 : index
    %7 = vector.load %arg4[%c0_5, %c0_6] : memref<32x192xbf16, #tpu.memory_space<vmem>>, vector<32x192xbf16>
    %cst_7 = arith.constant dense<0.000000e+00> : vector<64x192xf32>
    %8 = tpu.matmul %6, %7, %cst_7 {dimension_numbers = #tpu.dot_dimension_numbers<[1], [0], [0], [1], [0, 0, 1, 1], [], []>} : vector<64x32xbf16>, vector<32x192xbf16>, vector<64x192xf32> -> vector<64x192xf32>
    %9 = arith.truncf %8 : vector<64x192xf32> to vector<64x192xbf16>
    %c0_8 = arith.constant 0 : index
    %c0_9 = arith.constant 0 : index
    %10 = vector.load %arg5[%c0_8, %c0_9] : memref<32x6xbf16, #tpu.memory_space<vmem>>, vector<32x6xbf16>
    %cst_10 = arith.constant dense<0.000000e+00> : vector<64x6xf32>
    %11 = tpu.matmul %6, %10, %cst_10 {dimension_numbers = #tpu.dot_dimension_numbers<[1], [0], [0], [1], [0, 0, 1, 1], [], []>} : vector<64x32xbf16>, vector<32x6xbf16>, vector<64x6xf32> -> vector<64x6xf32>
    %c0_11 = arith.constant 0 : index
    %c0_12 = arith.constant 0 : index
    %12 = vector.load %arg6[%c0_11, %c0_12] : memref<32x6xbf16, #tpu.memory_space<vmem>>, vector<32x6xbf16>
    %cst_13 = arith.constant dense<0.000000e+00> : vector<64x6xf32>
    %13 = tpu.matmul %6, %12, %cst_13 {dimension_numbers = #tpu.dot_dimension_numbers<[1], [0], [0], [1], [0, 0, 1, 1], [], []>} : vector<64x32xbf16>, vector<32x6xbf16>, vector<64x6xf32> -> vector<64x6xf32>
    %c0_14 = arith.constant 0 : index
    %c0_15 = arith.constant 0 : index
    %14 = vector.load %arg1[%c0_14, %c0_15] : memref<64x64xbf16, #tpu.memory_space<vmem>>, vector<64x64xbf16>
    %15 = arith.extf %14 : vector<64x64xbf16> to vector<64x64xf32>
    %16 = vector.extract_strided_slice %11 {offsets = [0, 0], sizes = [64, 1], strides = [1, 1]} : vector<64x6xf32> to vector<64x1xf32>
    %17 = vector.extract_strided_slice %13 {offsets = [0, 0], sizes = [64, 1], strides = [1, 1]} : vector<64x6xf32> to vector<64x1xf32>
    %18 = tpu.transpose %17, [1, 0] : vector<64x1xf32> -> vector<1x64xf32>
    %19 = vector.broadcast %16 : vector<64x1xf32> to vector<64x64xf32>
    %20 = vector.broadcast %18 : vector<1x64xf32> to vector<64x64xf32>
    %21 = arith.addf %19, %20 : vector<64x64xf32>
    %cst_16 = arith.constant 0.000000e+00 : f32
    %22 = vector.broadcast %cst_16 : f32 to vector<64x64xf32>
    %23 = arith.cmpf ogt, %21, %22 : vector<64x64xf32>
    %cst_17 = arith.constant 2.000000e-01 : f32
    %24 = vector.broadcast %cst_17 : f32 to vector<64x64xf32>
    %25 = arith.mulf %24, %21 : vector<64x64xf32>
    %26 = arith.select %23, %21, %25 : vector<64x64xi1>, vector<64x64xf32>
    %27 = arith.addf %26, %15 : vector<64x64xf32>
    %cst_18 = arith.constant dense<0xFF800000> : vector<64xf32>
    %28 = vector.multi_reduction <maximumf>, %27, %cst_18 [1] : vector<64x64xf32> to vector<64xf32>
    %29 = vector.shape_cast %28 : vector<64xf32> to vector<64x1xf32>
    %30 = vector.broadcast %29 : vector<64x1xf32> to vector<64x64xf32>
    %31 = arith.subf %27, %30 : vector<64x64xf32>
    %32 = math.exp %31 : vector<64x64xf32>
    %cst_19 = arith.constant dense<0.000000e+00> : vector<64xf32>
    %33 = vector.multi_reduction <add>, %32, %cst_19 [1] : vector<64x64xf32> to vector<64xf32>
    %34 = vector.shape_cast %33 : vector<64xf32> to vector<64x1xf32>
    %35 = tpu.reciprocal %34 {approx = true} : vector<64x1xf32> -> vector<64x1xf32>
    %36 = vector.broadcast %35 : vector<64x1xf32> to vector<64x64xf32>
    %37 = arith.mulf %32, %36 : vector<64x64xf32>
    %38 = arith.truncf %37 : vector<64x64xf32> to vector<64x64xbf16>
    %39 = vector.extract_strided_slice %9 {offsets = [0, 0], sizes = [64, 32], strides = [1, 1]} : vector<64x192xbf16> to vector<64x32xbf16>
    %cst_20 = arith.constant dense<0.000000e+00> : vector<64x32xf32>
    %40 = tpu.matmul %38, %39, %cst_20 {dimension_numbers = #tpu.dot_dimension_numbers<[1], [0], [0], [1], [0, 0, 1, 1], [], []>} : vector<64x64xbf16>, vector<64x32xbf16>, vector<64x32xf32> -> vector<64x32xf32>
    %c0_21 = arith.constant 0 : index
    %c0_22 = arith.constant 0 : index
    %41 = vector.load %arg12[%c0_21, %c0_22] : memref<64x192xf32, #tpu.memory_space<vmem>>, vector<64x32xf32>
    tpu.vector_store %arg12[%c0_21, %c0_22], %40 {strides = array<i32>} : memref<64x192xf32, #tpu.memory_space<vmem>>, vector<64x32xf32>,
    %42 = vector.extract_strided_slice %11 {offsets = [0, 1], sizes = [64, 1], strides = [1, 1]} : vector<64x6xf32> to vector<64x1xf32>
    %43 = vector.extract_strided_slice %13 {offsets = [0, 1], sizes = [64, 1], strides = [1, 1]} : vector<64x6xf32> to vector<64x1xf32>
    %44 = tpu.transpose %43, [1, 0] : vector<64x1xf32> -> vector<1x64xf32>
    %45 = vector.broadcast %42 : vector<64x1xf32> to vector<64x64xf32>
    %46 = vector.broadcast %44 : vector<1x64xf32> to vector<64x64xf32>
    %47 = arith.addf %45, %46 : vector<64x64xf32>
    %cst_23 = arith.constant 0.000000e+00 : f32
    %48 = vector.broadcast %cst_23 : f32 to vector<64x64xf32>
    %49 = arith.cmpf ogt, %47, %48 : vector<64x64xf32>
    %cst_24 = arith.constant 2.000000e-01 : f32
    %50 = vector.broadcast %cst_24 : f32 to vector<64x64xf32>
    %51 = arith.mulf %50, %47 : vector<64x64xf32>
    %52 = arith.select %49, %47, %51 : vector<64x64xi1>, vector<64x64xf32>
    %53 = arith.addf %52, %15 : vector<64x64xf32>
    %cst_25 = arith.constant dense<0xFF800000> : vector<64xf32>
    %54 = vector.multi_reduction <maximumf>, %53, %cst_25 [1] : vector<64x64xf32> to vector<64xf32>
    %55 = vector.shape_cast %54 : vector<64xf32> to vector<64x1xf32>
    %56 = vector.broadcast %55 : vector<64x1xf32> to vector<64x64xf32>
    %57 = arith.subf %53, %56 : vector<64x64xf32>
    %58 = math.exp %57 : vector<64x64xf32>
    %cst_26 = arith.constant dense<0.000000e+00> : vector<64xf32>
    %59 = vector.multi_reduction <add>, %58, %cst_26 [1] : vector<64x64xf32> to vector<64xf32>
    %60 = vector.shape_cast %59 : vector<64xf32> to vector<64x1xf32>
    %61 = tpu.reciprocal %60 {approx = true} : vector<64x1xf32> -> vector<64x1xf32>
    %62 = vector.broadcast %61 : vector<64x1xf32> to vector<64x64xf32>
    %63 = arith.mulf %58, %62 : vector<64x64xf32>
    %64 = arith.truncf %63 : vector<64x64xf32> to vector<64x64xbf16>
    %65 = vector.extract_strided_slice %9 {offsets = [0, 32], sizes = [64, 32], strides = [1, 1]} : vector<64x192xbf16> to vector<64x32xbf16>
    %cst_27 = arith.constant dense<0.000000e+00> : vector<64x32xf32>
    %66 = tpu.matmul %64, %65, %cst_27 {dimension_numbers = #tpu.dot_dimension_numbers<[1], [0], [0], [1], [0, 0, 1, 1], [], []>} : vector<64x64xbf16>, vector<64x32xbf16>, vector<64x32xf32> -> vector<64x32xf32>
    %c0_28 = arith.constant 0 : index
    %c32 = arith.constant 32 : index
    %67 = vector.load %arg12[%c0_28, %c32] : memref<64x192xf32, #tpu.memory_space<vmem>>, vector<64x32xf32>
    tpu.vector_store %arg12[%c0_28, %c32], %66 {strides = array<i32>} : memref<64x192xf32, #tpu.memory_space<vmem>>, vector<64x32xf32>,
    %68 = vector.extract_strided_slice %11 {offsets = [0, 2], sizes = [64, 1], strides = [1, 1]} : vector<64x6xf32> to vector<64x1xf32>
    %69 = vector.extract_strided_slice %13 {offsets = [0, 2], sizes = [64, 1], strides = [1, 1]} : vector<64x6xf32> to vector<64x1xf32>
    %70 = tpu.transpose %69, [1, 0] : vector<64x1xf32> -> vector<1x64xf32>
    %71 = vector.broadcast %68 : vector<64x1xf32> to vector<64x64xf32>
    %72 = vector.broadcast %70 : vector<1x64xf32> to vector<64x64xf32>
    %73 = arith.addf %71, %72 : vector<64x64xf32>
    %cst_29 = arith.constant 0.000000e+00 : f32
    %74 = vector.broadcast %cst_29 : f32 to vector<64x64xf32>
    %75 = arith.cmpf ogt, %73, %74 : vector<64x64xf32>
    %cst_30 = arith.constant 2.000000e-01 : f32
    %76 = vector.broadcast %cst_30 : f32 to vector<64x64xf32>
    %77 = arith.mulf %76, %73 : vector<64x64xf32>
    %78 = arith.select %75, %73, %77 : vector<64x64xi1>, vector<64x64xf32>
    %79 = arith.addf %78, %15 : vector<64x64xf32>
    %cst_31 = arith.constant dense<0xFF800000> : vector<64xf32>
    %80 = vector.multi_reduction <maximumf>, %79, %cst_31 [1] : vector<64x64xf32> to vector<64xf32>
    %81 = vector.shape_cast %80 : vector<64xf32> to vector<64x1xf32>
    %82 = vector.broadcast %81 : vector<64x1xf32> to vector<64x64xf32>
    %83 = arith.subf %79, %82 : vector<64x64xf32>
    %84 = math.exp %83 : vector<64x64xf32>
    %cst_32 = arith.constant dense<0.000000e+00> : vector<64xf32>
    %85 = vector.multi_reduction <add>, %84, %cst_32 [1] : vector<64x64xf32> to vector<64xf32>
    %86 = vector.shape_cast %85 : vector<64xf32> to vector<64x1xf32>
    %87 = tpu.reciprocal %86 {approx = true} : vector<64x1xf32> -> vector<64x1xf32>
    %88 = vector.broadcast %87 : vector<64x1xf32> to vector<64x64xf32>
    %89 = arith.mulf %84, %88 : vector<64x64xf32>
    %90 = arith.truncf %89 : vector<64x64xf32> to vector<64x64xbf16>
    %91 = vector.extract_strided_slice %9 {offsets = [0, 64], sizes = [64, 32], strides = [1, 1]} : vector<64x192xbf16> to vector<64x32xbf16>
    %cst_33 = arith.constant dense<0.000000e+00> : vector<64x32xf32>
    %92 = tpu.matmul %90, %91, %cst_33 {dimension_numbers = #tpu.dot_dimension_numbers<[1], [0], [0], [1], [0, 0, 1, 1], [], []>} : vector<64x64xbf16>, vector<64x32xbf16>, vector<64x32xf32> -> vector<64x32xf32>
    %c0_34 = arith.constant 0 : index
    %c64 = arith.constant 64 : index
    %93 = vector.load %arg12[%c0_34, %c64] : memref<64x192xf32, #tpu.memory_space<vmem>>, vector<64x32xf32>
    tpu.vector_store %arg12[%c0_34, %c64], %92 {strides = array<i32>} : memref<64x192xf32, #tpu.memory_space<vmem>>, vector<64x32xf32>,
    %94 = vector.extract_strided_slice %11 {offsets = [0, 3], sizes = [64, 1], strides = [1, 1]} : vector<64x6xf32> to vector<64x1xf32>
    %95 = vector.extract_strided_slice %13 {offsets = [0, 3], sizes = [64, 1], strides = [1, 1]} : vector<64x6xf32> to vector<64x1xf32>
    %96 = tpu.transpose %95, [1, 0] : vector<64x1xf32> -> vector<1x64xf32>
    %97 = vector.broadcast %94 : vector<64x1xf32> to vector<64x64xf32>
    %98 = vector.broadcast %96 : vector<1x64xf32> to vector<64x64xf32>
    %99 = arith.addf %97, %98 : vector<64x64xf32>
    %cst_35 = arith.constant 0.000000e+00 : f32
    %100 = vector.broadcast %cst_35 : f32 to vector<64x64xf32>
    %101 = arith.cmpf ogt, %99, %100 : vector<64x64xf32>
    %cst_36 = arith.constant 2.000000e-01 : f32
    %102 = vector.broadcast %cst_36 : f32 to vector<64x64xf32>
    %103 = arith.mulf %102, %99 : vector<64x64xf32>
    %104 = arith.select %101, %99, %103 : vector<64x64xi1>, vector<64x64xf32>
    %105 = arith.addf %104, %15 : vector<64x64xf32>
    %cst_37 = arith.constant dense<0xFF800000> : vector<64xf32>
    %106 = vector.multi_reduction <maximumf>, %105, %cst_37 [1] : vector<64x64xf32> to vector<64xf32>
    %107 = vector.shape_cast %106 : vector<64xf32> to vector<64x1xf32>
    %108 = vector.broadcast %107 : vector<64x1xf32> to vector<64x64xf32>
    %109 = arith.subf %105, %108 : vector<64x64xf32>
    %110 = math.exp %109 : vector<64x64xf32>
    %cst_38 = arith.constant dense<0.000000e+00> : vector<64xf32>
    %111 = vector.multi_reduction <add>, %110, %cst_38 [1] : vector<64x64xf32> to vector<64xf32>
    %112 = vector.shape_cast %111 : vector<64xf32> to vector<64x1xf32>
    %113 = tpu.reciprocal %112 {approx = true} : vector<64x1xf32> -> vector<64x1xf32>
    %114 = vector.broadcast %113 : vector<64x1xf32> to vector<64x64xf32>
    %115 = arith.mulf %110, %114 : vector<64x64xf32>
    %116 = arith.truncf %115 : vector<64x64xf32> to vector<64x64xbf16>
    %117 = vector.extract_strided_slice %9 {offsets = [0, 96], sizes = [64, 32], strides = [1, 1]} : vector<64x192xbf16> to vector<64x32xbf16>
    %cst_39 = arith.constant dense<0.000000e+00> : vector<64x32xf32>
    %118 = tpu.matmul %116, %117, %cst_39 {dimension_numbers = #tpu.dot_dimension_numbers<[1], [0], [0], [1], [0, 0, 1, 1], [], []>} : vector<64x64xbf16>, vector<64x32xbf16>, vector<64x32xf32> -> vector<64x32xf32>
    %c0_40 = arith.constant 0 : index
    %c96 = arith.constant 96 : index
    %119 = vector.load %arg12[%c0_40, %c96] : memref<64x192xf32, #tpu.memory_space<vmem>>, vector<64x32xf32>
    tpu.vector_store %arg12[%c0_40, %c96], %118 {strides = array<i32>} : memref<64x192xf32, #tpu.memory_space<vmem>>, vector<64x32xf32>,
    %120 = vector.extract_strided_slice %11 {offsets = [0, 4], sizes = [64, 1], strides = [1, 1]} : vector<64x6xf32> to vector<64x1xf32>
    %121 = vector.extract_strided_slice %13 {offsets = [0, 4], sizes = [64, 1], strides = [1, 1]} : vector<64x6xf32> to vector<64x1xf32>
    %122 = tpu.transpose %121, [1, 0] : vector<64x1xf32> -> vector<1x64xf32>
    %123 = vector.broadcast %120 : vector<64x1xf32> to vector<64x64xf32>
    %124 = vector.broadcast %122 : vector<1x64xf32> to vector<64x64xf32>
    %125 = arith.addf %123, %124 : vector<64x64xf32>
    %cst_41 = arith.constant 0.000000e+00 : f32
    %126 = vector.broadcast %cst_41 : f32 to vector<64x64xf32>
    %127 = arith.cmpf ogt, %125, %126 : vector<64x64xf32>
    %cst_42 = arith.constant 2.000000e-01 : f32
    %128 = vector.broadcast %cst_42 : f32 to vector<64x64xf32>
    %129 = arith.mulf %128, %125 : vector<64x64xf32>
    %130 = arith.select %127, %125, %129 : vector<64x64xi1>, vector<64x64xf32>
    %131 = arith.addf %130, %15 : vector<64x64xf32>
    %cst_43 = arith.constant dense<0xFF800000> : vector<64xf32>
    %132 = vector.multi_reduction <maximumf>, %131, %cst_43 [1] : vector<64x64xf32> to vector<64xf32>
    %133 = vector.shape_cast %132 : vector<64xf32> to vector<64x1xf32>
    %134 = vector.broadcast %133 : vector<64x1xf32> to vector<64x64xf32>
    %135 = arith.subf %131, %134 : vector<64x64xf32>
    %136 = math.exp %135 : vector<64x64xf32>
    %cst_44 = arith.constant dense<0.000000e+00> : vector<64xf32>
    %137 = vector.multi_reduction <add>, %136, %cst_44 [1] : vector<64x64xf32> to vector<64xf32>
    %138 = vector.shape_cast %137 : vector<64xf32> to vector<64x1xf32>
    %139 = tpu.reciprocal %138 {approx = true} : vector<64x1xf32> -> vector<64x1xf32>
    %140 = vector.broadcast %139 : vector<64x1xf32> to vector<64x64xf32>
    %141 = arith.mulf %136, %140 : vector<64x64xf32>
    %142 = arith.truncf %141 : vector<64x64xf32> to vector<64x64xbf16>
    %143 = vector.extract_strided_slice %9 {offsets = [0, 128], sizes = [64, 32], strides = [1, 1]} : vector<64x192xbf16> to vector<64x32xbf16>
    %cst_45 = arith.constant dense<0.000000e+00> : vector<64x32xf32>
    %144 = tpu.matmul %142, %143, %cst_45 {dimension_numbers = #tpu.dot_dimension_numbers<[1], [0], [0], [1], [0, 0, 1, 1], [], []>} : vector<64x64xbf16>, vector<64x32xbf16>, vector<64x32xf32> -> vector<64x32xf32>
    %c0_46 = arith.constant 0 : index
    %c128 = arith.constant 128 : index
    %145 = vector.load %arg12[%c0_46, %c128] : memref<64x192xf32, #tpu.memory_space<vmem>>, vector<64x32xf32>
    tpu.vector_store %arg12[%c0_46, %c128], %144 {strides = array<i32>} : memref<64x192xf32, #tpu.memory_space<vmem>>, vector<64x32xf32>,
    %146 = vector.extract_strided_slice %11 {offsets = [0, 5], sizes = [64, 1], strides = [1, 1]} : vector<64x6xf32> to vector<64x1xf32>
    %147 = vector.extract_strided_slice %13 {offsets = [0, 5], sizes = [64, 1], strides = [1, 1]} : vector<64x6xf32> to vector<64x1xf32>
    %148 = tpu.transpose %147, [1, 0] : vector<64x1xf32> -> vector<1x64xf32>
    %149 = vector.broadcast %146 : vector<64x1xf32> to vector<64x64xf32>
    %150 = vector.broadcast %148 : vector<1x64xf32> to vector<64x64xf32>
    %151 = arith.addf %149, %150 : vector<64x64xf32>
    %cst_47 = arith.constant 0.000000e+00 : f32
    %152 = vector.broadcast %cst_47 : f32 to vector<64x64xf32>
    %153 = arith.cmpf ogt, %151, %152 : vector<64x64xf32>
    %cst_48 = arith.constant 2.000000e-01 : f32
    %154 = vector.broadcast %cst_48 : f32 to vector<64x64xf32>
    %155 = arith.mulf %154, %151 : vector<64x64xf32>
    %156 = arith.select %153, %151, %155 : vector<64x64xi1>, vector<64x64xf32>
    %157 = arith.addf %156, %15 : vector<64x64xf32>
    %cst_49 = arith.constant dense<0xFF800000> : vector<64xf32>
    %158 = vector.multi_reduction <maximumf>, %157, %cst_49 [1] : vector<64x64xf32> to vector<64xf32>
    %159 = vector.shape_cast %158 : vector<64xf32> to vector<64x1xf32>
    %160 = vector.broadcast %159 : vector<64x1xf32> to vector<64x64xf32>
    %161 = arith.subf %157, %160 : vector<64x64xf32>
    %162 = math.exp %161 : vector<64x64xf32>
    %cst_50 = arith.constant dense<0.000000e+00> : vector<64xf32>
    %163 = vector.multi_reduction <add>, %162, %cst_50 [1] : vector<64x64xf32> to vector<64xf32>
    %164 = vector.shape_cast %163 : vector<64xf32> to vector<64x1xf32>
    %165 = tpu.reciprocal %164 {approx = true} : vector<64x1xf32> -> vector<64x1xf32>
    %166 = vector.broadcast %165 : vector<64x1xf32> to vector<64x64xf32>
    %167 = arith.mulf %162, %166 : vector<64x64xf32>
    %168 = arith.truncf %167 : vector<64x64xf32> to vector<64x64xbf16>
    %169 = vector.extract_strided_slice %9 {offsets = [0, 160], sizes = [64, 32], strides = [1, 1]} : vector<64x192xbf16> to vector<64x32xbf16>
    %cst_51 = arith.constant dense<0.000000e+00> : vector<64x32xf32>
    %170 = tpu.matmul %168, %169, %cst_51 {dimension_numbers = #tpu.dot_dimension_numbers<[1], [0], [0], [1], [0, 0, 1, 1], [], []>} : vector<64x64xbf16>, vector<64x32xbf16>, vector<64x32xf32> -> vector<64x32xf32>
    %c0_52 = arith.constant 0 : index
    %c160 = arith.constant 160 : index
    %171 = vector.load %arg12[%c0_52, %c160] : memref<64x192xf32, #tpu.memory_space<vmem>>, vector<64x32xf32>
    tpu.vector_store %arg12[%c0_52, %c160], %170 {strides = array<i32>} : memref<64x192xf32, #tpu.memory_space<vmem>>, vector<64x32xf32>,
    %c0_53 = arith.constant 0 : index
    %c0_54 = arith.constant 0 : index
    %172 = vector.load %arg12[%c0_53, %c0_54] : memref<64x192xf32, #tpu.memory_space<vmem>>, vector<64x192xf32>
    %c0_55 = arith.constant 0 : index
    %c0_56 = arith.constant 0 : index
    %173 = vector.load %arg7[%c0_55, %c0_56] : memref<1x192xf32, #tpu.memory_space<vmem>>, vector<1x192xf32>
    %174 = vector.broadcast %173 : vector<1x192xf32> to vector<64x192xf32>
    %175 = arith.addf %172, %174 : vector<64x192xf32>
    %cst_57 = arith.constant 0.000000e+00 : f32
    %176 = vector.broadcast %cst_57 : f32 to vector<64x192xf32>
    %177 = arith.cmpf ogt, %175, %176 : vector<64x192xf32>
    %cst_58 = arith.constant 0.00999999977 : f32
    %178 = vector.broadcast %cst_58 : f32 to vector<64x192xf32>
    %179 = arith.mulf %178, %175 : vector<64x192xf32>
    %180 = arith.select %177, %175, %179 : vector<64x192xi1>, vector<64x192xf32>
    %181 = arith.truncf %180 : vector<64x192xf32> to vector<64x192xbf16>
    %c0_59 = arith.constant 0 : index
    %c0_60 = arith.constant 0 : index
    %182 = vector.load %arg8[%c0_59, %c0_60] : memref<32x128xbf16, #tpu.memory_space<vmem>>, vector<32x128xbf16>
    %cst_61 = arith.constant dense<0.000000e+00> : vector<64x128xf32>
    %183 = tpu.matmul %6, %182, %cst_61 {dimension_numbers = #tpu.dot_dimension_numbers<[1], [0], [0], [1], [0, 0, 1, 1], [], []>} : vector<64x32xbf16>, vector<32x128xbf16>, vector<64x128xf32> -> vector<64x128xf32>
    %c0_62 = arith.constant 0 : index
    %c0_63 = arith.constant 0 : index
    %184 = vector.load %arg9[%c0_62, %c0_63] : memref<192x128xbf16, #tpu.memory_space<vmem>>, vector<192x128xbf16>
    %cst_64 = arith.constant dense<0.000000e+00> : vector<64x128xf32>
    %185 = tpu.matmul %181, %184, %cst_64 {dimension_numbers = #tpu.dot_dimension_numbers<[1], [0], [0], [1], [0, 0, 1, 1], [], []>} : vector<64x192xbf16>, vector<192x128xbf16>, vector<64x128xf32> -> vector<64x128xf32>
    %186 = arith.addf %183, %185 : vector<64x128xf32>
    %c0_65 = arith.constant 0 : index
    %c0_66 = arith.constant 0 : index
    %187 = vector.load %arg10[%c0_65, %c0_66] : memref<1x128xf32, #tpu.memory_space<vmem>>, vector<1x128xf32>
    %188 = vector.broadcast %187 : vector<1x128xf32> to vector<64x128xf32>
    %189 = arith.addf %186, %188 : vector<64x128xf32>
    %c0_67 = arith.constant 0 : index
    %c0_68 = arith.constant 0 : index
    %190 = vector.load %arg11[%c0_67, %c0_68] : memref<64x128xf32, #tpu.memory_space<vmem>>, vector<64x128xf32>
    tpu.vector_store %arg11[%c0_67, %c0_68], %189 {strides = array<i32>} : memref<64x128xf32, #tpu.memory_space<vmem>>, vector<64x128xf32>,
    return
  }
}

</mosaic_0001>

<llo_original>
// kernel: tpu_custom_call.1
$region0: #{tpu_custom_call.1}
  #allocation0 [shape = 'u32[]', space=smem, size = 0x4, offset = 0x4, fixed_abs, tag = 'smem constant byte address 0x4 - core index']
  #allocation1 [shape = 'u32[144,128]{1,0:T(1,128)}', space=vmem, size = 0x12000, scoped, tag = 'internal scratch']
  #allocation2 [shape = 'f32[64,192]{1,0:T(8,128)}', space=vmem, size = 0x10000, scoped, tag = 'scratch operand']
  %s0 = inlined_call_operand.vmem [shape: bf16[64,32], index: 0, kind: input, shape index: {}]
  %s1 = inlined_call_operand.hbm [shape: bf16[64,64], index: 1, kind: input, shape index: {}]
  %s2 = inlined_call_operand.hbm [shape: bf16[32,32], index: 2, kind: input, shape index: {}]
  %s3 = inlined_call_operand.vmem [shape: f32[1,32], index: 3, kind: input, shape index: {}]
  %s4 = inlined_call_operand.hbm [shape: bf16[32,192], index: 4, kind: input, shape index: {}]
  %s5 = inlined_call_operand.vmem [shape: bf16[32,6], index: 5, kind: input, shape index: {}]
  %s6 = inlined_call_operand.vmem [shape: bf16[32,6], index: 6, kind: input, shape index: {}]
  %s7 = inlined_call_operand.vmem [shape: f32[1,192], index: 7, kind: input, shape index: {}]
  %s8 = inlined_call_operand.hbm [shape: bf16[32,128], index: 8, kind: input, shape index: {}]
  %s9 = inlined_call_operand.vmem [shape: bf16[192,128], index: 9, kind: input, shape index: {}]
  %s10 = inlined_call_operand.vmem [shape: f32[1,128], index: 10, kind: input, shape index: {}]
  %s11 = inlined_call_operand.hbm [shape: f32[64,128], index: 11, kind: output, shape index: {}]
  %s12 = sld [smem:[#allocation0]]
  $region70: #{tpu_custom_call.1} parent=0
    _
  %s14 = ssub.s32 1, %s12
  %s15 = scalar_select 0, %s14, %s12
  $region1: #{tpu_custom_call.1} parent=0
    #allocation3 [shape = 'u8[16384]{0}', space=vmem, size = 0x4000, scoped, tag = 'input window, operand 1, single buffered']
    #allocation4 [shape = 's32[1]{0}', space=sflag, size = 0x4, scoped, tag = 'scoped memory for tpu_custom_call.1']
    #allocation5 [shape = 's32[1]{0}', space=sflag, size = 0x4, scoped, tag = 'scoped memory for tpu_custom_call.1']
    #allocation6 [shape = 'u8[8192]{0}', space=vmem, size = 0x2000, scoped, tag = 'input window, operand 2, single buffered']
    #allocation7 [shape = 's32[1]{0}', space=sflag, size = 0x4, scoped, tag = 'scoped memory for tpu_custom_call.1']
    #allocation8 [shape = 'u8[16384]{0}', space=vmem, size = 0x4000, scoped, tag = 'input window, operand 4, single buffered']
    #allocation9 [shape = 'u8[8192]{0}', space=vmem, size = 0x2000, scoped, tag = 'input window, operand 8, single buffered']
    #allocation10 [shape = 's32[1]{0}', space=sflag, size = 0x4, scoped, tag = 'scoped memory for tpu_custom_call.1']
    #allocation11 [shape = 'u8[32768]{0}', space=vmem, size = 0x8000, scoped, tag = 'output window, operand 0, single buffered']
    %16 = vsyncpa [#allocation4], 0
    %17 = vsyncpa [#allocation7], 0
    %18 = vsyncpa [#allocation10], 0
    %19 = vsyncpa [#allocation5], 0
    // Predicated region
    $region2: #{tpu_custom_call.1} parent=1 // pred_check
      _
    $region3: #{tpu_custom_call.1} parent=1 // pred_check_branch
      %21 = sbr.rel (0) target = $region5
    $region4: #{tpu_custom_call.1} parent=1 // pred_region
      _
    $region5: #{tpu_custom_call.1} parent=1 // pred_fallthru
      _
    // Predicated region
    $region6: #{tpu_custom_call.1} parent=1 // pred_check
      _
    $region7: #{tpu_custom_call.1} parent=1 // pred_check_branch
      %23 = sbr.rel (0) target = $region9
    $region8: #{tpu_custom_call.1} parent=1 // pred_region
      %s25 = ssub.s32 512, 512
      %26 = vsyncadd [#allocation4], %s25
      %s27 = sshll.u32 [#allocation3], 4
      %s28 = int_to_ptr.vmem [resolvable:$true] %s27
      %33 = dma.hbm_to_vmem [thread:$0]  %s1, 512, %s28, [#allocation4], 64, 64, 4
    $region9: #{tpu_custom_call.1} parent=1 // pred_fallthru
      _
    // Predicated region
    $region10: #{tpu_custom_call.1} parent=1 // pred_check
      _
    $region11: #{tpu_custom_call.1} parent=1 // pred_check_branch
      %35 = sbr.rel (0) target = $region13
    $region12: #{tpu_custom_call.1} parent=1 // pred_region
      %s37 = ssub.s32 256, 256
      %38 = vsyncadd [#allocation7], %s37
      %s39 = sshll.u32 [#allocation6], 4
      %s40 = int_to_ptr.vmem [resolvable:$true] %s39
      %45 = dma.hbm_to_vmem [thread:$0]  %s2, 256, %s40, [#allocation7], 64, 64, 4
    $region13: #{tpu_custom_call.1} parent=1 // pred_fallthru
      _
    // Predicated region
    $region14: #{tpu_custom_call.1} parent=1 // pred_check
      _
    $region15: #{tpu_custom_call.1} parent=1 // pred_check_branch
      %47 = sbr.rel (0) target = $region17
    $region16: #{tpu_custom_call.1} parent=1 // pred_region
      _
    $region17: #{tpu_custom_call.1} parent=1 // pred_fallthru
      _
    // Predicated region
    $region18: #{tpu_custom_call.1} parent=1 // pred_check
      _
    $region19: #{tpu_custom_call.1} parent=1 // pred_check_branch
      %49 = sbr.rel (0) target = $region21
    $region20: #{tpu_custom_call.1} parent=1 // pred_region
      %s51 = ssub.s32 512, 512
      %52 = vsyncadd [#allocation7], %s51
      %s53 = sshll.u32 [#allocation8], 4
      %s54 = int_to_ptr.vmem [resolvable:$true] %s53
      %59 = dma.hbm_to_vmem [thread:$0]  %s4, 512, %s54, [#allocation7], 128, 128, 8
    $region21: #{tpu_custom_call.1} parent=1 // pred_fallthru
      _
    // Predicated region
    $region22: #{tpu_custom_call.1} parent=1 // pred_check
      _
    $region23: #{tpu_custom_call.1} parent=1 // pred_check_branch
      %61 = sbr.rel (0) target = $region25
    $region24: #{tpu_custom_call.1} parent=1 // pred_region
      _
    $region25: #{tpu_custom_call.1} parent=1 // pred_fallthru
      _
    // Predicated region
    $region26: #{tpu_custom_call.1} parent=1 // pred_check
      _
    $region27: #{tpu_custom_call.1} parent=1 // pred_check_branch
      %63 = sbr.rel (0) target = $region29
    $region28: #{tpu_custom_call.1} parent=1 // pred_region
      _
    $region29: #{tpu_custom_call.1} parent=1 // pred_fallthru
      _
    // Predicated region
    $region30: #{tpu_custom_call.1} parent=1 // pred_check
      _
    $region31: #{tpu_custom_call.1} parent=1 // pred_check_branch
      %65 = sbr.rel (0) target = $region33
    $region32: #{tpu_custom_call.1} parent=1 // pred_region
      _
    $region33: #{tpu_custom_call.1} parent=1 // pred_fallthru
      _
    // Predicated region
    $region34: #{tpu_custom_call.1} parent=1 // pred_check
      _
    $region35: #{tpu_custom_call.1} parent=1 // pred_check_branch
      %67 = sbr.rel (0) target = $region37
    $region36: #{tpu_custom_call.1} parent=1 // pred_region
      %s69 = ssub.s32 256, 256
      %70 = vsyncadd [#allocation10], %s69
      %s71 = sshll.u32 [#allocation9], 4
      %s72 = int_to_ptr.vmem [resolvable:$true] %s71
      %77 = dma.hbm_to_vmem [thread:$0]  %s8, 256, %s72, [#allocation10], 64, 64, 4
    $region37: #{tpu_custom_call.1} parent=1 // pred_fallthru
      _
    // Predicated region
    $region38: #{tpu_custom_call.1} parent=1 // pred_check
      _
    $region39: #{tpu_custom_call.1} parent=1 // pred_check_branch
      %79 = sbr.rel (0) target = $region41
    $region40: #{tpu_custom_call.1} parent=1 // pred_region
      _
    $region41: #{tpu_custom_call.1} parent=1 // pred_fallthru
      _
    // Predicated region
    $region42: #{tpu_custom_call.1} parent=1 // pred_check
      _
    $region43: #{tpu_custom_call.1} parent=1 // pred_check_branch
      %81 = sbr.rel (0) target = $region45
    $region44: #{tpu_custom_call.1} parent=1 // pred_region
      _
    $region45: #{tpu_custom_call.1} parent=1 // pred_fallthru
      _
    // Predicated region
    $region46: #{tpu_custom_call.1} parent=1 // pred_check
      _
    $region47: #{tpu_custom_call.1} parent=1 // pred_check_branch
      %83 = sbr.rel (0) target = $region49
    $region48: #{tpu_custom_call.1} parent=1 // pred_region
      %84 = dma.done [#allocation4], 512
    $region49: #{tpu_custom_call.1} parent=1 // pred_fallthru
      _
    // Predicated region
    $region50: #{tpu_custom_call.1} parent=1 // pred_check
      _
    $region51: #{tpu_custom_call.1} parent=1 // pred_check_branch
      %86 = sbr.rel (0) target = $region53
    $region52: #{tpu_custom_call.1} parent=1 // pred_region
      %87 = dma.done [#allocation7], 256
    $region53: #{tpu_custom_call.1} parent=1 // pred_fallthru
      _
    // Predicated region
    $region54: #{tpu_custom_call.1} parent=1 // pred_check
      _
    $region55: #{tpu_custom_call.1} parent=1 // pred_check_branch
      %89 = sbr.rel (0) target = $region57
    $region56: #{tpu_custom_call.1} parent=1 // pred_region
      %90 = dma.done [#allocation7], 512
    $region57: #{tpu_custom_call.1} parent=1 // pred_fallthru
      _
    // Predicated region
    $region58: #{tpu_custom_call.1} parent=1 // pred_check
      _
    $region59: #{tpu_custom_call.1} parent=1 // pred_check_branch
      %92 = sbr.rel (0) target = $region61
    $region60: #{tpu_custom_call.1} parent=1 // pred_region
      %93 = dma.done [#allocation10], 256
    $region61: #{tpu_custom_call.1} parent=1 // pred_fallthru
      _
    %v95 = vld [vmem:[%s0] sm:$0xf]
    %v96 = vld [vmem:[%s0 + $0x4] sm:$0xf]
    %v97 = vld [vmem:[%s0 + $0x8] sm:$0xf]
    %v98 = vld [vmem:[%s0 + $0xc] sm:$0xf]
    %v99 = vld [vmem:[%s0 + $0x10] sm:$0xf]
    %v100 = vld [vmem:[%s0 + $0x14] sm:$0xf]
    %v101 = vld [vmem:[%s0 + $0x18] sm:$0xf]
    %v102 = vld [vmem:[%s0 + $0x1c] sm:$0xf]
    %v103 = vld [vmem:[#allocation6] sm:$0xf]
    %v104 = vld [vmem:[#allocation6 + $0x4] sm:$0xf]
    %v105 = vld [vmem:[#allocation6 + $0x8] sm:$0xf]
    %v106 = vld [vmem:[#allocation6 + $0xc] sm:$0xf]
    %v107 = vld [vmem:[%s3] sm:$0x1]
    %v109 = vlaneseq
    %v110 = vshrl.u32 %v109, 7
    %v111 = vsub.s32 0, %v110
    %v112 = vrot.slane %v107, %v111
    %v122 = vunpack.c.l.b16 %v95
    %v123 = vunpack.c.l.b16 %v96
    %v124 = vunpack.c.l.b16 %v97
    %v125 = vunpack.c.l.b16 %v98
    %v126 = vunpack.c.l.b16 %v99
    %v127 = vunpack.c.l.b16 %v100
    %v128 = vunpack.c.l.b16 %v101
    %v129 = vunpack.c.l.b16 %v102
    %v130 = vpack.c.b16 %v123, %v122
    %v131 = vpack.c.b16 %v125, %v124
    %v132 = vpack.c.b16 %v127, %v126
    %v133 = vpack.c.b16 %v129, %v128
    %v138 = vunpack.c.l.b16 %v103
    %v139 = vunpack.c.l.b16 %v104
    %v140 = vunpack.c.l.b16 %v105
    %v141 = vunpack.c.l.b16 %v106
    %v142 = vpack.c.b16 %v139, %v138
    %v143 = vpack.c.b16 %v141, %v140
    %vm146 = vcmask 261120
    %v148 = vsel %vm146, %v130, 0
    %v151 = vsel %vm146, %v131, 0
    %v154 = vsel %vm146, %v132, 0
    %v157 = vsel %vm146, %v133, 0
    %159 = vmatprep.subr.bf16.mxu0 0
    %160 = vmatpush1.bf16.msra.mxu0 0
    %161 = vmatprep.subr.bf16.mxu0 0
    %162 = vmatpush1.bf16.msra.mxu0 0
    %163 = vmatprep.subr.bf16.mxu0 0
    %164 = vmatpush1.bf16.msra.mxu0 0
    %165 = vmatprep.subr.bf16.mxu0 0
    %166 = vmatpush1.bf16.msra.mxu0 0
    %167 = vmatprep.subr.bf16.mxu0 0
    %168 = vmatpush1.bf16.msra.mxu0 0
    %169 = vmatprep.subr.bf16.mxu0 0
    %170 = vmatpush1.bf16.msra.mxu0 0
    %171 = vmatprep.subr.bf16.mxu0 0
    %172 = vmatpush1.bf16.msra.mxu0 %v143
    %173 = vmatprep.subr.bf16.mxu0 0
    %174 = vmatpush1.bf16.msra.mxu0 %v142
    %175 = vmatprep.subr.bf16.mxu0 0
    %176 = vmatpush2.bf16.msra.mxu0 0
    %177 = vmatprep.subr.bf16.mxu0 0
    %178 = vmatpush2.bf16.msra.mxu0 0
    %179 = vmatprep.subr.bf16.mxu0 0
    %180 = vmatpush2.bf16.msra.mxu0 0
    %181 = vmatprep.subr.bf16.mxu0 0
    %182 = vmatpush2.bf16.msra.mxu0 0
    %183 = vmatprep.subr.bf16.mxu0 0
    %184 = vmatpush2.bf16.msra.mxu0 0
    %185 = vmatprep.subr.bf16.mxu0 0
    %186 = vmatpush2.bf16.msra.mxu0 0
    %187 = vmatprep.subr.bf16.mxu0 0
    %188 = vmatpush2.bf16.msra.mxu0 0
    %189 = vmatprep.subr.bf16.mxu0 0
    %190 = vmatpush2.bf16.msra.mxu0 0
    %191 = vmatprep.mubr.bf16.mxu0 0
    %192 = vmatmul.mubr.bf16.gmra.mxu0 %v148
    %v193 = vpop.f32.mrf.mxu0
    %v194 = vadd.f32 %v112, %v193
    %v195 = vpop.f32.mrf.mxu0
    %v196 = vpop.f32.mrf.mxu0
    %v197 = vadd.f32 %v112, %v196
    %v198 = vpop.f32.mrf.mxu0
    %199 = vmatprep.mubr.bf16.mxu0 0
    %200 = vmatmul.mubr.bf16.gmra.mxu0 %v151
    %v201 = vpop.f32.mrf.mxu0
    %v202 = vadd.f32 %v112, %v201
    %v203 = vpop.f32.mrf.mxu0
    %v204 = vpop.f32.mrf.mxu0
    %v205 = vadd.f32 %v112, %v204
    %v206 = vpop.f32.mrf.mxu0
    %207 = vmatprep.mubr.bf16.mxu0 0
    %208 = vmatmul.mubr.bf16.gmra.mxu0 %v154
    %v209 = vpop.f32.mrf.mxu0
    %v210 = vadd.f32 %v112, %v209
    %v211 = vpop.f32.mrf.mxu0
    %v212 = vpop.f32.mrf.mxu0
    %v213 = vadd.f32 %v112, %v212
    %v214 = vpop.f32.mrf.mxu0
    %215 = vmatprep.mubr.bf16.mxu0 0
    %216 = vmatmul.mubr.bf16.gmra.mxu0 %v157
    %v217 = vpop.f32.mrf.mxu0
    %v218 = vadd.f32 %v112, %v217
    %v219 = vpop.f32.mrf.mxu0
    %v220 = vpop.f32.mrf.mxu0
    %v221 = vadd.f32 %v112, %v220
    %v222 = vpop.f32.mrf.mxu0
    %223 = vdwg.mxu0
    %v224 = vpack.c.bf16 %v197, %v194
    %v225 = vpack.c.bf16 %v205, %v202
    %v226 = vpack.c.bf16 %v213, %v210
    %v227 = vpack.c.bf16 %v221, %v218
    %v228 = vld [vmem:[#allocation8] sm:$0xff]
    %v229 = vld [vmem:[#allocation8 + $0x8] sm:$0xff]
    %v230 = vld [vmem:[#allocation8 + $0x10] sm:$0xff]
    %v231 = vld [vmem:[#allocation8 + $0x18] sm:$0xff]
    %v236 = vunpack.c.l.b16 %v228
    %v237 = vunpack.c.h.b16 %v228
    %v238 = vunpack.c.l.b16 %v229
    %v239 = vunpack.c.h.b16 %v229
    %v240 = vunpack.c.l.b16 %v230
    %v241 = vunpack.c.h.b16 %v230
    %v242 = vunpack.c.l.b16 %v231
    %v243 = vunpack.c.h.b16 %v231
    %v244 = vpack.c.b16 %v238, %v236
    %v245 = vpack.c.b16 %v239, %v237
    %v246 = vpack.c.b16 %v242, %v240
    %v247 = vpack.c.b16 %v243, %v241
    %v253 = vsel %vm146, %v224, 0
    %v256 = vsel %vm146, %v225, 0
    %v259 = vsel %vm146, %v226, 0
    %v262 = vsel %vm146, %v227, 0
    %264 = vmatprep.subr.bf16.mxu0 0
    %265 = vmatpush1.bf16.msra.mxu0 0
    %266 = vmatprep.subr.bf16.mxu0 0
    %267 = vmatpush1.bf16.msra.mxu0 0
    %268 = vmatprep.subr.bf16.mxu0 0
    %269 = vmatpush1.bf16.msra.mxu0 0
    %270 = vmatprep.subr.bf16.mxu0 0
    %271 = vmatpush1.bf16.msra.mxu0 0
    %272 = vmatprep.subr.bf16.mxu0 0
    %273 = vmatpush1.bf16.msra.mxu0 0
    %274 = vmatprep.subr.bf16.mxu0 0
    %275 = vmatpush1.bf16.msra.mxu0 0
    %276 = vmatprep.subr.bf16.mxu0 %v247
    %277 = vmatpush1.bf16.msra.mxu0 %v246
    %278 = vmatprep.subr.bf16.mxu0 %v245
    %279 = vmatpush1.bf16.msra.mxu0 %v244
    %280 = vmatprep.subr.bf16.mxu0 0
    %281 = vmatpush2.bf16.msra.mxu0 0
    %282 = vmatprep.subr.bf16.mxu0 0
    %283 = vmatpush2.bf16.msra.mxu0 0
    %284 = vmatprep.subr.bf16.mxu0 0
    %285 = vmatpush2.bf16.msra.mxu0 0
    %286 = vmatprep.subr.bf16.mxu0 0
    %287 = vmatpush2.bf16.msra.mxu0 0
    %288 = vmatprep.subr.bf16.mxu0 0
    %289 = vmatpush2.bf16.msra.mxu0 0
    %290 = vmatprep.subr.bf16.mxu0 0
    %291 = vmatpush2.bf16.msra.mxu0 0
    %292 = vmatprep.subr.bf16.mxu0 0
    %293 = vmatpush2.bf16.msra.mxu0 0
    %294 = vmatprep.subr.bf16.mxu0 0
    %295 = vmatpush2.bf16.msra.mxu0 0
    %296 = vmatprep.mubr.bf16.mxu0 0
    %297 = vmatmul.mubr.bf16.gmra.mxu0 %v253
    %v298 = vpop.f32.mrf.mxu0
    %v299 = vadd.f32 0.0, %v298
    %v300 = vpop.f32.mrf.mxu0
    %v301 = vadd.f32 0.0, %v300
    %v302 = vpop.f32.mrf.mxu0
    %v303 = vadd.f32 0.0, %v302
    %v304 = vpop.f32.mrf.mxu0
    %v305 = vadd.f32 0.0, %v304
    %306 = vmatprep.mubr.bf16.mxu0 0
    %307 = vmatmul.mubr.bf16.gmra.mxu0 %v256
    %v308 = vpop.f32.mrf.mxu0
    %v309 = vadd.f32 0.0, %v308
    %v310 = vpop.f32.mrf.mxu0
    %v311 = vadd.f32 0.0, %v310
    %v312 = vpop.f32.mrf.mxu0
    %v313 = vadd.f32 0.0, %v312
    %v314 = vpop.f32.mrf.mxu0
    %v315 = vadd.f32 0.0, %v314
    %316 = vmatprep.mubr.bf16.mxu0 0
    %317 = vmatmul.mubr.bf16.gmra.mxu0 %v259
    %v318 = vpop.f32.mrf.mxu0
    %v319 = vadd.f32 0.0, %v318
    %v320 = vpop.f32.mrf.mxu0
    %v321 = vadd.f32 0.0, %v320
    %v322 = vpop.f32.mrf.mxu0
    %v323 = vadd.f32 0.0, %v322
    %v324 = vpop.f32.mrf.mxu0
    %v325 = vadd.f32 0.0, %v324
    %326 = vmatprep.mubr.bf16.mxu0 0
    %327 = vmatmul.mubr.bf16.gmra.mxu0 %v262
    %v328 = vpop.f32.mrf.mxu0
    %v329 = vadd.f32 0.0, %v328
    %v330 = vpop.f32.mrf.mxu0
    %v331 = vadd.f32 0.0, %v330
    %v332 = vpop.f32.mrf.mxu0
    %v333 = vadd.f32 0.0, %v332
    %v334 = vpop.f32.mrf.mxu0
    %v335 = vadd.f32 0.0, %v334
    %336 = vdwg.mxu0
    %v337 = vpack.c.bf16 %v303, %v299
    %v338 = vpack.c.bf16 %v305, %v301
    %v339 = vpack.c.bf16 %v313, %v309
    %v340 = vpack.c.bf16 %v315, %v311
    %v341 = vpack.c.bf16 %v323, %v319
    %v342 = vpack.c.bf16 %v325, %v321
    %v343 = vpack.c.bf16 %v333, %v329
    %v344 = vpack.c.bf16 %v335, %v331
    %v345 = vld [vmem:[%s5] sm:$0xf]
    %v346 = vld [vmem:[%s5 + $0x4] sm:$0xf]
    %v347 = vld [vmem:[%s5 + $0x8] sm:$0xf]
    %v348 = vld [vmem:[%s5 + $0xc] sm:$0xf]
    %v353 = vunpack.c.l.b16 %v345
    %v354 = vunpack.c.l.b16 %v346
    %v355 = vunpack.c.l.b16 %v347
    %v356 = vunpack.c.l.b16 %v348
    %v357 = vpack.c.b16 %v354, %v353
    %v358 = vpack.c.b16 %v356, %v355
    %361 = vmatprep.subr.bf16.mxu0 0
    %362 = vmatpush1.bf16.msra.mxu0 0
    %363 = vmatprep.subr.bf16.mxu0 0
    %364 = vmatpush1.bf16.msra.mxu0 0
    %365 = vmatprep.subr.bf16.mxu0 0
    %366 = vmatpush1.bf16.msra.mxu0 0
    %367 = vmatprep.subr.bf16.mxu0 0
    %368 = vmatpush1.bf16.msra.mxu0 0
    %369 = vmatprep.subr.bf16.mxu0 0
    %370 = vmatpush1.bf16.msra.mxu0 0
    %371 = vmatprep.subr.bf16.mxu0 0
    %372 = vmatpush1.bf16.msra.mxu0 0
    %373 = vmatprep.subr.bf16.mxu0 0
    %374 = vmatpush1.bf16.msra.mxu0 %v358
    %375 = vmatprep.subr.bf16.mxu0 0
    %376 = vmatpush1.bf16.msra.mxu0 %v357
    %377 = vmatprep.subr.bf16.mxu0 0
    %378 = vmatpush2.bf16.msra.mxu0 0
    %379 = vmatprep.subr.bf16.mxu0 0
    %380 = vmatpush2.bf16.msra.mxu0 0
    %381 = vmatprep.subr.bf16.mxu0 0
    %382 = vmatpush2.bf16.msra.mxu0 0
    %383 = vmatprep.subr.bf16.mxu0 0
    %384 = vmatpush2.bf16.msra.mxu0 0
    %385 = vmatprep.subr.bf16.mxu0 0
    %386 = vmatpush2.bf16.msra.mxu0 0
    %387 = vmatprep.subr.bf16.mxu0 0
    %388 = vmatpush2.bf16.msra.mxu0 0
    %389 = vmatprep.subr.bf16.mxu0 0
    %390 = vmatpush2.bf16.msra.mxu0 0
    %391 = vmatprep.subr.bf16.mxu0 0
    %392 = vmatpush2.bf16.msra.mxu0 0
    %393 = vmatprep.mubr.bf16.mxu0 0
    %394 = vmatmul.mubr.bf16.gmra.mxu0 %v253
    %v395 = vpop.f32.mrf.mxu0
    %v396 = vadd.f32 0.0, %v395
    %v397 = vpop.f32.mrf.mxu0
    %v398 = vpop.f32.mrf.mxu0
    %v399 = vadd.f32 0.0, %v398
    %v400 = vpop.f32.mrf.mxu0
    %401 = vmatprep.mubr.bf16.mxu0 0
    %402 = vmatmul.mubr.bf16.gmra.mxu0 %v256
    %v403 = vpop.f32.mrf.mxu0
    %v404 = vadd.f32 0.0, %v403
    %v405 = vpop.f32.mrf.mxu0
    %v406 = vpop.f32.mrf.mxu0
    %v407 = vadd.f32 0.0, %v406
    %v408 = vpop.f32.mrf.mxu0
    %409 = vmatprep.mubr.bf16.mxu0 0
    %410 = vmatmul.mubr.bf16.gmra.mxu0 %v259
    %v411 = vpop.f32.mrf.mxu0
    %v412 = vadd.f32 0.0, %v411
    %v413 = vpop.f32.mrf.mxu0
    %v414 = vpop.f32.mrf.mxu0
    %v415 = vadd.f32 0.0, %v414
    %v416 = vpop.f32.mrf.mxu0
    %417 = vmatprep.mubr.bf16.mxu0 0
    %418 = vmatmul.mubr.bf16.gmra.mxu0 %v262
    %v419 = vpop.f32.mrf.mxu0
    %v420 = vadd.f32 0.0, %v419
    %v421 = vpop.f32.mrf.mxu0
    %v422 = vpop.f32.mrf.mxu0
    %v423 = vadd.f32 0.0, %v422
    %v424 = vpop.f32.mrf.mxu0
    %425 = vdwg.mxu0
    %v426 = vld [vmem:[%s6] sm:$0xf]
    %v427 = vld [vmem:[%s6 + $0x4] sm:$0xf]
    %v428 = vld [vmem:[%s6 + $0x8] sm:$0xf]
    %v429 = vld [vmem:[%s6 + $0xc] sm:$0xf]
    %v434 = vunpack.c.l.b16 %v426
    %v435 = vunpack.c.l.b16 %v427
    %v436 = vunpack.c.l.b16 %v428
    %v437 = vunpack.c.l.b16 %v429
    %v438 = vpack.c.b16 %v435, %v434
    %v439 = vpack.c.b16 %v437, %v436
    %442 = vmatprep.subr.bf16.mxu0 0
    %443 = vmatpush1.bf16.msra.mxu0 0
    %444 = vmatprep.subr.bf16.mxu0 0
    %445 = vmatpush1.bf16.msra.mxu0 0
    %446 = vmatprep.subr.bf16.mxu0 0
    %447 = vmatpush1.bf16.msra.mxu0 0
    %448 = vmatprep.subr.bf16.mxu0 0
    %449 = vmatpush1.bf16.msra.mxu0 0
    %450 = vmatprep.subr.bf16.mxu0 0
    %451 = vmatpush1.bf16.msra.mxu0 0
    %452 = vmatprep.subr.bf16.mxu0 0
    %453 = vmatpush1.bf16.msra.mxu0 0
    %454 = vmatprep.subr.bf16.mxu0 0
    %455 = vmatpush1.bf16.msra.mxu0 %v439
    %456 = vmatprep.subr.bf16.mxu0 0
    %457 = vmatpush1.bf16.msra.mxu0 %v438
    %458 = vmatprep.subr.bf16.mxu0 0
    %459 = vmatpush2.bf16.msra.mxu0 0
    %460 = vmatprep.subr.bf16.mxu0 0
    %461 = vmatpush2.bf16.msra.mxu0 0
    %462 = vmatprep.subr.bf16.mxu0 0
    %463 = vmatpush2.bf16.msra.mxu0 0
    %464 = vmatprep.subr.bf16.mxu0 0
    %465 = vmatpush2.bf16.msra.mxu0 0
    %466 = vmatprep.subr.bf16.mxu0 0
    %467 = vmatpush2.bf16.msra.mxu0 0
    %468 = vmatprep.subr.bf16.mxu0 0
    %469 = vmatpush2.bf16.msra.mxu0 0
    %470 = vmatprep.subr.bf16.mxu0 0
    %471 = vmatpush2.bf16.msra.mxu0 0
    %472 = vmatprep.subr.bf16.mxu0 0
    %473 = vmatpush2.bf16.msra.mxu0 0
    %474 = vmatprep.mubr.bf16.mxu0 0
    %475 = vmatmul.mubr.bf16.gmra.mxu0 %v253
    %v476 = vpop.f32.mrf.mxu0
    %v477 = vadd.f32 0.0, %v476
    %v478 = vpop.f32.mrf.mxu0
    %v479 = vpop.f32.mrf.mxu0
    %v480 = vadd.f32 0.0, %v479
    %v481 = vpop.f32.mrf.mxu0
    %482 = vmatprep.mubr.bf16.mxu0 0
    %483 = vmatmul.mubr.bf16.gmra.mxu0 %v256
    %v484 = vpop.f32.mrf.mxu0
    %v485 = vadd.f32 0.0, %v484
    %v486 = vpop.f32.mrf.mxu0
    %v487 = vpop.f32.mrf.mxu0
    %v488 = vadd.f32 0.0, %v487
    %v489 = vpop.f32.mrf.mxu0
    %490 = vmatprep.mubr.bf16.mxu0 0
    %491 = vmatmul.mubr.bf16.gmra.mxu0 %v259
    %v492 = vpop.f32.mrf.mxu0
    %v493 = vadd.f32 0.0, %v492
    %v494 = vpop.f32.mrf.mxu0
    %v495 = vpop.f32.mrf.mxu0
    %v496 = vadd.f32 0.0, %v495
    %v497 = vpop.f32.mrf.mxu0
    %498 = vmatprep.mubr.bf16.mxu0 0
    %499 = vmatmul.mubr.bf16.gmra.mxu0 %v262
    %v500 = vpop.f32.mrf.mxu0
    %v501 = vadd.f32 0.0, %v500
    %v502 = vpop.f32.mrf.mxu0
    %v503 = vpop.f32.mrf.mxu0
    %v504 = vadd.f32 0.0, %v503
    %v505 = vpop.f32.mrf.mxu0
    %506 = vdwg.mxu0
    %v507 = vld [vmem:[#allocation3] sm:$0xf]
    %v508 = vld [vmem:[#allocation3 + $0x4] sm:$0xf]
    %v509 = vld [vmem:[#allocation3 + $0x8] sm:$0xf]
    %v510 = vld [vmem:[#allocation3 + $0xc] sm:$0xf]
    %v511 = vld [vmem:[#allocation3 + $0x10] sm:$0xf]
    %v512 = vld [vmem:[#allocation3 + $0x14] sm:$0xf]
    %v513 = vld [vmem:[#allocation3 + $0x18] sm:$0xf]
    %v514 = vld [vmem:[#allocation3 + $0x1c] sm:$0xf]
    %v515 = vunpack.c.l.bf16 %v507
    %v516 = vunpack.c.l.bf16 %v508
    %v517 = vunpack.c.l.bf16 %v509
    %v518 = vunpack.c.l.bf16 %v510
    %v519 = vunpack.c.l.bf16 %v511
    %v520 = vunpack.c.l.bf16 %v512
    %v521 = vunpack.c.l.bf16 %v513
    %v522 = vunpack.c.l.bf16 %v514
    %523 = vxpose.xlu0.b32.start [1/16] %v477, 128
    %524 = vxpose.xlu0.b32.cont [2/16] %v480, 128
    %525 = vxpose.xlu0.b32.cont [3/16] %v485, 128
    %526 = vxpose.xlu0.b32.cont [4/16] %v488, 128
    %527 = vxpose.xlu0.b32.cont [5/16] %v493, 128
    %528 = vxpose.xlu0.b32.cont [6/16] %v496, 128
    %529 = vxpose.xlu0.b32.cont [7/16] %v501, 128
    %530 = vxpose.xlu0.b32.cont [8/16] %v504, 128
    %531 = vxpose.xlu0.b32.cont [9/16] 0.0, 128
    %532 = vxpose.xlu0.b32.cont [10/16] 0.0, 128
    %533 = vxpose.xlu0.b32.cont [11/16] 0.0, 128
    %534 = vxpose.xlu0.b32.cont [12/16] 0.0, 128
    %535 = vxpose.xlu0.b32.cont [13/16] 0.0, 128
    %536 = vxpose.xlu0.b32.cont [14/16] 0.0, 128
    %537 = vxpose.xlu0.b32.cont [15/16] 0.0, 128
    %538 = vxpose.xlu0.b32.end [16/16] 0.0, 128
    %v539 = vpop.trf.xlu0
    %v540 = vpop.trf.xlu0
    %v541 = vpop.trf.xlu0
    %v542 = vpop.trf.xlu0
    %v543 = vpop.trf.xlu0
    %v544 = vpop.trf.xlu0
    %v545 = vpop.trf.xlu0
    %v546 = vpop.trf.xlu0
    %v547 = vpop.trf.xlu0
    %v548 = vpop.trf.xlu0
    %v549 = vpop.trf.xlu0
    %v550 = vpop.trf.xlu0
    %v551 = vpop.trf.xlu0
    %v552 = vpop.trf.xlu0
    %v553 = vpop.trf.xlu0
    %v554 = vpop.trf.xlu0
    %556 = vset.pattern.permute.xlu0 0
    %557 = vperm.xlu0 %556, %v396
    %v558 = vpop.permute.xlu0 %557
    %561 = vset.pattern.permute.xlu0 0
    %562 = vperm.xlu0 %561, %v399
    %v563 = vpop.permute.xlu0 %562
    %566 = vset.pattern.permute.xlu0 0
    %567 = vperm.xlu0 %566, %v404
    %v568 = vpop.permute.xlu0 %567
    %571 = vset.pattern.permute.xlu0 0
    %572 = vperm.xlu0 %571, %v407
    %v573 = vpop.permute.xlu0 %572
    %576 = vset.pattern.permute.xlu0 0
    %577 = vperm.xlu0 %576, %v412
    %v578 = vpop.permute.xlu0 %577
    %581 = vset.pattern.permute.xlu0 0
    %582 = vperm.xlu0 %581, %v415
    %v583 = vpop.permute.xlu0 %582
    %586 = vset.pattern.permute.xlu0 0
    %587 = vperm.xlu0 %586, %v420
    %v588 = vpop.permute.xlu0 %587
    %591 = vset.pattern.permute.xlu0 0
    %592 = vperm.xlu0 %591, %v423
    %v593 = vpop.permute.xlu0 %592
    %v595 = vlaneseq
    %v596 = vshrl.u32 %v595, 7
    %v597 = vsub.s32 0, %v596
    %v598 = vrot.slane %v539, %v597
    %v599 = vadd.f32 %v558, %v598
    %v600 = vadd.f32 %v563, %v598
    %v601 = vadd.f32 %v568, %v598
    %v602 = vadd.f32 %v573, %v598
    %v603 = vadd.f32 %v578, %v598
    %v604 = vadd.f32 %v583, %v598
    %v605 = vadd.f32 %v588, %v598
    %v606 = vadd.f32 %v593, %v598
    %vm607 = vcmp.gt.f32.partialorder %v599, 0.0
    %vm608 = vcmp.gt.f32.partialorder %v600, 0.0
    %vm609 = vcmp.gt.f32.partialorder %v601, 0.0
    %vm610 = vcmp.gt.f32.partialorder %v602, 0.0
    %vm611 = vcmp.gt.f32.partialorder %v603, 0.0
    %vm612 = vcmp.gt.f32.partialorder %v604, 0.0
    %vm613 = vcmp.gt.f32.partialorder %v605, 0.0
    %vm614 = vcmp.gt.f32.partialorder %v606, 0.0
    %v615 = vmul.f32 %v599, 0.2
    %v616 = vmul.f32 %v600, 0.2
    %v617 = vmul.f32 %v601, 0.2
    %v618 = vmul.f32 %v602, 0.2
    %v619 = vmul.f32 %v603, 0.2
    %v620 = vmul.f32 %v604, 0.2
    %v621 = vmul.f32 %v605, 0.2
    %v622 = vmul.f32 %v606, 0.2
    %v623 = vsel %vm607, %v599, %v615
    %v624 = vsel %vm608, %v600, %v616
    %v625 = vsel %vm609, %v601, %v617
    %v626 = vsel %vm610, %v602, %v618
    %v627 = vsel %vm611, %v603, %v619
    %v628 = vsel %vm612, %v604, %v620
    %v629 = vsel %vm613, %v605, %v621
    %v630 = vsel %vm614, %v606, %v622
    %v631 = vadd.f32 %v623, %v515
    %v632 = vadd.f32 %v624, %v516
    %v633 = vadd.f32 %v625, %v517
    %v634 = vadd.f32 %v626, %v518
    %v635 = vadd.f32 %v627, %v519
    %v636 = vadd.f32 %v628, %v520
    %v637 = vadd.f32 %v629, %v521
    %v638 = vadd.f32 %v630, %v522
    %vm639 = vcmask 523264
    %v640 = vsel %vm639, %v631, -inf
    %641 = vmax.xlane.f32.xlu0 %v640
    %v642 = vpop.xlane.xlu0 %641
    %v643 = vsel %vm639, %v632, -inf
    %644 = vmax.xlane.f32.xlu0 %v643
    %v645 = vpop.xlane.xlu0 %644
    %v646 = vsel %vm639, %v633, -inf
    %647 = vmax.xlane.f32.xlu0 %v646
    %v648 = vpop.xlane.xlu0 %647
    %v649 = vsel %vm639, %v634, -inf
    %650 = vmax.xlane.f32.xlu0 %v649
    %v651 = vpop.xlane.xlu0 %650
    %v652 = vsel %vm639, %v635, -inf
    %653 = vmax.xlane.f32.xlu0 %v652
    %v654 = vpop.xlane.xlu0 %653
    %v655 = vsel %vm639, %v636, -inf
    %656 = vmax.xlane.f32.xlu0 %v655
    %v657 = vpop.xlane.xlu0 %656
    %v658 = vsel %vm639, %v637, -inf
    %659 = vmax.xlane.f32.xlu0 %v658
    %v660 = vpop.xlane.xlu0 %659
    %v661 = vsel %vm639, %v638, -inf
    %662 = vmax.xlane.f32.xlu0 %v661
    %v663 = vpop.xlane.xlu0 %662
    %v664 = vsub.f32 %v631, %v642
    %v665 = vsub.f32 %v632, %v645
    %v666 = vsub.f32 %v633, %v648
    %v667 = vsub.f32 %v634, %v651
    %v668 = vsub.f32 %v635, %v654
    %v669 = vsub.f32 %v636, %v657
    %v670 = vsub.f32 %v637, %v660
    %v671 = vsub.f32 %v638, %v663
    %v672 = vmul.f32 %v664, 1.442695
    %v673 = vpow.pop %v672
    %v674 = vmul.f32 %v665, 1.442695
    %v675 = vpow.pop %v674
    %v676 = vmul.f32 %v666, 1.442695
    %v677 = vpow.pop %v676
    %v678 = vmul.f32 %v667, 1.442695
    %v679 = vpow.pop %v678
    %v680 = vmul.f32 %v668, 1.442695
    %v681 = vpow.pop %v680
    %v682 = vmul.f32 %v669, 1.442695
    %v683 = vpow.pop %v682
    %v684 = vmul.f32 %v670, 1.442695
    %v685 = vpow.pop %v684
    %v686 = vmul.f32 %v671, 1.442695
    %v687 = vpow.pop %v686
    %v688 = vsel %vm639, %v673, 0.0
    %689 = vadd.xlane.f32.xlu0 %v688
    %v690 = vpop.xlane.xlu0 %689
    %v691 = vsel %vm639, %v675, 0.0
    %692 = vadd.xlane.f32.xlu0 %v691
    %v693 = vpop.xlane.xlu0 %692
    %v694 = vsel %vm639, %v677, 0.0
    %695 = vadd.xlane.f32.xlu0 %v694
    %v696 = vpop.xlane.xlu0 %695
    %v697 = vsel %vm639, %v679, 0.0
    %698 = vadd.xlane.f32.xlu0 %v697
    %v699 = vpop.xlane.xlu0 %698
    %v700 = vsel %vm639, %v681, 0.0
    %701 = vadd.xlane.f32.xlu0 %v700
    %v702 = vpop.xlane.xlu0 %701
    %v703 = vsel %vm639, %v683, 0.0
    %704 = vadd.xlane.f32.xlu0 %v703
    %v705 = vpop.xlane.xlu0 %704
    %v706 = vsel %vm639, %v685, 0.0
    %707 = vadd.xlane.f32.xlu0 %v706
    %v708 = vpop.xlane.xlu0 %707
    %v709 = vsel %vm639, %v687, 0.0
    %710 = vadd.xlane.f32.xlu0 %v709
    %v711 = vpop.xlane.xlu0 %710
    %v712 = vrcp.pop %v690
    %v713 = vrcp.pop %v693
    %v714 = vrcp.pop %v696
    %v715 = vrcp.pop %v699
    %v716 = vrcp.pop %v702
    %v717 = vrcp.pop %v705
    %v718 = vrcp.pop %v708
    %v719 = vrcp.pop %v711
    %v720 = vmul.f32 %v673, %v712
    %v721 = vmul.f32 %v675, %v713
    %v722 = vmul.f32 %v677, %v714
    %v723 = vmul.f32 %v679, %v715
    %v724 = vmul.f32 %v681, %v716
    %v725 = vmul.f32 %v683, %v717
    %v726 = vmul.f32 %v685, %v718
    %v727 = vmul.f32 %v687, %v719
    %v728 = vpack.c.bf16 %v721, %v720
    %v729 = vpack.c.bf16 %v723, %v722
    %v730 = vpack.c.bf16 %v725, %v724
    %v731 = vpack.c.bf16 %v727, %v726
    %v733 = vsel %vm639, %v728, 0
    %v736 = vsel %vm639, %v729, 0
    %v739 = vsel %vm639, %v730, 0
    %v742 = vsel %vm639, %v731, 0
    %744 = vmatprep.subr.bf16.mxu0 0
    %745 = vmatpush1.bf16.msra.mxu0 0
    %746 = vmatprep.subr.bf16.mxu0 0
    %747 = vmatpush1.bf16.msra.mxu0 0
    %748 = vmatprep.subr.bf16.mxu0 0
    %749 = vmatpush1.bf16.msra.mxu0 0
    %750 = vmatprep.subr.bf16.mxu0 0
    %751 = vmatpush1.bf16.msra.mxu0 0
    %752 = vmatprep.subr.bf16.mxu0 0
    %753 = vmatpush1.bf16.msra.mxu0 %v343
    %754 = vmatprep.subr.bf16.mxu0 0
    %755 = vmatpush1.bf16.msra.mxu0 %v341
    %756 = vmatprep.subr.bf16.mxu0 0
    %757 = vmatpush1.bf16.msra.mxu0 %v339
    %758 = vmatprep.subr.bf16.mxu0 0
    %759 = vmatpush1.bf16.msra.mxu0 %v337
    %760 = vmatprep.subr.bf16.mxu0 0
    %761 = vmatpush2.bf16.msra.mxu0 0
    %762 = vmatprep.subr.bf16.mxu0 0
    %763 = vmatpush2.bf16.msra.mxu0 0
    %764 = vmatprep.subr.bf16.mxu0 0
    %765 = vmatpush2.bf16.msra.mxu0 0
    %766 = vmatprep.subr.bf16.mxu0 0
    %767 = vmatpush2.bf16.msra.mxu0 0
    %768 = vmatprep.subr.bf16.mxu0 0
    %769 = vmatpush2.bf16.msra.mxu0 0
    %770 = vmatprep.subr.bf16.mxu0 0
    %771 = vmatpush2.bf16.msra.mxu0 0
    %772 = vmatprep.subr.bf16.mxu0 0
    %773 = vmatpush2.bf16.msra.mxu0 0
    %774 = vmatprep.subr.bf16.mxu0 0
    %775 = vmatpush2.bf16.msra.mxu0 0
    %776 = vmatprep.mubr.bf16.mxu0 0
    %777 = vmatmul.mubr.bf16.gmra.mxu0 %v733
    %v778 = vpop.f32.mrf.mxu0
    %v779 = vadd.f32 0.0, %v778
    %v780 = vpop.f32.mrf.mxu0
    %v781 = vpop.f32.mrf.mxu0
    %v782 = vadd.f32 0.0, %v781
    %v783 = vpop.f32.mrf.mxu0
    %784 = vmatprep.mubr.bf16.mxu0 0
    %785 = vmatmul.mubr.bf16.gmra.mxu0 %v736
    %v786 = vpop.f32.mrf.mxu0
    %v787 = vadd.f32 0.0, %v786
    %v788 = vpop.f32.mrf.mxu0
    %v789 = vpop.f32.mrf.mxu0
    %v790 = vadd.f32 0.0, %v789
    %v791 = vpop.f32.mrf.mxu0
    %792 = vmatprep.mubr.bf16.mxu0 0
    %793 = vmatmul.mubr.bf16.gmra.mxu0 %v739
    %v794 = vpop.f32.mrf.mxu0
    %v795 = vadd.f32 0.0, %v794
    %v796 = vpop.f32.mrf.mxu0
    %v797 = vpop.f32.mrf.mxu0
    %v798 = vadd.f32 0.0, %v797
    %v799 = vpop.f32.mrf.mxu0
    %800 = vmatprep.mubr.bf16.mxu0 0
    %801 = vmatmul.mubr.bf16.gmra.mxu0 %v742
    %v802 = vpop.f32.mrf.mxu0
    %v803 = vadd.f32 0.0, %v802
    %v804 = vpop.f32.mrf.mxu0
    %v805 = vpop.f32.mrf.mxu0
    %v806 = vadd.f32 0.0, %v805
    %v807 = vpop.f32.mrf.mxu0
    %808 = vdwg.mxu0
    %809 = vst.msk [vmem:[#allocation2] sm:$0xff] %vm146, %v779
    %810 = vst.msk [vmem:[#allocation2 + $0x10] sm:$0xff] %vm146, %v782
    %811 = vst.msk [vmem:[#allocation2 + $0x20] sm:$0xff] %vm146, %v787
    %812 = vst.msk [vmem:[#allocation2 + $0x30] sm:$0xff] %vm146, %v790
    %813 = vst.msk [vmem:[#allocation2 + $0x40] sm:$0xff] %vm146, %v795
    %814 = vst.msk [vmem:[#allocation2 + $0x50] sm:$0xff] %vm146, %v798
    %815 = vst.msk [vmem:[#allocation2 + $0x60] sm:$0xff] %vm146, %v803
    %816 = vst.msk [vmem:[#allocation2 + $0x70] sm:$0xff] %vm146, %v806
    %825 = vrot.lane.b32.xlu0 %v477, 127
    %v826 = vpop.permute.xlu0 %825
    %827 = vrot.lane.b32.xlu0 %v480, 127
    %v828 = vpop.permute.xlu0 %827
    %829 = vrot.lane.b32.xlu0 %v485, 127
    %v830 = vpop.permute.xlu0 %829
    %831 = vrot.lane.b32.xlu0 %v488, 127
    %v832 = vpop.permute.xlu0 %831
    %833 = vrot.lane.b32.xlu0 %v493, 127
    %v834 = vpop.permute.xlu0 %833
    %835 = vrot.lane.b32.xlu0 %v496, 127
    %v836 = vpop.permute.xlu0 %835
    %837 = vrot.lane.b32.xlu0 %v501, 127
    %v838 = vpop.permute.xlu0 %837
    %839 = vrot.lane.b32.xlu0 %v504, 127
    %v840 = vpop.permute.xlu0 %839
    %849 = vxpose.xlu0.b32.start [1/16] %v826, 128
    %850 = vxpose.xlu0.b32.cont [2/16] %v828, 128
    %851 = vxpose.xlu0.b32.cont [3/16] %v830, 128
    %852 = vxpose.xlu0.b32.cont [4/16] %v832, 128
    %853 = vxpose.xlu0.b32.cont [5/16] %v834, 128
    %854 = vxpose.xlu0.b32.cont [6/16] %v836, 128
    %855 = vxpose.xlu0.b32.cont [7/16] %v838, 128
    %856 = vxpose.xlu0.b32.cont [8/16] %v840, 128
    %857 = vxpose.xlu0.b32.cont [9/16] 0.0, 128
    %858 = vxpose.xlu0.b32.cont [10/16] 0.0, 128
    %859 = vxpose.xlu0.b32.cont [11/16] 0.0, 128
    %860 = vxpose.xlu0.b32.cont [12/16] 0.0, 128
    %861 = vxpose.xlu0.b32.cont [13/16] 0.0, 128
    %862 = vxpose.xlu0.b32.cont [14/16] 0.0, 128
    %863 = vxpose.xlu0.b32.cont [15/16] 0.0, 128
    %864 = vxpose.xlu0.b32.end [16/16] 0.0, 128
    %v865 = vpop.trf.xlu0
    %v866 = vpop.trf.xlu0
    %v867 = vpop.trf.xlu0
    %v868 = vpop.trf.xlu0
    %v869 = vpop.trf.xlu0
    %v870 = vpop.trf.xlu0
    %v871 = vpop.trf.xlu0
    %v872 = vpop.trf.xlu0
    %v873 = vpop.trf.xlu0
    %v874 = vpop.trf.xlu0
    %v875 = vpop.trf.xlu0
    %v876 = vpop.trf.xlu0
    %v877 = vpop.trf.xlu0
    %v878 = vpop.trf.xlu0
    %v879 = vpop.trf.xlu0
    %v880 = vpop.trf.xlu0
    %881 = vset.pattern.permute.xlu0 1
    %882 = vperm.xlu0 %881, %v396
    %v883 = vpop.permute.xlu0 %882
    %885 = vset.pattern.permute.xlu0 1
    %886 = vperm.xlu0 %885, %v399
    %v887 = vpop.permute.xlu0 %886
    %889 = vset.pattern.permute.xlu0 1
    %890 = vperm.xlu0 %889, %v404
    %v891 = vpop.permute.xlu0 %890
    %893 = vset.pattern.permute.xlu0 1
    %894 = vperm.xlu0 %893, %v407
    %v895 = vpop.permute.xlu0 %894
    %897 = vset.pattern.permute.xlu0 1
    %898 = vperm.xlu0 %897, %v412
    %v899 = vpop.permute.xlu0 %898
    %901 = vset.pattern.permute.xlu0 1
    %902 = vperm.xlu0 %901, %v415
    %v903 = vpop.permute.xlu0 %902
    %905 = vset.pattern.permute.xlu0 1
    %906 = vperm.xlu0 %905, %v420
    %v907 = vpop.permute.xlu0 %906
    %909 = vset.pattern.permute.xlu0 1
    %910 = vperm.xlu0 %909, %v423
    %v911 = vpop.permute.xlu0 %910
    %v913 = vlaneseq
    %v914 = vshrl.u32 %v913, 7
    %v915 = vsub.s32 0, %v914
    %v916 = vrot.slane %v865, %v915
    %v917 = vadd.f32 %v883, %v916
    %v918 = vadd.f32 %v887, %v916
    %v919 = vadd.f32 %v891, %v916
    %v920 = vadd.f32 %v895, %v916
    %v921 = vadd.f32 %v899, %v916
    %v922 = vadd.f32 %v903, %v916
    %v923 = vadd.f32 %v907, %v916
    %v924 = vadd.f32 %v911, %v916
    %vm925 = vcmp.gt.f32.partialorder %v917, 0.0
    %vm926 = vcmp.gt.f32.partialorder %v918, 0.0
    %vm927 = vcmp.gt.f32.partialorder %v919, 0.0
    %vm928 = vcmp.gt.f32.partialorder %v920, 0.0
    %vm929 = vcmp.gt.f32.partialorder %v921, 0.0
    %vm930 = vcmp.gt.f32.partialorder %v922, 0.0
    %vm931 = vcmp.gt.f32.partialorder %v923, 0.0
    %vm932 = vcmp.gt.f32.partialorder %v924, 0.0
    %v933 = vmul.f32 %v917, 0.2
    %v934 = vmul.f32 %v918, 0.2
    %v935 = vmul.f32 %v919, 0.2
    %v936 = vmul.f32 %v920, 0.2
    %v937 = vmul.f32 %v921, 0.2
    %v938 = vmul.f32 %v922, 0.2
    %v939 = vmul.f32 %v923, 0.2
    %v940 = vmul.f32 %v924, 0.2
    %v941 = vsel %vm925, %v917, %v933
    %v942 = vsel %vm926, %v918, %v934
    %v943 = vsel %vm927, %v919, %v935
    %v944 = vsel %vm928, %v920, %v936
    %v945 = vsel %vm929, %v921, %v937
    %v946 = vsel %vm930, %v922, %v938
    %v947 = vsel %vm931, %v923, %v939
    %v948 = vsel %vm932, %v924, %v940
    %v949 = vadd.f32 %v941, %v515
    %v950 = vadd.f32 %v942, %v516
    %v951 = vadd.f32 %v943, %v517
    %v952 = vadd.f32 %v944, %v518
    %v953 = vadd.f32 %v945, %v519
    %v954 = vadd.f32 %v946, %v520
    %v955 = vadd.f32 %v947, %v521
    %v956 = vadd.f32 %v948, %v522
    %v957 = vsel %vm639, %v949, -inf
    %958 = vmax.xlane.f32.xlu0 %v957
    %v959 = vpop.xlane.xlu0 %958
    %v960 = vsel %vm639, %v950, -inf
    %961 = vmax.xlane.f32.xlu0 %v960
    %v962 = vpop.xlane.xlu0 %961
    %v963 = vsel %vm639, %v951, -inf
    %964 = vmax.xlane.f32.xlu0 %v963
    %v965 = vpop.xlane.xlu0 %964
    %v966 = vsel %vm639, %v952, -inf
    %967 = vmax.xlane.f32.xlu0 %v966
    %v968 = vpop.xlane.xlu0 %967
    %v969 = vsel %vm639, %v953, -inf
    %970 = vmax.xlane.f32.xlu0 %v969
    %v971 = vpop.xlane.xlu0 %970
    %v972 = vsel %vm639, %v954, -inf
    %973 = vmax.xlane.f32.xlu0 %v972
    %v974 = vpop.xlane.xlu0 %973
    %v975 = vsel %vm639, %v955, -inf
    %976 = vmax.xlane.f32.xlu0 %v975
    %v977 = vpop.xlane.xlu0 %976
    %v978 = vsel %vm639, %v956, -inf
    %979 = vmax.xlane.f32.xlu0 %v978
    %v980 = vpop.xlane.xlu0 %979
    %v981 = vsub.f32 %v949, %v959
    %v982 = vsub.f32 %v950, %v962
    %v983 = vsub.f32 %v951, %v965
    %v984 = vsub.f32 %v952, %v968
    %v985 = vsub.f32 %v953, %v971
    %v986 = vsub.f32 %v954, %v974
    %v987 = vsub.f32 %v955, %v977
    %v988 = vsub.f32 %v956, %v980
    %v989 = vmul.f32 %v981, 1.442695
    %v990 = vpow.pop %v989
    %v991 = vmul.f32 %v982, 1.442695
    %v992 = vpow.pop %v991
    %v993 = vmul.f32 %v983, 1.442695
    %v994 = vpow.pop %v993
    %v995 = vmul.f32 %v984, 1.442695
    %v996 = vpow.pop %v995
    %v997 = vmul.f32 %v985, 1.442695
    %v998 = vpow.pop %v997
    %v999 = vmul.f32 %v986, 1.442695
    %v1000 = vpow.pop %v999
    %v1001 = vmul.f32 %v987, 1.442695
    %v1002 = vpow.pop %v1001
    %v1003 = vmul.f32 %v988, 1.442695
    %v1004 = vpow.pop %v1003
    %v1005 = vsel %vm639, %v990, 0.0
    %1006 = vadd.xlane.f32.xlu0 %v1005
    %v1007 = vpop.xlane.xlu0 %1006
    %v1008 = vsel %vm639, %v992, 0.0
    %1009 = vadd.xlane.f32.xlu0 %v1008
    %v1010 = vpop.xlane.xlu0 %1009
    %v1011 = vsel %vm639, %v994, 0.0
    %1012 = vadd.xlane.f32.xlu0 %v1011
    %v1013 = vpop.xlane.xlu0 %1012
    %v1014 = vsel %vm639, %v996, 0.0
    %1015 = vadd.xlane.f32.xlu0 %v1014
    %v1016 = vpop.xlane.xlu0 %1015
    %v1017 = vsel %vm639, %v998, 0.0
    %1018 = vadd.xlane.f32.xlu0 %v1017
    %v1019 = vpop.xlane.xlu0 %1018
    %v1020 = vsel %vm639, %v1000, 0.0
    %1021 = vadd.xlane.f32.xlu0 %v1020
    %v1022 = vpop.xlane.xlu0 %1021
    %v1023 = vsel %vm639, %v1002, 0.0
    %1024 = vadd.xlane.f32.xlu0 %v1023
    %v1025 = vpop.xlane.xlu0 %1024
    %v1026 = vsel %vm639, %v1004, 0.0
    %1027 = vadd.xlane.f32.xlu0 %v1026
    %v1028 = vpop.xlane.xlu0 %1027
    %v1029 = vrcp.pop %v1007
    %v1030 = vrcp.pop %v1010
    %v1031 = vrcp.pop %v1013
    %v1032 = vrcp.pop %v1016
    %v1033 = vrcp.pop %v1019
    %v1034 = vrcp.pop %v1022
    %v1035 = vrcp.pop %v1025
    %v1036 = vrcp.pop %v1028
    %v1037 = vmul.f32 %v990, %v1029
    %v1038 = vmul.f32 %v992, %v1030
    %v1039 = vmul.f32 %v994, %v1031
    %v1040 = vmul.f32 %v996, %v1032
    %v1041 = vmul.f32 %v998, %v1033
    %v1042 = vmul.f32 %v1000, %v1034
    %v1043 = vmul.f32 %v1002, %v1035
    %v1044 = vmul.f32 %v1004, %v1036
    %v1045 = vpack.c.bf16 %v1038, %v1037
    %v1046 = vpack.c.bf16 %v1040, %v1039
    %v1047 = vpack.c.bf16 %v1042, %v1041
    %v1048 = vpack.c.bf16 %v1044, %v1043
    %1053 = vrot.lane.b32.xlu0 %v337, 96
    %v1054 = vpop.permute.xlu0 %1053
    %1055 = vrot.lane.b32.xlu0 %v339, 96
    %v1056 = vpop.permute.xlu0 %1055
    %1057 = vrot.lane.b32.xlu0 %v341, 96
    %v1058 = vpop.permute.xlu0 %1057
    %1059 = vrot.lane.b32.xlu0 %v343, 96
    %v1060 = vpop.permute.xlu0 %1059
    %v1066 = vsel %vm639, %v1045, 0
    %v1069 = vsel %vm639, %v1046, 0
    %v1072 = vsel %vm639, %v1047, 0
    %v1075 = vsel %vm639, %v1048, 0
    %1077 = vmatprep.subr.bf16.mxu0 0
    %1078 = vmatpush1.bf16.msra.mxu0 0
    %1079 = vmatprep.subr.bf16.mxu0 0
    %1080 = vmatpush1.bf16.msra.mxu0 0
    %1081 = vmatprep.subr.bf16.mxu0 0
    %1082 = vmatpush1.bf16.msra.mxu0 0
    %1083 = vmatprep.subr.bf16.mxu0 0
    %1084 = vmatpush1.bf16.msra.mxu0 0
    %1085 = vmatprep.subr.bf16.mxu0 0
    %1086 = vmatpush1.bf16.msra.mxu0 %v1060
    %1087 = vmatprep.subr.bf16.mxu0 0
    %1088 = vmatpush1.bf16.msra.mxu0 %v1058
    %1089 = vmatprep.subr.bf16.mxu0 0
    %1090 = vmatpush1.bf16.msra.mxu0 %v1056
    %1091 = vmatprep.subr.bf16.mxu0 0
    %1092 = vmatpush1.bf16.msra.mxu0 %v1054
    %1093 = vmatprep.subr.bf16.mxu0 0
    %1094 = vmatpush2.bf16.msra.mxu0 0
    %1095 = vmatprep.subr.bf16.mxu0 0
    %1096 = vmatpush2.bf16.msra.mxu0 0
    %1097 = vmatprep.subr.bf16.mxu0 0
    %1098 = vmatpush2.bf16.msra.mxu0 0
    %1099 = vmatprep.subr.bf16.mxu0 0
    %1100 = vmatpush2.bf16.msra.mxu0 0
    %1101 = vmatprep.subr.bf16.mxu0 0
    %1102 = vmatpush2.bf16.msra.mxu0 0
    %1103 = vmatprep.subr.bf16.mxu0 0
    %1104 = vmatpush2.bf16.msra.mxu0 0
    %1105 = vmatprep.subr.bf16.mxu0 0
    %1106 = vmatpush2.bf16.msra.mxu0 0
    %1107 = vmatprep.subr.bf16.mxu0 0
    %1108 = vmatpush2.bf16.msra.mxu0 0
    %1109 = vmatprep.mubr.bf16.mxu0 0
    %1110 = vmatmul.mubr.bf16.gmra.mxu0 %v1066
    %v1111 = vpop.f32.mrf.mxu0
    %v1112 = vadd.f32 0.0, %v1111
    %v1113 = vpop.f32.mrf.mxu0
    %v1114 = vpop.f32.mrf.mxu0
    %v1115 = vadd.f32 0.0, %v1114
    %v1116 = vpop.f32.mrf.mxu0
    %1117 = vmatprep.mubr.bf16.mxu0 0
    %1118 = vmatmul.mubr.bf16.gmra.mxu0 %v1069
    %v1119 = vpop.f32.mrf.mxu0
    %v1120 = vadd.f32 0.0, %v1119
    %v1121 = vpop.f32.mrf.mxu0
    %v1122 = vpop.f32.mrf.mxu0
    %v1123 = vadd.f32 0.0, %v1122
    %v1124 = vpop.f32.mrf.mxu0
    %1125 = vmatprep.mubr.bf16.mxu0 0
    %1126 = vmatmul.mubr.bf16.gmra.mxu0 %v1072
    %v1127 = vpop.f32.mrf.mxu0
    %v1128 = vadd.f32 0.0, %v1127
    %v1129 = vpop.f32.mrf.mxu0
    %v1130 = vpop.f32.mrf.mxu0
    %v1131 = vadd.f32 0.0, %v1130
    %v1132 = vpop.f32.mrf.mxu0
    %1133 = vmatprep.mubr.bf16.mxu0 0
    %1134 = vmatmul.mubr.bf16.gmra.mxu0 %v1075
    %v1135 = vpop.f32.mrf.mxu0
    %v1136 = vadd.f32 0.0, %v1135
    %v1137 = vpop.f32.mrf.mxu0
    %v1138 = vpop.f32.mrf.mxu0
    %v1139 = vadd.f32 0.0, %v1138
    %v1140 = vpop.f32.mrf.mxu0
    %1141 = vdwg.mxu0
    %1150 = vrot.lane.b32.xlu0 %v1112, 32
    %v1151 = vpop.permute.xlu0 %1150
    %1152 = vrot.lane.b32.xlu0 %v1115, 32
    %v1153 = vpop.permute.xlu0 %1152
    %1154 = vrot.lane.b32.xlu0 %v1120, 32
    %v1155 = vpop.permute.xlu0 %1154
    %1156 = vrot.lane.b32.xlu0 %v1123, 32
    %v1157 = vpop.permute.xlu0 %1156
    %1158 = vrot.lane.b32.xlu0 %v1128, 32
    %v1159 = vpop.permute.xlu0 %1158
    %1160 = vrot.lane.b32.xlu0 %v1131, 32
    %v1161 = vpop.permute.xlu0 %1160
    %1162 = vrot.lane.b32.xlu0 %v1136, 32
    %v1163 = vpop.permute.xlu0 %1162
    %1164 = vrot.lane.b32.xlu0 %v1139, 32
    %v1165 = vpop.permute.xlu0 %1164
    %vm1174 = vcmask 523520
    %1175 = vst.msk [vmem:[#allocation2] sm:$0xff] %vm1174, %v1151
    %1176 = vst.msk [vmem:[#allocation2 + $0x10] sm:$0xff] %vm1174, %v1153
    %1177 = vst.msk [vmem:[#allocation2 + $0x20] sm:$0xff] %vm1174, %v1155
    %1178 = vst.msk [vmem:[#allocation2 + $0x30] sm:$0xff] %vm1174, %v1157
    %1179 = vst.msk [vmem:[#allocation2 + $0x40] sm:$0xff] %vm1174, %v1159
    %1180 = vst.msk [vmem:[#allocation2 + $0x50] sm:$0xff] %vm1174, %v1161
    %1181 = vst.msk [vmem:[#allocation2 + $0x60] sm:$0xff] %vm1174, %v1163
    %1182 = vst.msk [vmem:[#allocation2 + $0x70] sm:$0xff] %vm1174, %v1165
    %1183 = vrot.lane.b32.xlu0 %v477, 126
    %v1184 = vpop.permute.xlu0 %1183
    %1185 = vrot.lane.b32.xlu0 %v480, 126
    %v1186 = vpop.permute.xlu0 %1185
    %1187 = vrot.lane.b32.xlu0 %v485, 126
    %v1188 = vpop.permute.xlu0 %1187
    %1189 = vrot.lane.b32.xlu0 %v488, 126
    %v1190 = vpop.permute.xlu0 %1189
    %1191 = vrot.lane.b32.xlu0 %v493, 126
    %v1192 = vpop.permute.xlu0 %1191
    %1193 = vrot.lane.b32.xlu0 %v496, 126
    %v1194 = vpop.permute.xlu0 %1193
    %1195 = vrot.lane.b32.xlu0 %v501, 126
    %v1196 = vpop.permute.xlu0 %1195
    %1197 = vrot.lane.b32.xlu0 %v504, 126
    %v1198 = vpop.permute.xlu0 %1197
    %1207 = vxpose.xlu0.b32.start [1/16] %v1184, 128
    %1208 = vxpose.xlu0.b32.cont [2/16] %v1186, 128
    %1209 = vxpose.xlu0.b32.cont [3/16] %v1188, 128
    %1210 = vxpose.xlu0.b32.cont [4/16] %v1190, 128
    %1211 = vxpose.xlu0.b32.cont [5/16] %v1192, 128
    %1212 = vxpose.xlu0.b32.cont [6/16] %v1194, 128
    %1213 = vxpose.xlu0.b32.cont [7/16] %v1196, 128
    %1214 = vxpose.xlu0.b32.cont [8/16] %v1198, 128
    %1215 = vxpose.xlu0.b32.cont [9/16] 0.0, 128
    %1216 = vxpose.xlu0.b32.cont [10/16] 0.0, 128
    %1217 = vxpose.xlu0.b32.cont [11/16] 0.0, 128
    %1218 = vxpose.xlu0.b32.cont [12/16] 0.0, 128
    %1219 = vxpose.xlu0.b32.cont [13/16] 0.0, 128
    %1220 = vxpose.xlu0.b32.cont [14/16] 0.0, 128
    %1221 = vxpose.xlu0.b32.cont [15/16] 0.0, 128
    %1222 = vxpose.xlu0.b32.end [16/16] 0.0, 128
    %v1223 = vpop.trf.xlu0
    %v1224 = vpop.trf.xlu0
    %v1225 = vpop.trf.xlu0
    %v1226 = vpop.trf.xlu0
    %v1227 = vpop.trf.xlu0
    %v1228 = vpop.trf.xlu0
    %v1229 = vpop.trf.xlu0
    %v1230 = vpop.trf.xlu0
    %v1231 = vpop.trf.xlu0
    %v1232 = vpop.trf.xlu0
    %v1233 = vpop.trf.xlu0
    %v1234 = vpop.trf.xlu0
    %v1235 = vpop.trf.xlu0
    %v1236 = vpop.trf.xlu0
    %v1237 = vpop.trf.xlu0
    %v1238 = vpop.trf.xlu0
    %1239 = vset.pattern.permute.xlu0 2
    %1240 = vperm.xlu0 %1239, %v396
    %v1241 = vpop.permute.xlu0 %1240
    %1243 = vset.pattern.permute.xlu0 2
    %1244 = vperm.xlu0 %1243, %v399
    %v1245 = vpop.permute.xlu0 %1244
    %1247 = vset.pattern.permute.xlu0 2
    %1248 = vperm.xlu0 %1247, %v404
    %v1249 = vpop.permute.xlu0 %1248
    %1251 = vset.pattern.permute.xlu0 2
    %1252 = vperm.xlu0 %1251, %v407
    %v1253 = vpop.permute.xlu0 %1252
    %1255 = vset.pattern.permute.xlu0 2
    %1256 = vperm.xlu0 %1255, %v412
    %v1257 = vpop.permute.xlu0 %1256
    %1259 = vset.pattern.permute.xlu0 2
    %1260 = vperm.xlu0 %1259, %v415
    %v1261 = vpop.permute.xlu0 %1260
    %1263 = vset.pattern.permute.xlu0 2
    %1264 = vperm.xlu0 %1263, %v420
    %v1265 = vpop.permute.xlu0 %1264
    %1267 = vset.pattern.permute.xlu0 2
    %1268 = vperm.xlu0 %1267, %v423
    %v1269 = vpop.permute.xlu0 %1268
    %v1271 = vlaneseq
    %v1272 = vshrl.u32 %v1271, 7
    %v1273 = vsub.s32 0, %v1272
    %v1274 = vrot.slane %v1223, %v1273
    %v1275 = vadd.f32 %v1241, %v1274
    %v1276 = vadd.f32 %v1245, %v1274
    %v1277 = vadd.f32 %v1249, %v1274
    %v1278 = vadd.f32 %v1253, %v1274
    %v1279 = vadd.f32 %v1257, %v1274
    %v1280 = vadd.f32 %v1261, %v1274
    %v1281 = vadd.f32 %v1265, %v1274
    %v1282 = vadd.f32 %v1269, %v1274
    %vm1283 = vcmp.gt.f32.partialorder %v1275, 0.0
    %vm1284 = vcmp.gt.f32.partialorder %v1276, 0.0
    %vm1285 = vcmp.gt.f32.partialorder %v1277, 0.0
    %vm1286 = vcmp.gt.f32.partialorder %v1278, 0.0
    %vm1287 = vcmp.gt.f32.partialorder %v1279, 0.0
    %vm1288 = vcmp.gt.f32.partialorder %v1280, 0.0
    %vm1289 = vcmp.gt.f32.partialorder %v1281, 0.0
    %vm1290 = vcmp.gt.f32.partialorder %v1282, 0.0
    %v1291 = vmul.f32 %v1275, 0.2
    %v1292 = vmul.f32 %v1276, 0.2
    %v1293 = vmul.f32 %v1277, 0.2
    %v1294 = vmul.f32 %v1278, 0.2
    %v1295 = vmul.f32 %v1279, 0.2
    %v1296 = vmul.f32 %v1280, 0.2
    %v1297 = vmul.f32 %v1281, 0.2
    %v1298 = vmul.f32 %v1282, 0.2
    %v1299 = vsel %vm1283, %v1275, %v1291
    %v1300 = vsel %vm1284, %v1276, %v1292
    %v1301 = vsel %vm1285, %v1277, %v1293
    %v1302 = vsel %vm1286, %v1278, %v1294
    %v1303 = vsel %vm1287, %v1279, %v1295
    %v1304 = vsel %vm1288, %v1280, %v1296
    %v1305 = vsel %vm1289, %v1281, %v1297
    %v1306 = vsel %vm1290, %v1282, %v1298
    %v1307 = vadd.f32 %v1299, %v515
    %v1308 = vadd.f32 %v1300, %v516
    %v1309 = vadd.f32 %v1301, %v517
    %v1310 = vadd.f32 %v1302, %v518
    %v1311 = vadd.f32 %v1303, %v519
    %v1312 = vadd.f32 %v1304, %v520
    %v1313 = vadd.f32 %v1305, %v521
    %v1314 = vadd.f32 %v1306, %v522
    %v1315 = vsel %vm639, %v1307, -inf
    %1316 = vmax.xlane.f32.xlu0 %v1315
    %v1317 = vpop.xlane.xlu0 %1316
    %v1318 = vsel %vm639, %v1308, -inf
    %1319 = vmax.xlane.f32.xlu0 %v1318
    %v1320 = vpop.xlane.xlu0 %1319
    %v1321 = vsel %vm639, %v1309, -inf
    %1322 = vmax.xlane.f32.xlu0 %v1321
    %v1323 = vpop.xlane.xlu0 %1322
    %v1324 = vsel %vm639, %v1310, -inf
    %1325 = vmax.xlane.f32.xlu0 %v1324
    %v1326 = vpop.xlane.xlu0 %1325
    %v1327 = vsel %vm639, %v1311, -inf
    %1328 = vmax.xlane.f32.xlu0 %v1327
    %v1329 = vpop.xlane.xlu0 %1328
    %v1330 = vsel %vm639, %v1312, -inf
    %1331 = vmax.xlane.f32.xlu0 %v1330
    %v1332 = vpop.xlane.xlu0 %1331
    %v1333 = vsel %vm639, %v1313, -inf
    %1334 = vmax.xlane.f32.xlu0 %v1333
    %v1335 = vpop.xlane.xlu0 %1334
    %v1336 = vsel %vm639, %v1314, -inf
    %1337 = vmax.xlane.f32.xlu0 %v1336
    %v1338 = vpop.xlane.xlu0 %1337
    %v1339 = vsub.f32 %v1307, %v1317
    %v1340 = vsub.f32 %v1308, %v1320
    %v1341 = vsub.f32 %v1309, %v1323
    %v1342 = vsub.f32 %v1310, %v1326
    %v1343 = vsub.f32 %v1311, %v1329
    %v1344 = vsub.f32 %v1312, %v1332
    %v1345 = vsub.f32 %v1313, %v1335
    %v1346 = vsub.f32 %v1314, %v1338
    %v1347 = vmul.f32 %v1339, 1.442695
    %v1348 = vpow.pop %v1347
    %v1349 = vmul.f32 %v1340, 1.442695
    %v1350 = vpow.pop %v1349
    %v1351 = vmul.f32 %v1341, 1.442695
    %v1352 = vpow.pop %v1351
    %v1353 = vmul.f32 %v1342, 1.442695
    %v1354 = vpow.pop %v1353
    %v1355 = vmul.f32 %v1343, 1.442695
    %v1356 = vpow.pop %v1355
    %v1357 = vmul.f32 %v1344, 1.442695
    %v1358 = vpow.pop %v1357
    %v1359 = vmul.f32 %v1345, 1.442695
    %v1360 = vpow.pop %v1359
    %v1361 = vmul.f32 %v1346, 1.442695
    %v1362 = vpow.pop %v1361
    %v1363 = vsel %vm639, %v1348, 0.0
    %1364 = vadd.xlane.f32.xlu0 %v1363
    %v1365 = vpop.xlane.xlu0 %1364
    %v1366 = vsel %vm639, %v1350, 0.0
    %1367 = vadd.xlane.f32.xlu0 %v1366
    %v1368 = vpop.xlane.xlu0 %1367
    %v1369 = vsel %vm639, %v1352, 0.0
    %1370 = vadd.xlane.f32.xlu0 %v1369
    %v1371 = vpop.xlane.xlu0 %1370
    %v1372 = vsel %vm639, %v1354, 0.0
    %1373 = vadd.xlane.f32.xlu0 %v1372
    %v1374 = vpop.xlane.xlu0 %1373
    %v1375 = vsel %vm639, %v1356, 0.0
    %1376 = vadd.xlane.f32.xlu0 %v1375
    %v1377 = vpop.xlane.xlu0 %1376
    %v1378 = vsel %vm639, %v1358, 0.0
    %1379 = vadd.xlane.f32.xlu0 %v1378
    %v1380 = vpop.xlane.xlu0 %1379
    %v1381 = vsel %vm639, %v1360, 0.0
    %1382 = vadd.xlane.f32.xlu0 %v1381
    %v1383 = vpop.xlane.xlu0 %1382
    %v1384 = vsel %vm639, %v1362, 0.0
    %1385 = vadd.xlane.f32.xlu0 %v1384
    %v1386 = vpop.xlane.xlu0 %1385
    %v1387 = vrcp.pop %v1365
    %v1388 = vrcp.pop %v1368
    %v1389 = vrcp.pop %v1371
    %v1390 = vrcp.pop %v1374
    %v1391 = vrcp.pop %v1377
    %v1392 = vrcp.pop %v1380
    %v1393 = vrcp.pop %v1383
    %v1394 = vrcp.pop %v1386
    %v1395 = vmul.f32 %v1348, %v1387
    %v1396 = vmul.f32 %v1350, %v1388
    %v1397 = vmul.f32 %v1352, %v1389
    %v1398 = vmul.f32 %v1354, %v1390
    %v1399 = vmul.f32 %v1356, %v1391
    %v1400 = vmul.f32 %v1358, %v1392
    %v1401 = vmul.f32 %v1360, %v1393
    %v1402 = vmul.f32 %v1362, %v1394
    %v1403 = vpack.c.bf16 %v1396, %v1395
    %v1404 = vpack.c.bf16 %v1398, %v1397
    %v1405 = vpack.c.bf16 %v1400, %v1399
    %v1406 = vpack.c.bf16 %v1402, %v1401
    %1407 = vrot.lane.b32.xlu0 %v337, 64
    %v1408 = vpop.permute.xlu0 %1407
    %1409 = vrot.lane.b32.xlu0 %v339, 64
    %v1410 = vpop.permute.xlu0 %1409
    %1411 = vrot.lane.b32.xlu0 %v341, 64
    %v1412 = vpop.permute.xlu0 %1411
    %1413 = vrot.lane.b32.xlu0 %v343, 64
    %v1414 = vpop.permute.xlu0 %1413
    %v1420 = vsel %vm639, %v1403, 0
    %v1423 = vsel %vm639, %v1404, 0
    %v1426 = vsel %vm639, %v1405, 0
    %v1429 = vsel %vm639, %v1406, 0
    %1431 = vmatprep.subr.bf16.mxu0 0
    %1432 = vmatpush1.bf16.msra.mxu0 0
    %1433 = vmatprep.subr.bf16.mxu0 0
    %1434 = vmatpush1.bf16.msra.mxu0 0
    %1435 = vmatprep.subr.bf16.mxu0 0
    %1436 = vmatpush1.bf16.msra.mxu0 0
    %1437 = vmatprep.subr.bf16.mxu0 0
    %1438 = vmatpush1.bf16.msra.mxu0 0
    %1439 = vmatprep.subr.bf16.mxu0 0
    %1440 = vmatpush1.bf16.msra.mxu0 %v1414
    %1441 = vmatprep.subr.bf16.mxu0 0
    %1442 = vmatpush1.bf16.msra.mxu0 %v1412
    %1443 = vmatprep.subr.bf16.mxu0 0
    %1444 = vmatpush1.bf16.msra.mxu0 %v1410
    %1445 = vmatprep.subr.bf16.mxu0 0
    %1446 = vmatpush1.bf16.msra.mxu0 %v1408
    %1447 = vmatprep.subr.bf16.mxu0 0
    %1448 = vmatpush2.bf16.msra.mxu0 0
    %1449 = vmatprep.subr.bf16.mxu0 0
    %1450 = vmatpush2.bf16.msra.mxu0 0
    %1451 = vmatprep.subr.bf16.mxu0 0
    %1452 = vmatpush2.bf16.msra.mxu0 0
    %1453 = vmatprep.subr.bf16.mxu0 0
    %1454 = vmatpush2.bf16.msra.mxu0 0
    %1455 = vmatprep.subr.bf16.mxu0 0
    %1456 = vmatpush2.bf16.msra.mxu0 0
    %1457 = vmatprep.subr.bf16.mxu0 0
    %1458 = vmatpush2.bf16.msra.mxu0 0
    %1459 = vmatprep.subr.bf16.mxu0 0
    %1460 = vmatpush2.bf16.msra.mxu0 0
    %1461 = vmatprep.subr.bf16.mxu0 0
    %1462 = vmatpush2.bf16.msra.mxu0 0
    %1463 = vmatprep.mubr.bf16.mxu0 0
    %1464 = vmatmul.mubr.bf16.gmra.mxu0 %v1420
    %v1465 = vpop.f32.mrf.mxu0
    %v1466 = vadd.f32 0.0, %v1465
    %v1467 = vpop.f32.mrf.mxu0
    %v1468 = vpop.f32.mrf.mxu0
    %v1469 = vadd.f32 0.0, %v1468
    %v1470 = vpop.f32.mrf.mxu0
    %1471 = vmatprep.mubr.bf16.mxu0 0
    %1472 = vmatmul.mubr.bf16.gmra.mxu0 %v1423
    %v1473 = vpop.f32.mrf.mxu0
    %v1474 = vadd.f32 0.0, %v1473
    %v1475 = vpop.f32.mrf.mxu0
    %v1476 = vpop.f32.mrf.mxu0
    %v1477 = vadd.f32 0.0, %v1476
    %v1478 = vpop.f32.mrf.mxu0
    %1479 = vmatprep.mubr.bf16.mxu0 0
    %1480 = vmatmul.mubr.bf16.gmra.mxu0 %v1426
    %v1481 = vpop.f32.mrf.mxu0
    %v1482 = vadd.f32 0.0, %v1481
    %v1483 = vpop.f32.mrf.mxu0
    %v1484 = vpop.f32.mrf.mxu0
    %v1485 = vadd.f32 0.0, %v1484
    %v1486 = vpop.f32.mrf.mxu0
    %1487 = vmatprep.mubr.bf16.mxu0 0
    %1488 = vmatmul.mubr.bf16.gmra.mxu0 %v1429
    %v1489 = vpop.f32.mrf.mxu0
    %v1490 = vadd.f32 0.0, %v1489
    %v1491 = vpop.f32.mrf.mxu0
    %v1492 = vpop.f32.mrf.mxu0
    %v1493 = vadd.f32 0.0, %v1492
    %v1494 = vpop.f32.mrf.mxu0
    %1495 = vdwg.mxu0
    %1504 = vrot.lane.b32.xlu0 %v1466, 64
    %v1505 = vpop.permute.xlu0 %1504
    %1506 = vrot.lane.b32.xlu0 %v1469, 64
    %v1507 = vpop.permute.xlu0 %1506
    %1508 = vrot.lane.b32.xlu0 %v1474, 64
    %v1509 = vpop.permute.xlu0 %1508
    %1510 = vrot.lane.b32.xlu0 %v1477, 64
    %v1511 = vpop.permute.xlu0 %1510
    %1512 = vrot.lane.b32.xlu0 %v1482, 64
    %v1513 = vpop.permute.xlu0 %1512
    %1514 = vrot.lane.b32.xlu0 %v1485, 64
    %v1515 = vpop.permute.xlu0 %1514
    %1516 = vrot.lane.b32.xlu0 %v1490, 64
    %v1517 = vpop.permute.xlu0 %1516
    %1518 = vrot.lane.b32.xlu0 %v1493, 64
    %v1519 = vpop.permute.xlu0 %1518
    %vm1528 = vcmask 785920
    %1529 = vst.msk [vmem:[#allocation2] sm:$0xff] %vm1528, %v1505
    %1530 = vst.msk [vmem:[#allocation2 + $0x10] sm:$0xff] %vm1528, %v1507
    %1531 = vst.msk [vmem:[#allocation2 + $0x20] sm:$0xff] %vm1528, %v1509
    %1532 = vst.msk [vmem:[#allocation2 + $0x30] sm:$0xff] %vm1528, %v1511
    %1533 = vst.msk [vmem:[#allocation2 + $0x40] sm:$0xff] %vm1528, %v1513
    %1534 = vst.msk [vmem:[#allocation2 + $0x50] sm:$0xff] %vm1528, %v1515
    %1535 = vst.msk [vmem:[#allocation2 + $0x60] sm:$0xff] %vm1528, %v1517
    %1536 = vst.msk [vmem:[#allocation2 + $0x70] sm:$0xff] %vm1528, %v1519
    %1537 = vrot.lane.b32.xlu0 %v477, 125
    %v1538 = vpop.permute.xlu0 %1537
    %1539 = vrot.lane.b32.xlu0 %v480, 125
    %v1540 = vpop.permute.xlu0 %1539
    %1541 = vrot.lane.b32.xlu0 %v485, 125
    %v1542 = vpop.permute.xlu0 %1541
    %1543 = vrot.lane.b32.xlu0 %v488, 125
    %v1544 = vpop.permute.xlu0 %1543
    %1545 = vrot.lane.b32.xlu0 %v493, 125
    %v1546 = vpop.permute.xlu0 %1545
    %1547 = vrot.lane.b32.xlu0 %v496, 125
    %v1548 = vpop.permute.xlu0 %1547
    %1549 = vrot.lane.b32.xlu0 %v501, 125
    %v1550 = vpop.permute.xlu0 %1549
    %1551 = vrot.lane.b32.xlu0 %v504, 125
    %v1552 = vpop.permute.xlu0 %1551
    %1561 = vxpose.xlu0.b32.start [1/16] %v1538, 128
    %1562 = vxpose.xlu0.b32.cont [2/16] %v1540, 128
    %1563 = vxpose.xlu0.b32.cont [3/16] %v1542, 128
    %1564 = vxpose.xlu0.b32.cont [4/16] %v1544, 128
    %1565 = vxpose.xlu0.b32.cont [5/16] %v1546, 128
    %1566 = vxpose.xlu0.b32.cont [6/16] %v1548, 128
    %1567 = vxpose.xlu0.b32.cont [7/16] %v1550, 128
    %1568 = vxpose.xlu0.b32.cont [8/16] %v1552, 128
    %1569 = vxpose.xlu0.b32.cont [9/16] 0.0, 128
    %1570 = vxpose.xlu0.b32.cont [10/16] 0.0, 128
    %1571 = vxpose.xlu0.b32.cont [11/16] 0.0, 128
    %1572 = vxpose.xlu0.b32.cont [12/16] 0.0, 128
    %1573 = vxpose.xlu0.b32.cont [13/16] 0.0, 128
    %1574 = vxpose.xlu0.b32.cont [14/16] 0.0, 128
    %1575 = vxpose.xlu0.b32.cont [15/16] 0.0, 128
    %1576 = vxpose.xlu0.b32.end [16/16] 0.0, 128
    %v1577 = vpop.trf.xlu0
    %v1578 = vpop.trf.xlu0
    %v1579 = vpop.trf.xlu0
    %v1580 = vpop.trf.xlu0
    %v1581 = vpop.trf.xlu0
    %v1582 = vpop.trf.xlu0
    %v1583 = vpop.trf.xlu0
    %v1584 = vpop.trf.xlu0
    %v1585 = vpop.trf.xlu0
    %v1586 = vpop.trf.xlu0
    %v1587 = vpop.trf.xlu0
    %v1588 = vpop.trf.xlu0
    %v1589 = vpop.trf.xlu0
    %v1590 = vpop.trf.xlu0
    %v1591 = vpop.trf.xlu0
    %v1592 = vpop.trf.xlu0
    %1593 = vset.pattern.permute.xlu0 3
    %1594 = vperm.xlu0 %1593, %v396
    %v1595 = vpop.permute.xlu0 %1594
    %1597 = vset.pattern.permute.xlu0 3
    %1598 = vperm.xlu0 %1597, %v399
    %v1599 = vpop.permute.xlu0 %1598
    %1601 = vset.pattern.permute.xlu0 3
    %1602 = vperm.xlu0 %1601, %v404
    %v1603 = vpop.permute.xlu0 %1602
    %1605 = vset.pattern.permute.xlu0 3
    %1606 = vperm.xlu0 %1605, %v407
    %v1607 = vpop.permute.xlu0 %1606
    %1609 = vset.pattern.permute.xlu0 3
    %1610 = vperm.xlu0 %1609, %v412
    %v1611 = vpop.permute.xlu0 %1610
    %1613 = vset.pattern.permute.xlu0 3
    %1614 = vperm.xlu0 %1613, %v415
    %v1615 = vpop.permute.xlu0 %1614
    %1617 = vset.pattern.permute.xlu0 3
    %1618 = vperm.xlu0 %1617, %v420
    %v1619 = vpop.permute.xlu0 %1618
    %1621 = vset.pattern.permute.xlu0 3
    %1622 = vperm.xlu0 %1621, %v423
    %v1623 = vpop.permute.xlu0 %1622
    %v1625 = vlaneseq
    %v1626 = vshrl.u32 %v1625, 7
    %v1627 = vsub.s32 0, %v1626
    %v1628 = vrot.slane %v1577, %v1627
    %v1629 = vadd.f32 %v1595, %v1628
    %v1630 = vadd.f32 %v1599, %v1628
    %v1631 = vadd.f32 %v1603, %v1628
    %v1632 = vadd.f32 %v1607, %v1628
    %v1633 = vadd.f32 %v1611, %v1628
    %v1634 = vadd.f32 %v1615, %v1628
    %v1635 = vadd.f32 %v1619, %v1628
    %v1636 = vadd.f32 %v1623, %v1628
    %vm1637 = vcmp.gt.f32.partialorder %v1629, 0.0
    %vm1638 = vcmp.gt.f32.partialorder %v1630, 0.0
    %vm1639 = vcmp.gt.f32.partialorder %v1631, 0.0
    %vm1640 = vcmp.gt.f32.partialorder %v1632, 0.0
    %vm1641 = vcmp.gt.f32.partialorder %v1633, 0.0
    %vm1642 = vcmp.gt.f32.partialorder %v1634, 0.0
    %vm1643 = vcmp.gt.f32.partialorder %v1635, 0.0
    %vm1644 = vcmp.gt.f32.partialorder %v1636, 0.0
    %v1645 = vmul.f32 %v1629, 0.2
    %v1646 = vmul.f32 %v1630, 0.2
    %v1647 = vmul.f32 %v1631, 0.2
    %v1648 = vmul.f32 %v1632, 0.2
    %v1649 = vmul.f32 %v1633, 0.2
    %v1650 = vmul.f32 %v1634, 0.2
    %v1651 = vmul.f32 %v1635, 0.2
    %v1652 = vmul.f32 %v1636, 0.2
    %v1653 = vsel %vm1637, %v1629, %v1645
    %v1654 = vsel %vm1638, %v1630, %v1646
    %v1655 = vsel %vm1639, %v1631, %v1647
    %v1656 = vsel %vm1640, %v1632, %v1648
    %v1657 = vsel %vm1641, %v1633, %v1649
    %v1658 = vsel %vm1642, %v1634, %v1650
    %v1659 = vsel %vm1643, %v1635, %v1651
    %v1660 = vsel %vm1644, %v1636, %v1652
    %v1661 = vadd.f32 %v1653, %v515
    %v1662 = vadd.f32 %v1654, %v516
    %v1663 = vadd.f32 %v1655, %v517
    %v1664 = vadd.f32 %v1656, %v518
    %v1665 = vadd.f32 %v1657, %v519
    %v1666 = vadd.f32 %v1658, %v520
    %v1667 = vadd.f32 %v1659, %v521
    %v1668 = vadd.f32 %v1660, %v522
    %v1669 = vsel %vm639, %v1661, -inf
    %1670 = vmax.xlane.f32.xlu0 %v1669
    %v1671 = vpop.xlane.xlu0 %1670
    %v1672 = vsel %vm639, %v1662, -inf
    %1673 = vmax.xlane.f32.xlu0 %v1672
    %v1674 = vpop.xlane.xlu0 %1673
    %v1675 = vsel %vm639, %v1663, -inf
    %1676 = vmax.xlane.f32.xlu0 %v1675
    %v1677 = vpop.xlane.xlu0 %1676
    %v1678 = vsel %vm639, %v1664, -inf
    %1679 = vmax.xlane.f32.xlu0 %v1678
    %v1680 = vpop.xlane.xlu0 %1679
    %v1681 = vsel %vm639, %v1665, -inf
    %1682 = vmax.xlane.f32.xlu0 %v1681
    %v1683 = vpop.xlane.xlu0 %1682
    %v1684 = vsel %vm639, %v1666, -inf
    %1685 = vmax.xlane.f32.xlu0 %v1684
    %v1686 = vpop.xlane.xlu0 %1685
    %v1687 = vsel %vm639, %v1667, -inf
    %1688 = vmax.xlane.f32.xlu0 %v1687
    %v1689 = vpop.xlane.xlu0 %1688
    %v1690 = vsel %vm639, %v1668, -inf
    %1691 = vmax.xlane.f32.xlu0 %v1690
    %v1692 = vpop.xlane.xlu0 %1691
    %v1693 = vsub.f32 %v1661, %v1671
    %v1694 = vsub.f32 %v1662, %v1674
    %v1695 = vsub.f32 %v1663, %v1677
    %v1696 = vsub.f32 %v1664, %v1680
    %v1697 = vsub.f32 %v1665, %v1683
    %v1698 = vsub.f32 %v1666, %v1686
    %v1699 = vsub.f32 %v1667, %v1689
    %v1700 = vsub.f32 %v1668, %v1692
    %v1701 = vmul.f32 %v1693, 1.442695
    %v1702 = vpow.pop %v1701
    %v1703 = vmul.f32 %v1694, 1.442695
    %v1704 = vpow.pop %v1703
    %v1705 = vmul.f32 %v1695, 1.442695
    %v1706 = vpow.pop %v1705
    %v1707 = vmul.f32 %v1696, 1.442695
    %v1708 = vpow.pop %v1707
    %v1709 = vmul.f32 %v1697, 1.442695
    %v1710 = vpow.pop %v1709
    %v1711 = vmul.f32 %v1698, 1.442695
    %v1712 = vpow.pop %v1711
    %v1713 = vmul.f32 %v1699, 1.442695
    %v1714 = vpow.pop %v1713
    %v1715 = vmul.f32 %v1700, 1.442695
    %v1716 = vpow.pop %v1715
    %v1717 = vsel %vm639, %v1702, 0.0
    %1718 = vadd.xlane.f32.xlu0 %v1717
    %v1719 = vpop.xlane.xlu0 %1718
    %v1720 = vsel %vm639, %v1704, 0.0
    %1721 = vadd.xlane.f32.xlu0 %v1720
    %v1722 = vpop.xlane.xlu0 %1721
    %v1723 = vsel %vm639, %v1706, 0.0
    %1724 = vadd.xlane.f32.xlu0 %v1723
    %v1725 = vpop.xlane.xlu0 %1724
    %v1726 = vsel %vm639, %v1708, 0.0
    %1727 = vadd.xlane.f32.xlu0 %v1726
    %v1728 = vpop.xlane.xlu0 %1727
    %v1729 = vsel %vm639, %v1710, 0.0
    %1730 = vadd.xlane.f32.xlu0 %v1729
    %v1731 = vpop.xlane.xlu0 %1730
    %v1732 = vsel %vm639, %v1712, 0.0
    %1733 = vadd.xlane.f32.xlu0 %v1732
    %v1734 = vpop.xlane.xlu0 %1733
    %v1735 = vsel %vm639, %v1714, 0.0
    %1736 = vadd.xlane.f32.xlu0 %v1735
    %v1737 = vpop.xlane.xlu0 %1736
    %v1738 = vsel %vm639, %v1716, 0.0
    %1739 = vadd.xlane.f32.xlu0 %v1738
    %v1740 = vpop.xlane.xlu0 %1739
    %v1741 = vrcp.pop %v1719
    %v1742 = vrcp.pop %v1722
    %v1743 = vrcp.pop %v1725
    %v1744 = vrcp.pop %v1728
    %v1745 = vrcp.pop %v1731
    %v1746 = vrcp.pop %v1734
    %v1747 = vrcp.pop %v1737
    %v1748 = vrcp.pop %v1740
    %v1749 = vmul.f32 %v1702, %v1741
    %v1750 = vmul.f32 %v1704, %v1742
    %v1751 = vmul.f32 %v1706, %v1743
    %v1752 = vmul.f32 %v1708, %v1744
    %v1753 = vmul.f32 %v1710, %v1745
    %v1754 = vmul.f32 %v1712, %v1746
    %v1755 = vmul.f32 %v1714, %v1747
    %v1756 = vmul.f32 %v1716, %v1748
    %v1757 = vpack.c.bf16 %v1750, %v1749
    %v1758 = vpack.c.bf16 %v1752, %v1751
    %v1759 = vpack.c.bf16 %v1754, %v1753
    %v1760 = vpack.c.bf16 %v1756, %v1755
    %1761 = vrot.lane.b32.xlu0 %v337, 32
    %v1762 = vpop.permute.xlu0 %1761
    %1763 = vrot.lane.b32.xlu0 %v339, 32
    %v1764 = vpop.permute.xlu0 %1763
    %1765 = vrot.lane.b32.xlu0 %v341, 32
    %v1766 = vpop.permute.xlu0 %1765
    %1767 = vrot.lane.b32.xlu0 %v343, 32
    %v1768 = vpop.permute.xlu0 %1767
    %v1774 = vsel %vm639, %v1757, 0
    %v1777 = vsel %vm639, %v1758, 0
    %v1780 = vsel %vm639, %v1759, 0
    %v1783 = vsel %vm639, %v1760, 0
    %1785 = vmatprep.subr.bf16.mxu0 0
    %1786 = vmatpush1.bf16.msra.mxu0 0
    %1787 = vmatprep.subr.bf16.mxu0 0
    %1788 = vmatpush1.bf16.msra.mxu0 0
    %1789 = vmatprep.subr.bf16.mxu0 0
    %1790 = vmatpush1.bf16.msra.mxu0 0
    %1791 = vmatprep.subr.bf16.mxu0 0
    %1792 = vmatpush1.bf16.msra.mxu0 0
    %1793 = vmatprep.subr.bf16.mxu0 0
    %1794 = vmatpush1.bf16.msra.mxu0 %v1768
    %1795 = vmatprep.subr.bf16.mxu0 0
    %1796 = vmatpush1.bf16.msra.mxu0 %v1766
    %1797 = vmatprep.subr.bf16.mxu0 0
    %1798 = vmatpush1.bf16.msra.mxu0 %v1764
    %1799 = vmatprep.subr.bf16.mxu0 0
    %1800 = vmatpush1.bf16.msra.mxu0 %v1762
    %1801 = vmatprep.subr.bf16.mxu0 0
    %1802 = vmatpush2.bf16.msra.mxu0 0
    %1803 = vmatprep.subr.bf16.mxu0 0
    %1804 = vmatpush2.bf16.msra.mxu0 0
    %1805 = vmatprep.subr.bf16.mxu0 0
    %1806 = vmatpush2.bf16.msra.mxu0 0
    %1807 = vmatprep.subr.bf16.mxu0 0
    %1808 = vmatpush2.bf16.msra.mxu0 0
    %1809 = vmatprep.subr.bf16.mxu0 0
    %1810 = vmatpush2.bf16.msra.mxu0 0
    %1811 = vmatprep.subr.bf16.mxu0 0
    %1812 = vmatpush2.bf16.msra.mxu0 0
    %1813 = vmatprep.subr.bf16.mxu0 0
    %1814 = vmatpush2.bf16.msra.mxu0 0
    %1815 = vmatprep.subr.bf16.mxu0 0
    %1816 = vmatpush2.bf16.msra.mxu0 0
    %1817 = vmatprep.mubr.bf16.mxu0 0
    %1818 = vmatmul.mubr.bf16.gmra.mxu0 %v1774
    %v1819 = vpop.f32.mrf.mxu0
    %v1820 = vadd.f32 0.0, %v1819
    %v1821 = vpop.f32.mrf.mxu0
    %v1822 = vpop.f32.mrf.mxu0
    %v1823 = vadd.f32 0.0, %v1822
    %v1824 = vpop.f32.mrf.mxu0
    %1825 = vmatprep.mubr.bf16.mxu0 0
    %1826 = vmatmul.mubr.bf16.gmra.mxu0 %v1777
    %v1827 = vpop.f32.mrf.mxu0
    %v1828 = vadd.f32 0.0, %v1827
    %v1829 = vpop.f32.mrf.mxu0
    %v1830 = vpop.f32.mrf.mxu0
    %v1831 = vadd.f32 0.0, %v1830
    %v1832 = vpop.f32.mrf.mxu0
    %1833 = vmatprep.mubr.bf16.mxu0 0
    %1834 = vmatmul.mubr.bf16.gmra.mxu0 %v1780
    %v1835 = vpop.f32.mrf.mxu0
    %v1836 = vadd.f32 0.0, %v1835
    %v1837 = vpop.f32.mrf.mxu0
    %v1838 = vpop.f32.mrf.mxu0
    %v1839 = vadd.f32 0.0, %v1838
    %v1840 = vpop.f32.mrf.mxu0
    %1841 = vmatprep.mubr.bf16.mxu0 0
    %1842 = vmatmul.mubr.bf16.gmra.mxu0 %v1783
    %v1843 = vpop.f32.mrf.mxu0
    %v1844 = vadd.f32 0.0, %v1843
    %v1845 = vpop.f32.mrf.mxu0
    %v1846 = vpop.f32.mrf.mxu0
    %v1847 = vadd.f32 0.0, %v1846
    %v1848 = vpop.f32.mrf.mxu0
    %1849 = vdwg.mxu0
    %1858 = vrot.lane.b32.xlu0 %v1820, 96
    %v1859 = vpop.permute.xlu0 %1858
    %1860 = vrot.lane.b32.xlu0 %v1823, 96
    %v1861 = vpop.permute.xlu0 %1860
    %1862 = vrot.lane.b32.xlu0 %v1828, 96
    %v1863 = vpop.permute.xlu0 %1862
    %1864 = vrot.lane.b32.xlu0 %v1831, 96
    %v1865 = vpop.permute.xlu0 %1864
    %1866 = vrot.lane.b32.xlu0 %v1836, 96
    %v1867 = vpop.permute.xlu0 %1866
    %1868 = vrot.lane.b32.xlu0 %v1839, 96
    %v1869 = vpop.permute.xlu0 %1868
    %1870 = vrot.lane.b32.xlu0 %v1844, 96
    %v1871 = vpop.permute.xlu0 %1870
    %1872 = vrot.lane.b32.xlu0 %v1847, 96
    %v1873 = vpop.permute.xlu0 %1872
    %vm1882 = vcmask 1048320
    %1883 = vst.msk [vmem:[#allocation2] sm:$0xff] %vm1882, %v1859
    %1884 = vst.msk [vmem:[#allocation2 + $0x10] sm:$0xff] %vm1882, %v1861
    %1885 = vst.msk [vmem:[#allocation2 + $0x20] sm:$0xff] %vm1882, %v1863
    %1886 = vst.msk [vmem:[#allocation2 + $0x30] sm:$0xff] %vm1882, %v1865
    %1887 = vst.msk [vmem:[#allocation2 + $0x40] sm:$0xff] %vm1882, %v1867
    %1888 = vst.msk [vmem:[#allocation2 + $0x50] sm:$0xff] %vm1882, %v1869
    %1889 = vst.msk [vmem:[#allocation2 + $0x60] sm:$0xff] %vm1882, %v1871
    %1890 = vst.msk [vmem:[#allocation2 + $0x70] sm:$0xff] %vm1882, %v1873
    %1891 = vrot.lane.b32.xlu0 %v477, 124
    %v1892 = vpop.permute.xlu0 %1891
    %1893 = vrot.lane.b32.xlu0 %v480, 124
    %v1894 = vpop.permute.xlu0 %1893
    %1895 = vrot.lane.b32.xlu0 %v485, 124
    %v1896 = vpop.permute.xlu0 %1895
    %1897 = vrot.lane.b32.xlu0 %v488, 124
    %v1898 = vpop.permute.xlu0 %1897
    %1899 = vrot.lane.b32.xlu0 %v493, 124
    %v1900 = vpop.permute.xlu0 %1899
    %1901 = vrot.lane.b32.xlu0 %v496, 124
    %v1902 = vpop.permute.xlu0 %1901
    %1903 = vrot.lane.b32.xlu0 %v501, 124
    %v1904 = vpop.permute.xlu0 %1903
    %1905 = vrot.lane.b32.xlu0 %v504, 124
    %v1906 = vpop.permute.xlu0 %1905
    %1915 = vxpose.xlu0.b32.start [1/16] %v1892, 128
    %1916 = vxpose.xlu0.b32.cont [2/16] %v1894, 128
    %1917 = vxpose.xlu0.b32.cont [3/16] %v1896, 128
    %1918 = vxpose.xlu0.b32.cont [4/16] %v1898, 128
    %1919 = vxpose.xlu0.b32.cont [5/16] %v1900, 128
    %1920 = vxpose.xlu0.b32.cont [6/16] %v1902, 128
    %1921 = vxpose.xlu0.b32.cont [7/16] %v1904, 128
    %1922 = vxpose.xlu0.b32.cont [8/16] %v1906, 128
    %1923 = vxpose.xlu0.b32.cont [9/16] 0.0, 128
    %1924 = vxpose.xlu0.b32.cont [10/16] 0.0, 128
    %1925 = vxpose.xlu0.b32.cont [11/16] 0.0, 128
    %1926 = vxpose.xlu0.b32.cont [12/16] 0.0, 128
    %1927 = vxpose.xlu0.b32.cont [13/16] 0.0, 128
    %1928 = vxpose.xlu0.b32.cont [14/16] 0.0, 128
    %1929 = vxpose.xlu0.b32.cont [15/16] 0.0, 128
    %1930 = vxpose.xlu0.b32.end [16/16] 0.0, 128
    %v1931 = vpop.trf.xlu0
    %v1932 = vpop.trf.xlu0
    %v1933 = vpop.trf.xlu0
    %v1934 = vpop.trf.xlu0
    %v1935 = vpop.trf.xlu0
    %v1936 = vpop.trf.xlu0
    %v1937 = vpop.trf.xlu0
    %v1938 = vpop.trf.xlu0
    %v1939 = vpop.trf.xlu0
    %v1940 = vpop.trf.xlu0
    %v1941 = vpop.trf.xlu0
    %v1942 = vpop.trf.xlu0
    %v1943 = vpop.trf.xlu0
    %v1944 = vpop.trf.xlu0
    %v1945 = vpop.trf.xlu0
    %v1946 = vpop.trf.xlu0
    %1947 = vset.pattern.permute.xlu0 4
    %1948 = vperm.xlu0 %1947, %v396
    %v1949 = vpop.permute.xlu0 %1948
    %1951 = vset.pattern.permute.xlu0 4
    %1952 = vperm.xlu0 %1951, %v399
    %v1953 = vpop.permute.xlu0 %1952
    %1955 = vset.pattern.permute.xlu0 4
    %1956 = vperm.xlu0 %1955, %v404
    %v1957 = vpop.permute.xlu0 %1956
    %1959 = vset.pattern.permute.xlu0 4
    %1960 = vperm.xlu0 %1959, %v407
    %v1961 = vpop.permute.xlu0 %1960
    %1963 = vset.pattern.permute.xlu0 4
    %1964 = vperm.xlu0 %1963, %v412
    %v1965 = vpop.permute.xlu0 %1964
    %1967 = vset.pattern.permute.xlu0 4
    %1968 = vperm.xlu0 %1967, %v415
    %v1969 = vpop.permute.xlu0 %1968
    %1971 = vset.pattern.permute.xlu0 4
    %1972 = vperm.xlu0 %1971, %v420
    %v1973 = vpop.permute.xlu0 %1972
    %1975 = vset.pattern.permute.xlu0 4
    %1976 = vperm.xlu0 %1975, %v423
    %v1977 = vpop.permute.xlu0 %1976
    %v1979 = vlaneseq
    %v1980 = vshrl.u32 %v1979, 7
    %v1981 = vsub.s32 0, %v1980
    %v1982 = vrot.slane %v1931, %v1981
    %v1983 = vadd.f32 %v1949, %v1982
    %v1984 = vadd.f32 %v1953, %v1982
    %v1985 = vadd.f32 %v1957, %v1982
    %v1986 = vadd.f32 %v1961, %v1982
    %v1987 = vadd.f32 %v1965, %v1982
    %v1988 = vadd.f32 %v1969, %v1982
    %v1989 = vadd.f32 %v1973, %v1982
    %v1990 = vadd.f32 %v1977, %v1982
    %vm1991 = vcmp.gt.f32.partialorder %v1983, 0.0
    %vm1992 = vcmp.gt.f32.partialorder %v1984, 0.0
    %vm1993 = vcmp.gt.f32.partialorder %v1985, 0.0
    %vm1994 = vcmp.gt.f32.partialorder %v1986, 0.0
    %vm1995 = vcmp.gt.f32.partialorder %v1987, 0.0
    %vm1996 = vcmp.gt.f32.partialorder %v1988, 0.0
    %vm1997 = vcmp.gt.f32.partialorder %v1989, 0.0
    %vm1998 = vcmp.gt.f32.partialorder %v1990, 0.0
    %v1999 = vmul.f32 %v1983, 0.2
    %v2000 = vmul.f32 %v1984, 0.2
    %v2001 = vmul.f32 %v1985, 0.2
    %v2002 = vmul.f32 %v1986, 0.2
    %v2003 = vmul.f32 %v1987, 0.2
    %v2004 = vmul.f32 %v1988, 0.2
    %v2005 = vmul.f32 %v1989, 0.2
    %v2006 = vmul.f32 %v1990, 0.2
    %v2007 = vsel %vm1991, %v1983, %v1999
    %v2008 = vsel %vm1992, %v1984, %v2000
    %v2009 = vsel %vm1993, %v1985, %v2001
    %v2010 = vsel %vm1994, %v1986, %v2002
    %v2011 = vsel %vm1995, %v1987, %v2003
    %v2012 = vsel %vm1996, %v1988, %v2004
    %v2013 = vsel %vm1997, %v1989, %v2005
    %v2014 = vsel %vm1998, %v1990, %v2006
    %v2015 = vadd.f32 %v2007, %v515
    %v2016 = vadd.f32 %v2008, %v516
    %v2017 = vadd.f32 %v2009, %v517
    %v2018 = vadd.f32 %v2010, %v518
    %v2019 = vadd.f32 %v2011, %v519
    %v2020 = vadd.f32 %v2012, %v520
    %v2021 = vadd.f32 %v2013, %v521
    %v2022 = vadd.f32 %v2014, %v522
    %v2023 = vsel %vm639, %v2015, -inf
    %2024 = vmax.xlane.f32.xlu0 %v2023
    %v2025 = vpop.xlane.xlu0 %2024
    %v2026 = vsel %vm639, %v2016, -inf
    %2027 = vmax.xlane.f32.xlu0 %v2026
    %v2028 = vpop.xlane.xlu0 %2027
    %v2029 = vsel %vm639, %v2017, -inf
    %2030 = vmax.xlane.f32.xlu0 %v2029
    %v2031 = vpop.xlane.xlu0 %2030
    %v2032 = vsel %vm639, %v2018, -inf
    %2033 = vmax.xlane.f32.xlu0 %v2032
    %v2034 = vpop.xlane.xlu0 %2033
    %v2035 = vsel %vm639, %v2019, -inf
    %2036 = vmax.xlane.f32.xlu0 %v2035
    %v2037 = vpop.xlane.xlu0 %2036
    %v2038 = vsel %vm639, %v2020, -inf
    %2039 = vmax.xlane.f32.xlu0 %v2038
    %v2040 = vpop.xlane.xlu0 %2039
    %v2041 = vsel %vm639, %v2021, -inf
    %2042 = vmax.xlane.f32.xlu0 %v2041
    %v2043 = vpop.xlane.xlu0 %2042
    %v2044 = vsel %vm639, %v2022, -inf
    %2045 = vmax.xlane.f32.xlu0 %v2044
    %v2046 = vpop.xlane.xlu0 %2045
    %v2047 = vsub.f32 %v2015, %v2025
    %v2048 = vsub.f32 %v2016, %v2028
    %v2049 = vsub.f32 %v2017, %v2031
    %v2050 = vsub.f32 %v2018, %v2034
    %v2051 = vsub.f32 %v2019, %v2037
    %v2052 = vsub.f32 %v2020, %v2040
    %v2053 = vsub.f32 %v2021, %v2043
    %v2054 = vsub.f32 %v2022, %v2046
    %v2055 = vmul.f32 %v2047, 1.442695
    %v2056 = vpow.pop %v2055
    %v2057 = vmul.f32 %v2048, 1.442695
    %v2058 = vpow.pop %v2057
    %v2059 = vmul.f32 %v2049, 1.442695
    %v2060 = vpow.pop %v2059
    %v2061 = vmul.f32 %v2050, 1.442695
    %v2062 = vpow.pop %v2061
    %v2063 = vmul.f32 %v2051, 1.442695
    %v2064 = vpow.pop %v2063
    %v2065 = vmul.f32 %v2052, 1.442695
    %v2066 = vpow.pop %v2065
    %v2067 = vmul.f32 %v2053, 1.442695
    %v2068 = vpow.pop %v2067
    %v2069 = vmul.f32 %v2054, 1.442695
    %v2070 = vpow.pop %v2069
    %v2071 = vsel %vm639, %v2056, 0.0
    %2072 = vadd.xlane.f32.xlu0 %v2071
    %v2073 = vpop.xlane.xlu0 %2072
    %v2074 = vsel %vm639, %v2058, 0.0
    %2075 = vadd.xlane.f32.xlu0 %v2074
    %v2076 = vpop.xlane.xlu0 %2075
    %v2077 = vsel %vm639, %v2060, 0.0
    %2078 = vadd.xlane.f32.xlu0 %v2077
    %v2079 = vpop.xlane.xlu0 %2078
    %v2080 = vsel %vm639, %v2062, 0.0
    %2081 = vadd.xlane.f32.xlu0 %v2080
    %v2082 = vpop.xlane.xlu0 %2081
    %v2083 = vsel %vm639, %v2064, 0.0
    %2084 = vadd.xlane.f32.xlu0 %v2083
    %v2085 = vpop.xlane.xlu0 %2084
    %v2086 = vsel %vm639, %v2066, 0.0
    %2087 = vadd.xlane.f32.xlu0 %v2086
    %v2088 = vpop.xlane.xlu0 %2087
    %v2089 = vsel %vm639, %v2068, 0.0
    %2090 = vadd.xlane.f32.xlu0 %v2089
    %v2091 = vpop.xlane.xlu0 %2090
    %v2092 = vsel %vm639, %v2070, 0.0
    %2093 = vadd.xlane.f32.xlu0 %v2092
    %v2094 = vpop.xlane.xlu0 %2093
    %v2095 = vrcp.pop %v2073
    %v2096 = vrcp.pop %v2076
    %v2097 = vrcp.pop %v2079
    %v2098 = vrcp.pop %v2082
    %v2099 = vrcp.pop %v2085
    %v2100 = vrcp.pop %v2088
    %v2101 = vrcp.pop %v2091
    %v2102 = vrcp.pop %v2094
    %v2103 = vmul.f32 %v2056, %v2095
    %v2104 = vmul.f32 %v2058, %v2096
    %v2105 = vmul.f32 %v2060, %v2097
    %v2106 = vmul.f32 %v2062, %v2098
    %v2107 = vmul.f32 %v2064, %v2099
    %v2108 = vmul.f32 %v2066, %v2100
    %v2109 = vmul.f32 %v2068, %v2101
    %v2110 = vmul.f32 %v2070, %v2102
    %v2111 = vpack.c.bf16 %v2104, %v2103
    %v2112 = vpack.c.bf16 %v2106, %v2105
    %v2113 = vpack.c.bf16 %v2108, %v2107
    %v2114 = vpack.c.bf16 %v2110, %v2109
    %v2116 = vsel %vm639, %v2111, 0
    %v2119 = vsel %vm639, %v2112, 0
    %v2122 = vsel %vm639, %v2113, 0
    %v2125 = vsel %vm639, %v2114, 0
    %2127 = vmatprep.subr.bf16.mxu0 0
    %2128 = vmatpush1.bf16.msra.mxu0 0
    %2129 = vmatprep.subr.bf16.mxu0 0
    %2130 = vmatpush1.bf16.msra.mxu0 0
    %2131 = vmatprep.subr.bf16.mxu0 0
    %2132 = vmatpush1.bf16.msra.mxu0 0
    %2133 = vmatprep.subr.bf16.mxu0 0
    %2134 = vmatpush1.bf16.msra.mxu0 0
    %2135 = vmatprep.subr.bf16.mxu0 0
    %2136 = vmatpush1.bf16.msra.mxu0 %v344
    %2137 = vmatprep.subr.bf16.mxu0 0
    %2138 = vmatpush1.bf16.msra.mxu0 %v342
    %2139 = vmatprep.subr.bf16.mxu0 0
    %2140 = vmatpush1.bf16.msra.mxu0 %v340
    %2141 = vmatprep.subr.bf16.mxu0 0
    %2142 = vmatpush1.bf16.msra.mxu0 %v338
    %2143 = vmatprep.subr.bf16.mxu0 0
    %2144 = vmatpush2.bf16.msra.mxu0 0
    %2145 = vmatprep.subr.bf16.mxu0 0
    %2146 = vmatpush2.bf16.msra.mxu0 0
    %2147 = vmatprep.subr.bf16.mxu0 0
    %2148 = vmatpush2.bf16.msra.mxu0 0
    %2149 = vmatprep.subr.bf16.mxu0 0
    %2150 = vmatpush2.bf16.msra.mxu0 0
    %2151 = vmatprep.subr.bf16.mxu0 0
    %2152 = vmatpush2.bf16.msra.mxu0 0
    %2153 = vmatprep.subr.bf16.mxu0 0
    %2154 = vmatpush2.bf16.msra.mxu0 0
    %2155 = vmatprep.subr.bf16.mxu0 0
    %2156 = vmatpush2.bf16.msra.mxu0 0
    %2157 = vmatprep.subr.bf16.mxu0 0
    %2158 = vmatpush2.bf16.msra.mxu0 0
    %2159 = vmatprep.mubr.bf16.mxu0 0
    %2160 = vmatmul.mubr.bf16.gmra.mxu0 %v2116
    %v2161 = vpop.f32.mrf.mxu0
    %v2162 = vadd.f32 0.0, %v2161
    %v2163 = vpop.f32.mrf.mxu0
    %v2164 = vpop.f32.mrf.mxu0
    %v2165 = vadd.f32 0.0, %v2164
    %v2166 = vpop.f32.mrf.mxu0
    %2167 = vmatprep.mubr.bf16.mxu0 0
    %2168 = vmatmul.mubr.bf16.gmra.mxu0 %v2119
    %v2169 = vpop.f32.mrf.mxu0
    %v2170 = vadd.f32 0.0, %v2169
    %v2171 = vpop.f32.mrf.mxu0
    %v2172 = vpop.f32.mrf.mxu0
    %v2173 = vadd.f32 0.0, %v2172
    %v2174 = vpop.f32.mrf.mxu0
    %2175 = vmatprep.mubr.bf16.mxu0 0
    %2176 = vmatmul.mubr.bf16.gmra.mxu0 %v2122
    %v2177 = vpop.f32.mrf.mxu0
    %v2178 = vadd.f32 0.0, %v2177
    %v2179 = vpop.f32.mrf.mxu0
    %v2180 = vpop.f32.mrf.mxu0
    %v2181 = vadd.f32 0.0, %v2180
    %v2182 = vpop.f32.mrf.mxu0
    %2183 = vmatprep.mubr.bf16.mxu0 0
    %2184 = vmatmul.mubr.bf16.gmra.mxu0 %v2125
    %v2185 = vpop.f32.mrf.mxu0
    %v2186 = vadd.f32 0.0, %v2185
    %v2187 = vpop.f32.mrf.mxu0
    %v2188 = vpop.f32.mrf.mxu0
    %v2189 = vadd.f32 0.0, %v2188
    %v2190 = vpop.f32.mrf.mxu0
    %2191 = vdwg.mxu0
    %2192 = vst.msk [vmem:[#allocation2 + $0x8] sm:$0xff] %vm146, %v2162
    %2193 = vst.msk [vmem:[#allocation2 + $0x18] sm:$0xff] %vm146, %v2165
    %2194 = vst.msk [vmem:[#allocation2 + $0x28] sm:$0xff] %vm146, %v2170
    %2195 = vst.msk [vmem:[#allocation2 + $0x38] sm:$0xff] %vm146, %v2173
    %2196 = vst.msk [vmem:[#allocation2 + $0x48] sm:$0xff] %vm146, %v2178
    %2197 = vst.msk [vmem:[#allocation2 + $0x58] sm:$0xff] %vm146, %v2181
    %2198 = vst.msk [vmem:[#allocation2 + $0x68] sm:$0xff] %vm146, %v2186
    %2199 = vst.msk [vmem:[#allocation2 + $0x78] sm:$0xff] %vm146, %v2189
    %2200 = vrot.lane.b32.xlu0 %v477, 123
    %v2201 = vpop.permute.xlu0 %2200
    %2202 = vrot.lane.b32.xlu0 %v480, 123
    %v2203 = vpop.permute.xlu0 %2202
    %2204 = vrot.lane.b32.xlu0 %v485, 123
    %v2205 = vpop.permute.xlu0 %2204
    %2206 = vrot.lane.b32.xlu0 %v488, 123
    %v2207 = vpop.permute.xlu0 %2206
    %2208 = vrot.lane.b32.xlu0 %v493, 123
    %v2209 = vpop.permute.xlu0 %2208
    %2210 = vrot.lane.b32.xlu0 %v496, 123
    %v2211 = vpop.permute.xlu0 %2210
    %2212 = vrot.lane.b32.xlu0 %v501, 123
    %v2213 = vpop.permute.xlu0 %2212
    %2214 = vrot.lane.b32.xlu0 %v504, 123
    %v2215 = vpop.permute.xlu0 %2214
    %2224 = vxpose.xlu0.b32.start [1/16] %v2201, 128
    %2225 = vxpose.xlu0.b32.cont [2/16] %v2203, 128
    %2226 = vxpose.xlu0.b32.cont [3/16] %v2205, 128
    %2227 = vxpose.xlu0.b32.cont [4/16] %v2207, 128
    %2228 = vxpose.xlu0.b32.cont [5/16] %v2209, 128
    %2229 = vxpose.xlu0.b32.cont [6/16] %v2211, 128
    %2230 = vxpose.xlu0.b32.cont [7/16] %v2213, 128
    %2231 = vxpose.xlu0.b32.cont [8/16] %v2215, 128
    %2232 = vxpose.xlu0.b32.cont [9/16] 0.0, 128
    %2233 = vxpose.xlu0.b32.cont [10/16] 0.0, 128
    %2234 = vxpose.xlu0.b32.cont [11/16] 0.0, 128
    %2235 = vxpose.xlu0.b32.cont [12/16] 0.0, 128
    %2236 = vxpose.xlu0.b32.cont [13/16] 0.0, 128
    %2237 = vxpose.xlu0.b32.cont [14/16] 0.0, 128
    %2238 = vxpose.xlu0.b32.cont [15/16] 0.0, 128
    %2239 = vxpose.xlu0.b32.end [16/16] 0.0, 128
    %v2240 = vpop.trf.xlu0
    %v2241 = vpop.trf.xlu0
    %v2242 = vpop.trf.xlu0
    %v2243 = vpop.trf.xlu0
    %v2244 = vpop.trf.xlu0
    %v2245 = vpop.trf.xlu0
    %v2246 = vpop.trf.xlu0
    %v2247 = vpop.trf.xlu0
    %v2248 = vpop.trf.xlu0
    %v2249 = vpop.trf.xlu0
    %v2250 = vpop.trf.xlu0
    %v2251 = vpop.trf.xlu0
    %v2252 = vpop.trf.xlu0
    %v2253 = vpop.trf.xlu0
    %v2254 = vpop.trf.xlu0
    %v2255 = vpop.trf.xlu0
    %2256 = vset.pattern.permute.xlu0 5
    %2257 = vperm.xlu0 %2256, %v396
    %v2258 = vpop.permute.xlu0 %2257
    %2260 = vset.pattern.permute.xlu0 5
    %2261 = vperm.xlu0 %2260, %v399
    %v2262 = vpop.permute.xlu0 %2261
    %2264 = vset.pattern.permute.xlu0 5
    %2265 = vperm.xlu0 %2264, %v404
    %v2266 = vpop.permute.xlu0 %2265
    %2268 = vset.pattern.permute.xlu0 5
    %2269 = vperm.xlu0 %2268, %v407
    %v2270 = vpop.permute.xlu0 %2269
    %2272 = vset.pattern.permute.xlu0 5
    %2273 = vperm.xlu0 %2272, %v412
    %v2274 = vpop.permute.xlu0 %2273
    %2276 = vset.pattern.permute.xlu0 5
    %2277 = vperm.xlu0 %2276, %v415
    %v2278 = vpop.permute.xlu0 %2277
    %2280 = vset.pattern.permute.xlu0 5
    %2281 = vperm.xlu0 %2280, %v420
    %v2282 = vpop.permute.xlu0 %2281
    %2284 = vset.pattern.permute.xlu0 5
    %2285 = vperm.xlu0 %2284, %v423
    %v2286 = vpop.permute.xlu0 %2285
    %v2288 = vlaneseq
    %v2289 = vshrl.u32 %v2288, 7
    %v2290 = vsub.s32 0, %v2289
    %v2291 = vrot.slane %v2240, %v2290
    %v2292 = vadd.f32 %v2258, %v2291
    %v2293 = vadd.f32 %v2262, %v2291
    %v2294 = vadd.f32 %v2266, %v2291
    %v2295 = vadd.f32 %v2270, %v2291
    %v2296 = vadd.f32 %v2274, %v2291
    %v2297 = vadd.f32 %v2278, %v2291
    %v2298 = vadd.f32 %v2282, %v2291
    %v2299 = vadd.f32 %v2286, %v2291
    %vm2300 = vcmp.gt.f32.partialorder %v2292, 0.0
    %vm2301 = vcmp.gt.f32.partialorder %v2293, 0.0
    %vm2302 = vcmp.gt.f32.partialorder %v2294, 0.0
    %vm2303 = vcmp.gt.f32.partialorder %v2295, 0.0
    %vm2304 = vcmp.gt.f32.partialorder %v2296, 0.0
    %vm2305 = vcmp.gt.f32.partialorder %v2297, 0.0
    %vm2306 = vcmp.gt.f32.partialorder %v2298, 0.0
    %vm2307 = vcmp.gt.f32.partialorder %v2299, 0.0
    %v2308 = vmul.f32 %v2292, 0.2
    %v2309 = vmul.f32 %v2293, 0.2
    %v2310 = vmul.f32 %v2294, 0.2
    %v2311 = vmul.f32 %v2295, 0.2
    %v2312 = vmul.f32 %v2296, 0.2
    %v2313 = vmul.f32 %v2297, 0.2
    %v2314 = vmul.f32 %v2298, 0.2
    %v2315 = vmul.f32 %v2299, 0.2
    %v2316 = vsel %vm2300, %v2292, %v2308
    %v2317 = vsel %vm2301, %v2293, %v2309
    %v2318 = vsel %vm2302, %v2294, %v2310
    %v2319 = vsel %vm2303, %v2295, %v2311
    %v2320 = vsel %vm2304, %v2296, %v2312
    %v2321 = vsel %vm2305, %v2297, %v2313
    %v2322 = vsel %vm2306, %v2298, %v2314
    %v2323 = vsel %vm2307, %v2299, %v2315
    %v2324 = vadd.f32 %v2316, %v515
    %v2325 = vadd.f32 %v2317, %v516
    %v2326 = vadd.f32 %v2318, %v517
    %v2327 = vadd.f32 %v2319, %v518
    %v2328 = vadd.f32 %v2320, %v519
    %v2329 = vadd.f32 %v2321, %v520
    %v2330 = vadd.f32 %v2322, %v521
    %v2331 = vadd.f32 %v2323, %v522
    %v2332 = vsel %vm639, %v2324, -inf
    %2333 = vmax.xlane.f32.xlu0 %v2332
    %v2334 = vpop.xlane.xlu0 %2333
    %v2335 = vsel %vm639, %v2325, -inf
    %2336 = vmax.xlane.f32.xlu0 %v2335
    %v2337 = vpop.xlane.xlu0 %2336
    %v2338 = vsel %vm639, %v2326, -inf
    %2339 = vmax.xlane.f32.xlu0 %v2338
    %v2340 = vpop.xlane.xlu0 %2339
    %v2341 = vsel %vm639, %v2327, -inf
    %2342 = vmax.xlane.f32.xlu0 %v2341
    %v2343 = vpop.xlane.xlu0 %2342
    %v2344 = vsel %vm639, %v2328, -inf
    %2345 = vmax.xlane.f32.xlu0 %v2344
    %v2346 = vpop.xlane.xlu0 %2345
    %v2347 = vsel %vm639, %v2329, -inf
    %2348 = vmax.xlane.f32.xlu0 %v2347
    %v2349 = vpop.xlane.xlu0 %2348
    %v2350 = vsel %vm639, %v2330, -inf
    %2351 = vmax.xlane.f32.xlu0 %v2350
    %v2352 = vpop.xlane.xlu0 %2351
    %v2353 = vsel %vm639, %v2331, -inf
    %2354 = vmax.xlane.f32.xlu0 %v2353
    %v2355 = vpop.xlane.xlu0 %2354
    %v2356 = vsub.f32 %v2324, %v2334
    %v2357 = vsub.f32 %v2325, %v2337
    %v2358 = vsub.f32 %v2326, %v2340
    %v2359 = vsub.f32 %v2327, %v2343
    %v2360 = vsub.f32 %v2328, %v2346
    %v2361 = vsub.f32 %v2329, %v2349
    %v2362 = vsub.f32 %v2330, %v2352
    %v2363 = vsub.f32 %v2331, %v2355
    %v2364 = vmul.f32 %v2356, 1.442695
    %v2365 = vpow.pop %v2364
    %v2366 = vmul.f32 %v2357, 1.442695
    %v2367 = vpow.pop %v2366
    %v2368 = vmul.f32 %v2358, 1.442695
    %v2369 = vpow.pop %v2368
    %v2370 = vmul.f32 %v2359, 1.442695
    %v2371 = vpow.pop %v2370
    %v2372 = vmul.f32 %v2360, 1.442695
    %v2373 = vpow.pop %v2372
    %v2374 = vmul.f32 %v2361, 1.442695
    %v2375 = vpow.pop %v2374
    %v2376 = vmul.f32 %v2362, 1.442695
    %v2377 = vpow.pop %v2376
    %v2378 = vmul.f32 %v2363, 1.442695
    %v2379 = vpow.pop %v2378
    %v2380 = vsel %vm639, %v2365, 0.0
    %2381 = vadd.xlane.f32.xlu0 %v2380
    %v2382 = vpop.xlane.xlu0 %2381
    %v2383 = vsel %vm639, %v2367, 0.0
    %2384 = vadd.xlane.f32.xlu0 %v2383
    %v2385 = vpop.xlane.xlu0 %2384
    %v2386 = vsel %vm639, %v2369, 0.0
    %2387 = vadd.xlane.f32.xlu0 %v2386
    %v2388 = vpop.xlane.xlu0 %2387
    %v2389 = vsel %vm639, %v2371, 0.0
    %2390 = vadd.xlane.f32.xlu0 %v2389
    %v2391 = vpop.xlane.xlu0 %2390
    %v2392 = vsel %vm639, %v2373, 0.0
    %2393 = vadd.xlane.f32.xlu0 %v2392
    %v2394 = vpop.xlane.xlu0 %2393
    %v2395 = vsel %vm639, %v2375, 0.0
    %2396 = vadd.xlane.f32.xlu0 %v2395
    %v2397 = vpop.xlane.xlu0 %2396
    %v2398 = vsel %vm639, %v2377, 0.0
    %2399 = vadd.xlane.f32.xlu0 %v2398
    %v2400 = vpop.xlane.xlu0 %2399
    %v2401 = vsel %vm639, %v2379, 0.0
    %2402 = vadd.xlane.f32.xlu0 %v2401
    %v2403 = vpop.xlane.xlu0 %2402
    %v2404 = vrcp.pop %v2382
    %v2405 = vrcp.pop %v2385
    %v2406 = vrcp.pop %v2388
    %v2407 = vrcp.pop %v2391
    %v2408 = vrcp.pop %v2394
    %v2409 = vrcp.pop %v2397
    %v2410 = vrcp.pop %v2400
    %v2411 = vrcp.pop %v2403
    %v2412 = vmul.f32 %v2365, %v2404
    %v2413 = vmul.f32 %v2367, %v2405
    %v2414 = vmul.f32 %v2369, %v2406
    %v2415 = vmul.f32 %v2371, %v2407
    %v2416 = vmul.f32 %v2373, %v2408
    %v2417 = vmul.f32 %v2375, %v2409
    %v2418 = vmul.f32 %v2377, %v2410
    %v2419 = vmul.f32 %v2379, %v2411
    %v2420 = vpack.c.bf16 %v2413, %v2412
    %v2421 = vpack.c.bf16 %v2415, %v2414
    %v2422 = vpack.c.bf16 %v2417, %v2416
    %v2423 = vpack.c.bf16 %v2419, %v2418
    %2428 = vrot.lane.b32.xlu0 %v338, 96
    %v2429 = vpop.permute.xlu0 %2428
    %2430 = vrot.lane.b32.xlu0 %v340, 96
    %v2431 = vpop.permute.xlu0 %2430
    %2432 = vrot.lane.b32.xlu0 %v342, 96
    %v2433 = vpop.permute.xlu0 %2432
    %2434 = vrot.lane.b32.xlu0 %v344, 96
    %v2435 = vpop.permute.xlu0 %2434
    %v2441 = vsel %vm639, %v2420, 0
    %v2444 = vsel %vm639, %v2421, 0
    %v2447 = vsel %vm639, %v2422, 0
    %v2450 = vsel %vm639, %v2423, 0
    %2452 = vmatprep.subr.bf16.mxu0 0
    %2453 = vmatpush1.bf16.msra.mxu0 0
    %2454 = vmatprep.subr.bf16.mxu0 0
    %2455 = vmatpush1.bf16.msra.mxu0 0
    %2456 = vmatprep.subr.bf16.mxu0 0
    %2457 = vmatpush1.bf16.msra.mxu0 0
    %2458 = vmatprep.subr.bf16.mxu0 0
    %2459 = vmatpush1.bf16.msra.mxu0 0
    %2460 = vmatprep.subr.bf16.mxu0 0
    %2461 = vmatpush1.bf16.msra.mxu0 %v2435
    %2462 = vmatprep.subr.bf16.mxu0 0
    %2463 = vmatpush1.bf16.msra.mxu0 %v2433
    %2464 = vmatprep.subr.bf16.mxu0 0
    %2465 = vmatpush1.bf16.msra.mxu0 %v2431
    %2466 = vmatprep.subr.bf16.mxu0 0
    %2467 = vmatpush1.bf16.msra.mxu0 %v2429
    %2468 = vmatprep.subr.bf16.mxu0 0
    %2469 = vmatpush2.bf16.msra.mxu0 0
    %2470 = vmatprep.subr.bf16.mxu0 0
    %2471 = vmatpush2.bf16.msra.mxu0 0
    %2472 = vmatprep.subr.bf16.mxu0 0
    %2473 = vmatpush2.bf16.msra.mxu0 0
    %2474 = vmatprep.subr.bf16.mxu0 0
    %2475 = vmatpush2.bf16.msra.mxu0 0
    %2476 = vmatprep.subr.bf16.mxu0 0
    %2477 = vmatpush2.bf16.msra.mxu0 0
    %2478 = vmatprep.subr.bf16.mxu0 0
    %2479 = vmatpush2.bf16.msra.mxu0 0
    %2480 = vmatprep.subr.bf16.mxu0 0
    %2481 = vmatpush2.bf16.msra.mxu0 0
    %2482 = vmatprep.subr.bf16.mxu0 0
    %2483 = vmatpush2.bf16.msra.mxu0 0
    %2484 = vmatprep.mubr.bf16.mxu0 0
    %2485 = vmatmul.mubr.bf16.gmra.mxu0 %v2441
    %v2486 = vpop.f32.mrf.mxu0
    %v2487 = vadd.f32 0.0, %v2486
    %v2488 = vpop.f32.mrf.mxu0
    %v2489 = vpop.f32.mrf.mxu0
    %v2490 = vadd.f32 0.0, %v2489
    %v2491 = vpop.f32.mrf.mxu0
    %2492 = vmatprep.mubr.bf16.mxu0 0
    %2493 = vmatmul.mubr.bf16.gmra.mxu0 %v2444
    %v2494 = vpop.f32.mrf.mxu0
    %v2495 = vadd.f32 0.0, %v2494
    %v2496 = vpop.f32.mrf.mxu0
    %v2497 = vpop.f32.mrf.mxu0
    %v2498 = vadd.f32 0.0, %v2497
    %v2499 = vpop.f32.mrf.mxu0
    %2500 = vmatprep.mubr.bf16.mxu0 0
    %2501 = vmatmul.mubr.bf16.gmra.mxu0 %v2447
    %v2502 = vpop.f32.mrf.mxu0
    %v2503 = vadd.f32 0.0, %v2502
    %v2504 = vpop.f32.mrf.mxu0
    %v2505 = vpop.f32.mrf.mxu0
    %v2506 = vadd.f32 0.0, %v2505
    %v2507 = vpop.f32.mrf.mxu0
    %2508 = vmatprep.mubr.bf16.mxu0 0
    %2509 = vmatmul.mubr.bf16.gmra.mxu0 %v2450
    %v2510 = vpop.f32.mrf.mxu0
    %v2511 = vadd.f32 0.0, %v2510
    %v2512 = vpop.f32.mrf.mxu0
    %v2513 = vpop.f32.mrf.mxu0
    %v2514 = vadd.f32 0.0, %v2513
    %v2515 = vpop.f32.mrf.mxu0
    %2516 = vdwg.mxu0
    %2525 = vrot.lane.b32.xlu0 %v2487, 32
    %v2526 = vpop.permute.xlu0 %2525
    %2527 = vrot.lane.b32.xlu0 %v2490, 32
    %v2528 = vpop.permute.xlu0 %2527
    %2529 = vrot.lane.b32.xlu0 %v2495, 32
    %v2530 = vpop.permute.xlu0 %2529
    %2531 = vrot.lane.b32.xlu0 %v2498, 32
    %v2532 = vpop.permute.xlu0 %2531
    %2533 = vrot.lane.b32.xlu0 %v2503, 32
    %v2534 = vpop.permute.xlu0 %2533
    %2535 = vrot.lane.b32.xlu0 %v2506, 32
    %v2536 = vpop.permute.xlu0 %2535
    %2537 = vrot.lane.b32.xlu0 %v2511, 32
    %v2538 = vpop.permute.xlu0 %2537
    %2539 = vrot.lane.b32.xlu0 %v2514, 32
    %v2540 = vpop.permute.xlu0 %2539
    %2549 = vst.msk [vmem:[#allocation2 + $0x8] sm:$0xff] %vm1174, %v2526
    %2550 = vst.msk [vmem:[#allocation2 + $0x18] sm:$0xff] %vm1174, %v2528
    %2551 = vst.msk [vmem:[#allocation2 + $0x28] sm:$0xff] %vm1174, %v2530
    %2552 = vst.msk [vmem:[#allocation2 + $0x38] sm:$0xff] %vm1174, %v2532
    %2553 = vst.msk [vmem:[#allocation2 + $0x48] sm:$0xff] %vm1174, %v2534
    %2554 = vst.msk [vmem:[#allocation2 + $0x58] sm:$0xff] %vm1174, %v2536
    %2555 = vst.msk [vmem:[#allocation2 + $0x68] sm:$0xff] %vm1174, %v2538
    %2556 = vst.msk [vmem:[#allocation2 + $0x78] sm:$0xff] %vm1174, %v2540
    %v2557 = vld [vmem:[#allocation2] sm:$0xff]
    %v2558 = vld [vmem:[#allocation2 + $0x8] sm:$0xff]
    %v2559 = vld [vmem:[#allocation2 + $0x10] sm:$0xff]
    %v2560 = vld [vmem:[#allocation2 + $0x18] sm:$0xff]
    %v2561 = vld [vmem:[#allocation2 + $0x20] sm:$0xff]
    %v2562 = vld [vmem:[#allocation2 + $0x28] sm:$0xff]
    %v2563 = vld [vmem:[#allocation2 + $0x30] sm:$0xff]
    %v2564 = vld [vmem:[#allocation2 + $0x38] sm:$0xff]
    %v2565 = vld [vmem:[#allocation2 + $0x40] sm:$0xff]
    %v2566 = vld [vmem:[#allocation2 + $0x48] sm:$0xff]
    %v2567 = vld [vmem:[#allocation2 + $0x50] sm:$0xff]
    %v2568 = vld [vmem:[#allocation2 + $0x58] sm:$0xff]
    %v2569 = vld [vmem:[#allocation2 + $0x60] sm:$0xff]
    %v2570 = vld [vmem:[#allocation2 + $0x68] sm:$0xff]
    %v2571 = vld [vmem:[#allocation2 + $0x70] sm:$0xff]
    %v2572 = vld [vmem:[#allocation2 + $0x78] sm:$0xff]
    %v2573 = vld [vmem:[%s7] sm:$0x3]
    %v2575 = vlaneseq
    %v2576 = vshrl.u32 %v2575, 7
    %v2577 = vsub.s32 0, %v2576
    %v2578 = vrot.slane %v2573, %v2577
    %v2579 = vlaneseq
    %v2580 = vshrl.u32 %v2579, 7
    %v2581 = vsub.s32 1, %v2580
    %v2582 = vrot.slane %v2573, %v2581
    %v2585 = vadd.f32 %v2557, %v2578
    %v2586 = vadd.f32 %v2558, %v2582
    %v2587 = vadd.f32 %v2559, %v2578
    %v2588 = vadd.f32 %v2560, %v2582
    %v2589 = vadd.f32 %v2561, %v2578
    %v2590 = vadd.f32 %v2562, %v2582
    %v2591 = vadd.f32 %v2563, %v2578
    %v2592 = vadd.f32 %v2564, %v2582
    %v2593 = vadd.f32 %v2565, %v2578
    %v2594 = vadd.f32 %v2566, %v2582
    %v2595 = vadd.f32 %v2567, %v2578
    %v2596 = vadd.f32 %v2568, %v2582
    %v2597 = vadd.f32 %v2569, %v2578
    %v2598 = vadd.f32 %v2570, %v2582
    %v2599 = vadd.f32 %v2571, %v2578
    %v2600 = vadd.f32 %v2572, %v2582
    %vm2601 = vcmp.gt.f32.partialorder %v2585, 0.0
    %vm2602 = vcmp.gt.f32.partialorder %v2586, 0.0
    %vm2603 = vcmp.gt.f32.partialorder %v2587, 0.0
    %vm2604 = vcmp.gt.f32.partialorder %v2588, 0.0
    %vm2605 = vcmp.gt.f32.partialorder %v2589, 0.0
    %vm2606 = vcmp.gt.f32.partialorder %v2590, 0.0
    %vm2607 = vcmp.gt.f32.partialorder %v2591, 0.0
    %vm2608 = vcmp.gt.f32.partialorder %v2592, 0.0
    %vm2609 = vcmp.gt.f32.partialorder %v2593, 0.0
    %vm2610 = vcmp.gt.f32.partialorder %v2594, 0.0
    %vm2611 = vcmp.gt.f32.partialorder %v2595, 0.0
    %vm2612 = vcmp.gt.f32.partialorder %v2596, 0.0
    %vm2613 = vcmp.gt.f32.partialorder %v2597, 0.0
    %vm2614 = vcmp.gt.f32.partialorder %v2598, 0.0
    %vm2615 = vcmp.gt.f32.partialorder %v2599, 0.0
    %vm2616 = vcmp.gt.f32.partialorder %v2600, 0.0
    %v2617 = vmul.f32 %v2585, 0.01
    %v2618 = vmul.f32 %v2586, 0.01
    %v2619 = vmul.f32 %v2587, 0.01
    %v2620 = vmul.f32 %v2588, 0.01
    %v2621 = vmul.f32 %v2589, 0.01
    %v2622 = vmul.f32 %v2590, 0.01
    %v2623 = vmul.f32 %v2591, 0.01
    %v2624 = vmul.f32 %v2592, 0.01
    %v2625 = vmul.f32 %v2593, 0.01
    %v2626 = vmul.f32 %v2594, 0.01
    %v2627 = vmul.f32 %v2595, 0.01
    %v2628 = vmul.f32 %v2596, 0.01
    %v2629 = vmul.f32 %v2597, 0.01
    %v2630 = vmul.f32 %v2598, 0.01
    %v2631 = vmul.f32 %v2599, 0.01
    %v2632 = vmul.f32 %v2600, 0.01
    %v2633 = vsel %vm2601, %v2585, %v2617
    %v2634 = vsel %vm2602, %v2586, %v2618
    %v2635 = vsel %vm2603, %v2587, %v2619
    %v2636 = vsel %vm2604, %v2588, %v2620
    %v2637 = vsel %vm2605, %v2589, %v2621
    %v2638 = vsel %vm2606, %v2590, %v2622
    %v2639 = vsel %vm2607, %v2591, %v2623
    %v2640 = vsel %vm2608, %v2592, %v2624
    %v2641 = vsel %vm2609, %v2593, %v2625
    %v2642 = vsel %vm2610, %v2594, %v2626
    %v2643 = vsel %vm2611, %v2595, %v2627
    %v2644 = vsel %vm2612, %v2596, %v2628
    %v2645 = vsel %vm2613, %v2597, %v2629
    %v2646 = vsel %vm2614, %v2598, %v2630
    %v2647 = vsel %vm2615, %v2599, %v2631
    %v2648 = vsel %vm2616, %v2600, %v2632
    %v2649 = vpack.c.bf16 %v2635, %v2633
    %v2650 = vpack.c.bf16 %v2636, %v2634
    %v2651 = vpack.c.bf16 %v2639, %v2637
    %v2652 = vpack.c.bf16 %v2640, %v2638
    %v2653 = vpack.c.bf16 %v2643, %v2641
    %v2654 = vpack.c.bf16 %v2644, %v2642
    %v2655 = vpack.c.bf16 %v2647, %v2645
    %v2656 = vpack.c.bf16 %v2648, %v2646
    %v2657 = vld [vmem:[#allocation9] sm:$0xf]
    %v2658 = vld [vmem:[#allocation9 + $0x4] sm:$0xf]
    %v2659 = vld [vmem:[#allocation9 + $0x8] sm:$0xf]
    %v2660 = vld [vmem:[#allocation9 + $0xc] sm:$0xf]
    %v2661 = vld [vmem:[%s9] sm:$0xf]
    %v2662 = vld [vmem:[%s9 + $0x4] sm:$0xf]
    %v2663 = vld [vmem:[%s9 + $0x8] sm:$0xf]
    %v2664 = vld [vmem:[%s9 + $0xc] sm:$0xf]
    %v2665 = vld [vmem:[%s9 + $0x10] sm:$0xf]
    %v2666 = vld [vmem:[%s9 + $0x14] sm:$0xf]
    %v2667 = vld [vmem:[%s9 + $0x18] sm:$0xf]
    %v2668 = vld [vmem:[%s9 + $0x1c] sm:$0xf]
    %v2669 = vld [vmem:[%s9 + $0x20] sm:$0xf]
    %v2670 = vld [vmem:[%s9 + $0x24] sm:$0xf]
    %v2671 = vld [vmem:[%s9 + $0x28] sm:$0xf]
    %v2672 = vld [vmem:[%s9 + $0x2c] sm:$0xf]
    %v2673 = vld [vmem:[%s9 + $0x30] sm:$0xf]
    %v2674 = vld [vmem:[%s9 + $0x34] sm:$0xf]
    %v2675 = vld [vmem:[%s9 + $0x38] sm:$0xf]
    %v2676 = vld [vmem:[%s9 + $0x3c] sm:$0xf]
    %v2677 = vld [vmem:[%s9 + $0x40] sm:$0xf]
    %v2678 = vld [vmem:[%s9 + $0x44] sm:$0xf]
    %v2679 = vld [vmem:[%s9 + $0x48] sm:$0xf]
    %v2680 = vld [vmem:[%s9 + $0x4c] sm:$0xf]
    %v2681 = vld [vmem:[%s9 + $0x50] sm:$0xf]
    %v2682 = vld [vmem:[%s9 + $0x54] sm:$0xf]
    %v2683 = vld [vmem:[%s9 + $0x58] sm:$0xf]
    %v2684 = vld [vmem:[%s9 + $0x5c] sm:$0xf]
    %v2709 = vunpack.c.l.b16 %v2661
    %v2710 = vunpack.c.l.b16 %v2662
    %v2711 = vunpack.c.l.b16 %v2663
    %v2712 = vunpack.c.l.b16 %v2664
    %v2713 = vunpack.c.l.b16 %v2665
    %v2714 = vunpack.c.l.b16 %v2666
    %v2715 = vunpack.c.l.b16 %v2667
    %v2716 = vunpack.c.l.b16 %v2668
    %v2717 = vunpack.c.l.b16 %v2669
    %v2718 = vunpack.c.l.b16 %v2670
    %v2719 = vunpack.c.l.b16 %v2671
    %v2720 = vunpack.c.l.b16 %v2672
    %v2721 = vunpack.c.l.b16 %v2673
    %v2722 = vunpack.c.l.b16 %v2674
    %v2723 = vunpack.c.l.b16 %v2675
    %v2724 = vunpack.c.l.b16 %v2676
    %v2725 = vunpack.c.l.b16 %v2677
    %v2726 = vunpack.c.l.b16 %v2678
    %v2727 = vunpack.c.l.b16 %v2679
    %v2728 = vunpack.c.l.b16 %v2680
    %v2729 = vunpack.c.l.b16 %v2681
    %v2730 = vunpack.c.l.b16 %v2682
    %v2731 = vunpack.c.l.b16 %v2683
    %v2732 = vunpack.c.l.b16 %v2684
    %v2733 = vpack.c.b16 %v2710, %v2709
    %v2734 = vpack.c.b16 %v2712, %v2711
    %v2735 = vpack.c.b16 %v2714, %v2713
    %v2736 = vpack.c.b16 %v2716, %v2715
    %v2737 = vpack.c.b16 %v2718, %v2717
    %v2738 = vpack.c.b16 %v2720, %v2719
    %v2739 = vpack.c.b16 %v2722, %v2721
    %v2740 = vpack.c.b16 %v2724, %v2723
    %v2741 = vpack.c.b16 %v2726, %v2725
    %v2742 = vpack.c.b16 %v2728, %v2727
    %v2743 = vpack.c.b16 %v2730, %v2729
    %v2744 = vpack.c.b16 %v2732, %v2731
    %v2758 = vsel %vm639, %v2650, 0
    %v2761 = vsel %vm639, %v2652, 0
    %v2764 = vsel %vm639, %v2654, 0
    %v2767 = vsel %vm639, %v2656, 0
    %2769 = vmatprep.subr.bf16.mxu0 0
    %2770 = vmatpush1.bf16.msra.mxu0 %v2740
    %2771 = vmatprep.subr.bf16.mxu0 0
    %2772 = vmatpush1.bf16.msra.mxu0 %v2739
    %2773 = vmatprep.subr.bf16.mxu0 0
    %2774 = vmatpush1.bf16.msra.mxu0 %v2738
    %2775 = vmatprep.subr.bf16.mxu0 0
    %2776 = vmatpush1.bf16.msra.mxu0 %v2737
    %2777 = vmatprep.subr.bf16.mxu0 0
    %2778 = vmatpush1.bf16.msra.mxu0 %v2736
    %2779 = vmatprep.subr.bf16.mxu0 0
    %2780 = vmatpush1.bf16.msra.mxu0 %v2735
    %2781 = vmatprep.subr.bf16.mxu0 0
    %2782 = vmatpush1.bf16.msra.mxu0 %v2734
    %2783 = vmatprep.subr.bf16.mxu0 0
    %2784 = vmatpush1.bf16.msra.mxu0 %v2733
    %2785 = vmatprep.subr.bf16.mxu0 0
    %2786 = vmatpush2.bf16.msra.mxu0 0
    %2787 = vmatprep.subr.bf16.mxu0 0
    %2788 = vmatpush2.bf16.msra.mxu0 0
    %2789 = vmatprep.subr.bf16.mxu0 0
    %2790 = vmatpush2.bf16.msra.mxu0 0
    %2791 = vmatprep.subr.bf16.mxu0 0
    %2792 = vmatpush2.bf16.msra.mxu0 0
    %2793 = vmatprep.subr.bf16.mxu0 0
    %2794 = vmatpush2.bf16.msra.mxu0 %v2744
    %2795 = vmatprep.subr.bf16.mxu0 0
    %2796 = vmatpush2.bf16.msra.mxu0 %v2743
    %2797 = vmatprep.subr.bf16.mxu0 0
    %2798 = vmatpush2.bf16.msra.mxu0 %v2742
    %2799 = vmatprep.subr.bf16.mxu0 0
    %2800 = vmatpush2.bf16.msra.mxu0 %v2741
    %2801 = vmatprep.mubr.bf16.mxu0 %v2758
    %2802 = vmatmul.mubr.bf16.gmra.mxu0 %v2649
    %v2803 = vpop.f32.mrf.mxu0
    %v2804 = vadd.f32 0.0, %v2803
    %v2805 = vpop.f32.mrf.mxu0
    %v2806 = vpop.f32.mrf.mxu0
    %v2807 = vadd.f32 0.0, %v2806
    %v2808 = vpop.f32.mrf.mxu0
    %2809 = vmatprep.mubr.bf16.mxu0 %v2761
    %2810 = vmatmul.mubr.bf16.gmra.mxu0 %v2651
    %v2811 = vpop.f32.mrf.mxu0
    %v2812 = vadd.f32 0.0, %v2811
    %v2813 = vpop.f32.mrf.mxu0
    %v2814 = vpop.f32.mrf.mxu0
    %v2815 = vadd.f32 0.0, %v2814
    %v2816 = vpop.f32.mrf.mxu0
    %2817 = vmatprep.mubr.bf16.mxu0 %v2764
    %2818 = vmatmul.mubr.bf16.gmra.mxu0 %v2653
    %v2819 = vpop.f32.mrf.mxu0
    %v2820 = vadd.f32 0.0, %v2819
    %v2821 = vpop.f32.mrf.mxu0
    %v2822 = vpop.f32.mrf.mxu0
    %v2823 = vadd.f32 0.0, %v2822
    %v2824 = vpop.f32.mrf.mxu0
    %2825 = vmatprep.mubr.bf16.mxu0 %v2767
    %2826 = vmatmul.mubr.bf16.gmra.mxu0 %v2655
    %v2827 = vpop.f32.mrf.mxu0
    %v2828 = vadd.f32 0.0, %v2827
    %v2829 = vpop.f32.mrf.mxu0
    %v2830 = vpop.f32.mrf.mxu0
    %v2831 = vadd.f32 0.0, %v2830
    %v2832 = vpop.f32.mrf.mxu0
    %2833 = vdwg.mxu0
    %v2838 = vunpack.c.l.b16 %v2657
    %v2839 = vunpack.c.l.b16 %v2658
    %v2840 = vunpack.c.l.b16 %v2659
    %v2841 = vunpack.c.l.b16 %v2660
    %v2842 = vpack.c.b16 %v2839, %v2838
    %v2843 = vpack.c.b16 %v2841, %v2840
    %2846 = vmatprep.subr.bf16.mxu0 0
    %2847 = vmatpush1.bf16.msra.mxu0 0
    %2848 = vmatprep.subr.bf16.mxu0 0
    %2849 = vmatpush1.bf16.msra.mxu0 0
    %2850 = vmatprep.subr.bf16.mxu0 0
    %2851 = vmatpush1.bf16.msra.mxu0 0
    %2852 = vmatprep.subr.bf16.mxu0 0
    %2853 = vmatpush1.bf16.msra.mxu0 0
    %2854 = vmatprep.subr.bf16.mxu0 0
    %2855 = vmatpush1.bf16.msra.mxu0 0
    %2856 = vmatprep.subr.bf16.mxu0 0
    %2857 = vmatpush1.bf16.msra.mxu0 0
    %2858 = vmatprep.subr.bf16.mxu0 0
    %2859 = vmatpush1.bf16.msra.mxu0 %v2843
    %2860 = vmatprep.subr.bf16.mxu0 0
    %2861 = vmatpush1.bf16.msra.mxu0 %v2842
    %2862 = vmatprep.subr.bf16.mxu0 0
    %2863 = vmatpush2.bf16.msra.mxu0 0
    %2864 = vmatprep.subr.bf16.mxu0 0
    %2865 = vmatpush2.bf16.msra.mxu0 0
    %2866 = vmatprep.subr.bf16.mxu0 0
    %2867 = vmatpush2.bf16.msra.mxu0 0
    %2868 = vmatprep.subr.bf16.mxu0 0
    %2869 = vmatpush2.bf16.msra.mxu0 0
    %2870 = vmatprep.subr.bf16.mxu0 0
    %2871 = vmatpush2.bf16.msra.mxu0 0
    %2872 = vmatprep.subr.bf16.mxu0 0
    %2873 = vmatpush2.bf16.msra.mxu0 0
    %2874 = vmatprep.subr.bf16.mxu0 0
    %2875 = vmatpush2.bf16.msra.mxu0 0
    %2876 = vmatprep.subr.bf16.mxu0 0
    %2877 = vmatpush2.bf16.msra.mxu0 0
    %2878 = vmatprep.mubr.bf16.mxu0 0
    %2879 = vmatmul.mubr.bf16.gmra.mxu0 %v253
    %v2880 = vpop.f32.mrf.mxu0
    %v2881 = vadd.f32 %v2804, %v2880
    %v2882 = vpop.f32.mrf.mxu0
    %v2883 = vpop.f32.mrf.mxu0
    %v2884 = vadd.f32 %v2807, %v2883
    %v2885 = vpop.f32.mrf.mxu0
    %2886 = vmatprep.mubr.bf16.mxu0 0
    %2887 = vmatmul.mubr.bf16.gmra.mxu0 %v256
    %v2888 = vpop.f32.mrf.mxu0
    %v2889 = vadd.f32 %v2812, %v2888
    %v2890 = vpop.f32.mrf.mxu0
    %v2891 = vpop.f32.mrf.mxu0
    %v2892 = vadd.f32 %v2815, %v2891
    %v2893 = vpop.f32.mrf.mxu0
    %2894 = vmatprep.mubr.bf16.mxu0 0
    %2895 = vmatmul.mubr.bf16.gmra.mxu0 %v259
    %v2896 = vpop.f32.mrf.mxu0
    %v2897 = vadd.f32 %v2820, %v2896
    %v2898 = vpop.f32.mrf.mxu0
    %v2899 = vpop.f32.mrf.mxu0
    %v2900 = vadd.f32 %v2823, %v2899
    %v2901 = vpop.f32.mrf.mxu0
    %2902 = vmatprep.mubr.bf16.mxu0 0
    %2903 = vmatmul.mubr.bf16.gmra.mxu0 %v262
    %v2904 = vpop.f32.mrf.mxu0
    %v2905 = vadd.f32 %v2828, %v2904
    %v2906 = vpop.f32.mrf.mxu0
    %v2907 = vpop.f32.mrf.mxu0
    %v2908 = vadd.f32 %v2831, %v2907
    %v2909 = vpop.f32.mrf.mxu0
    %2910 = vdwg.mxu0
    %v2911 = vld [vmem:[%s10] sm:$0x1]
    %v2913 = vlaneseq
    %v2914 = vshrl.u32 %v2913, 7
    %v2915 = vsub.s32 0, %v2914
    %v2916 = vrot.slane %v2911, %v2915
    %v2918 = vadd.f32 %v2881, %v2916
    %v2919 = vadd.f32 %v2884, %v2916
    %v2920 = vadd.f32 %v2889, %v2916
    %v2921 = vadd.f32 %v2892, %v2916
    %v2922 = vadd.f32 %v2897, %v2916
    %v2923 = vadd.f32 %v2900, %v2916
    %v2924 = vadd.f32 %v2905, %v2916
    %v2925 = vadd.f32 %v2908, %v2916
    %2926 = vst [vmem:[#allocation11] sm:$0xff] %v2918
    %2927 = vst [vmem:[#allocation11 + $0x8] sm:$0xff] %v2919
    %2928 = vst [vmem:[#allocation11 + $0x10] sm:$0xff] %v2920
    %2929 = vst [vmem:[#allocation11 + $0x18] sm:$0xff] %v2921
    %2930 = vst [vmem:[#allocation11 + $0x20] sm:$0xff] %v2922
    %2931 = vst [vmem:[#allocation11 + $0x28] sm:$0xff] %v2923
    %2932 = vst [vmem:[#allocation11 + $0x30] sm:$0xff] %v2924
    %2933 = vst [vmem:[#allocation11 + $0x38] sm:$0xff] %v2925
    // Predicated region
    $region62: #{tpu_custom_call.1} parent=1 // pred_check
      _
    $region63: #{tpu_custom_call.1} parent=1 // pred_check_branch
      %2935 = sbr.rel (0) target = $region65
    $region64: #{tpu_custom_call.1} parent=1 // pred_region
      %s2937 = ssub.s32 1024, 1024
      %2938 = vsyncadd [#allocation5], %s2937
      %s2939 = sshll.u32 [#allocation11], 4
      %s2940 = int_to_ptr.vmem [resolvable:$true] %s2939
      %2945 = dma.vmem_to_hbm [thread:$0]  %s2940, 1024, %s11, [#allocation5], 128, 128, 8
    $region65: #{tpu_custom_call.1} parent=1 // pred_fallthru
      _
    // Predicated region
    $region66: #{tpu_custom_call.1} parent=1 // pred_check
      _
    $region67: #{tpu_custom_call.1} parent=1 // pred_check_branch
      %2947 = sbr.rel (0) target = $region69
    $region68: #{tpu_custom_call.1} parent=1 // pred_region
      %2948 = dma.done [#allocation5], 1024
    $region69: #{tpu_custom_call.1} parent=1 // pred_fallthru
      _
    %2949 = vsyncpa [#allocation4], 1
    %2950 = vsyncpa [#allocation7], 1
    %2951 = vsyncpa [#allocation10], 1
    %2952 = vsyncpa [#allocation5], 1

</llo_original>
